<compile_context>
chip_gen: v6e
topology: v6e:2x2x1
jax: 0.10.0
libtpu: 0.0.40
codegen_flags: <defaults>
</compile_context>

<pallas_src>
import functools

import numpy as np
import jax
import jax.numpy as jnp
from jax import lax
from jax.experimental import pallas as pl
from jax.experimental.pallas import tpu as pltpu

EMBED_DIM = 2048  # ProtoNet50 default embedding_dim


def _round_up(x, m):
    return -(-x // m) * m


def _choose_tk(f_pad, max_tk=2048):
    """Largest multiple of 128 (<= max_tk) dividing f_pad (f_pad % 128 == 0)."""
    best = 128
    t = 128
    while t <= min(f_pad, max_tk):
        if f_pad % t == 0:
            best = t
        t += 128
    return best


# ----------------------------------------------------------------------------
# One-time parameter preparation (hoisted out of the forward path).
# TODO(synk): the real backbone is an external ResNet50 passed to __init__ with
# fc=Identity; it is replaced here by a deterministic flatten+linear stand-in.
# ----------------------------------------------------------------------------
def prepare_params(w, b, *, max_tk=2048):
    f, d = w.shape
    f_pad = _round_up(f, 128)
    d_pad = _round_up(d, 128)
    tk = _choose_tk(f_pad, max_tk)

    w_bf = w.astype(jnp.bfloat16)
    if (f_pad, d_pad) != (f, d):
        w_bf = jnp.pad(w_bf, ((0, f_pad - f), (0, d_pad - d)))

    b_f32 = jnp.reshape(b, (1, -1)).astype(jnp.float32)   # accept (D,) or (1,D)
    if d_pad != d:
        b_f32 = jnp.pad(b_f32, ((0, 0), (0, d_pad - d)))

    return {"w_bf": w_bf, "b_f32": b_f32,
            "f": f, "d": d, "f_pad": f_pad, "d_pad": d_pad, "tk": tk}


# ----------------------------------------------------------------------------
# Fused encoder + ProtoNet-head kernel.
#   grid = (f_pad // tk,)   (K reduction axis, output-resident accumulator)
# ----------------------------------------------------------------------------
def _fused_kernel(onehot_ref, x_ref, w_ref, b_ref, logits_ref, acc_ref,
                  *, ns, nq):
    k = pl.program_id(0)

    @pl.when(k == 0)
    def _():
        acc_ref[...] = jnp.zeros_like(acc_ref)

    # bf16 activations x bf16 weights, f32 accumulation on the MXU.
    acc_ref[...] += jnp.dot(x_ref[...], w_ref[...],
                            preferred_element_type=jnp.float32)

    @pl.when(k == pl.num_programs(0) - 1)
    def _():
        emb = acc_ref[...] + b_ref[...]                    # [n_pad, d_pad] f32
        supp = emb[:ns, :]                                 # [ns, d_pad]
        qry = emb[ns:ns + nq, :]                           # [nq, d_pad]

        # Prototypes: class means via one MXU matmul (1/count folded in onehot).
        protos = jnp.dot(onehot_ref[...], supp,
                         preferred_element_type=jnp.float32)   # [n_way, d_pad]

        # -||q - p||^2 = 2 q.p - ||q||^2 - ||p||^2 ; D-reduction on the MXU,
        # contraction on the last axes (no explicit transpose).
        qp = lax.dot_general(qry, protos, (((1,), (1,)), ((), ())),
                             preferred_element_type=jnp.float32)  # [nq, n_way]
        q_sq = jnp.sum(qry * qry, axis=-1, keepdims=True)         # [nq, 1]
        p_sq = jnp.sum(protos * protos, axis=-1).reshape(1, -1)   # [1, n_way]
        logits_ref[...] = 2.0 * qp - q_sq - p_sq


def protonet_fused(prepared, onehot_mean, support_imgs, query_imgs):
    ns = support_imgs.shape[0]
    nq = query_imgs.shape[0]
    n = ns + nq
    n_pad = _round_up(n, 16)            # bf16 sublane packing
    f = prepared["f"]
    f_pad = prepared["f_pad"]
    d_pad = prepared["d_pad"]
    tk = prepared["tk"]
    n_way = onehot_mean.shape[0]

    # Support + query encoded in one call: W streams from HBM exactly once.
    imgs = jnp.concatenate([support_imgs, query_imgs], axis=0)
    feat = imgs.reshape(n, -1).astype(jnp.bfloat16)
    if (n_pad, f_pad) != (n, f):
        feat = jnp.pad(feat, ((0, n_pad - n), (0, f_pad - f)))

    kernel = functools.partial(_fused_kernel, ns=ns, nq=nq)

    # VMEM budget: double-buffered inputs + resident f32 embedding accumulator.
    vmem_est = (2 * (n_pad * tk * 2 + tk * d_pad * 2 + d_pad * 4 +
                     n_way * ns * 4)
                + n_pad * d_pad * 4 + (1 << 20))
    vmem_limit = int(min(max(vmem_est, 32 << 20), 56 << 20))  # <= v7x physical

    logits = pl.pallas_call(
        kernel,
        out_shape=jax.ShapeDtypeStruct((nq, n_way), jnp.float32),
        grid_spec=pltpu.PrefetchScalarGridSpec(
            num_scalar_prefetch=0,
            grid=(f_pad // tk,),
            in_specs=[
                pl.BlockSpec((n_way, ns), lambda k: (0, 0)),   # onehot (tiny)
                pl.BlockSpec((n_pad, tk), lambda k: (0, k)),   # activations
                pl.BlockSpec((tk, d_pad), lambda k: (k, 0)),   # W (bf16)
                pl.BlockSpec((1, d_pad), lambda k: (0, 0)),    # bias (f32)
            ],
            out_specs=pl.BlockSpec((nq, n_way), lambda k: (0, 0)),
            scratch_shapes=[pltpu.VMEM((n_pad, d_pad), jnp.float32)],
        ),
        compiler_params=pltpu.CompilerParams(
            dimension_semantics=("arbitrary",),   # K is the reduction axis
            vmem_limit_bytes=vmem_limit,
        ),
    )(onehot_mean, feat, prepared["w_bf"], prepared["b_f32"])
    return logits


def protonet50_forward(prepared, support_imgs, support_labels, query_imgs):
    """JAX/Pallas equivalent of ProtoNet50.forward (prepared params variant)."""
    # classes = torch.unique(support_labels): labels are concrete host values
    # (n_way must be static for kernel shapes); np.unique is sorted like torch.
    labels_np = np.asarray(support_labels)
    classes = np.unique(labels_np)
    onehot = (labels_np[None, :] == classes[:, None]).astype(np.float32)
    onehot_mean = onehot / onehot.sum(axis=1, keepdims=True)   # fold 1/count
    return protonet_fused(prepared, jnp.asarray(onehot_mean),
                          support_imgs, query_imgs)


# ----------------------------------------------------------------------------
# Pure-JAX f32 reference (mirrors the PyTorch forward exactly)
# ----------------------------------------------------------------------------
def reference_forward(params, support_imgs, support_labels, query_imgs):
    def enc(x):
        feat = x.reshape(x.shape[0], -1).astype(jnp.float32)
        return feat @ params["w"] + jnp.reshape(params["b"], (1, -1))

    supp = enc(support_imgs)
    qry = enc(query_imgs)
    labels_np = np.asarray(support_labels)
    classes = np.unique(labels_np)
    protos = jnp.stack([supp[labels_np == c].mean(axis=0) for c in classes])
    dists = ((qry[:, None, :] - protos[None, :, :]) ** 2).sum(axis=2)
    return -dists


if __name__ == "__main__":
    key = jax.random.PRNGKey(0)
    k_supp, k_qry, k_w, k_b = jax.random.split(key, 4)

    N_SUPP, N_QUERY, C, H, W = 8, 8, 3, 16, 16
    F = C * H * W

    support_imgs = jax.random.normal(k_supp, (N_SUPP, C, H, W), jnp.float32)
    query_imgs = jax.random.normal(k_qry, (N_QUERY, C, H, W), jnp.float32)
    support_labels = jnp.array([0, 0, 1, 1, 2, 2, 3, 3], dtype=jnp.int32)

    params = {
        "w": jax.random.normal(k_w, (F, EMBED_DIM), jnp.float32)
             * np.float32(1.0 / np.sqrt(F)),
        "b": jax.random.normal(k_b, (1, EMBED_DIM), jnp.float32)
             * np.float32(0.01),
    }

    # One-time: cast/pad W to bf16 outside the forward path.
    prepared = prepare_params(params["w"], params["b"])

    logits = protonet50_forward(prepared, support_imgs, support_labels,
                                query_imgs)
    logits = jax.block_until_ready(logits)

    ref = jax.block_until_ready(
        reference_forward(params, support_imgs, support_labels, query_imgs))

    assert logits.shape == (N_QUERY, 4), logits.shape
    # bf16 weight/activation streaming vs f32 reference: logit magnitudes are
    # O(2*D) ~ 4000, so rtol dominates; Gram-form can be slightly >0 near a
    # prototype, hence the atol term.
    assert np.allclose(np.asarray(logits), np.asarray(ref),
                       rtol=2e-2, atol=1.0), \
        float(np.max(np.abs(np.asarray(logits) - np.asarray(ref))))

    print("KERNEL_OK")
</pallas_src>

<mosaic_0001>
module attributes {stable_mosaic.version = 11 : i64} {
  func.func @_fused_kernel(%arg0: i32, %arg1: memref<4x8xf32, #tpu.memory_space<vmem>>, %arg2: memref<16x768xbf16, #tpu.memory_space<vmem>>, %arg3: memref<768x2048xbf16, #tpu.memory_space<vmem>>, %arg4: memref<1x2048xf32, #tpu.memory_space<vmem>>, %arg5: memref<8x4xf32, #tpu.memory_space<vmem>>, %arg6: memref<16x2048xf32, #tpu.memory_space<vmem>>) attributes {dimension_semantics = [#tpu.dimension_semantics<arbitrary>], iteration_bounds = array<i64: 1>, scalar_prefetch = 0 : i64, scratch_operands = 1 : i64, tpu.core_type = #tpu.core_type<tc>, window_params = [{pipeline_mode = #tpu.pipeline_mode<synchronous>, transform_indices = @transform_0, window_bounds = array<i64: 4, 8>}, {transform_indices = @transform_1, window_bounds = array<i64: 16, 768>}, {transform_indices = @transform_2, window_bounds = array<i64: 768, 2048>}, {pipeline_mode = #tpu.pipeline_mode<synchronous>, transform_indices = @transform_3, window_bounds = array<i64: 1, 2048>}, {pipeline_mode = #tpu.pipeline_mode<synchronous>, transform_indices = @transform_4, window_bounds = array<i64: 8, 4>}]} {
    %c0_i32 = arith.constant 0 : i32
    %0 = arith.cmpi eq, %arg0, %c0_i32 : i32
    %1 = arith.extui %0 : i1 to i32
    %c0_i32_0 = arith.constant 0 : i32
    %2 = arith.cmpi ne, %1, %c0_i32_0 : i32
    scf.if %2 {
      %cst_10 = arith.constant 0.000000e+00 : f32
      %12 = vector.broadcast %cst_10 : f32 to vector<16x2048xf32>
      %c0_11 = arith.constant 0 : index
      %c0_12 = arith.constant 0 : index
      %13 = vector.load %arg6[%c0_11, %c0_12] : memref<16x2048xf32, #tpu.memory_space<vmem>>, vector<16x2048xf32>
      tpu.vector_store %arg6[%c0_11, %c0_12], %12 {strides = array<i32>} : memref<16x2048xf32, #tpu.memory_space<vmem>>, vector<16x2048xf32>,
    } else {
    }
    %c0 = arith.constant 0 : index
    %c0_1 = arith.constant 0 : index
    %3 = vector.load %arg6[%c0, %c0_1] : memref<16x2048xf32, #tpu.memory_space<vmem>>, vector<16x2048xf32>
    %c0_2 = arith.constant 0 : index
    %c0_3 = arith.constant 0 : index
    %4 = vector.load %arg2[%c0_2, %c0_3] : memref<16x768xbf16, #tpu.memory_space<vmem>>, vector<16x768xbf16>
    %c0_4 = arith.constant 0 : index
    %c0_5 = arith.constant 0 : index
    %5 = vector.load %arg3[%c0_4, %c0_5] : memref<768x2048xbf16, #tpu.memory_space<vmem>>, vector<768x2048xbf16>
    %cst = arith.constant dense<0.000000e+00> : vector<16x2048xf32>
    %6 = tpu.matmul %4, %5, %cst {dimension_numbers = #tpu.dot_dimension_numbers<[1], [0], [0], [1], [0, 0, 1, 1], [], []>} : vector<16x768xbf16>, vector<768x2048xbf16>, vector<16x2048xf32> -> vector<16x2048xf32>
    %7 = arith.addf %3, %6 : vector<16x2048xf32>
    %c0_6 = arith.constant 0 : index
    %c0_7 = arith.constant 0 : index
    %8 = vector.load %arg6[%c0_6, %c0_7] : memref<16x2048xf32, #tpu.memory_space<vmem>>, vector<16x2048xf32>
    tpu.vector_store %arg6[%c0_6, %c0_7], %7 {strides = array<i32>} : memref<16x2048xf32, #tpu.memory_space<vmem>>, vector<16x2048xf32>,
    %c0_i32_8 = arith.constant 0 : i32
    %9 = arith.cmpi eq, %arg0, %c0_i32_8 : i32
    %10 = arith.extui %9 : i1 to i32
    %c0_i32_9 = arith.constant 0 : i32
    %11 = arith.cmpi ne, %10, %c0_i32_9 : i32
    scf.if %11 {
      %c0_10 = arith.constant 0 : index
      %c0_11 = arith.constant 0 : index
      %12 = vector.load %arg6[%c0_10, %c0_11] : memref<16x2048xf32, #tpu.memory_space<vmem>>, vector<16x2048xf32>
      %c0_12 = arith.constant 0 : index
      %c0_13 = arith.constant 0 : index
      %13 = vector.load %arg4[%c0_12, %c0_13] : memref<1x2048xf32, #tpu.memory_space<vmem>>, vector<1x2048xf32>
      %14 = vector.broadcast %13 : vector<1x2048xf32> to vector<16x2048xf32>
      %15 = arith.addf %12, %14 : vector<16x2048xf32>
      %16 = vector.extract_strided_slice %15 {offsets = [0, 0], sizes = [8, 2048], strides = [1, 1]} : vector<16x2048xf32> to vector<8x2048xf32>
      %17 = vector.extract_strided_slice %15 {offsets = [8, 0], sizes = [8, 2048], strides = [1, 1]} : vector<16x2048xf32> to vector<8x2048xf32>
      %c0_14 = arith.constant 0 : index
      %c0_15 = arith.constant 0 : index
      %18 = vector.load %arg1[%c0_14, %c0_15] : memref<4x8xf32, #tpu.memory_space<vmem>>, vector<4x8xf32>
      %cst_16 = arith.constant dense<0.000000e+00> : vector<4x2048xf32>
      %19 = tpu.matmul %18, %16, %cst_16 {dimension_numbers = #tpu.dot_dimension_numbers<[1], [0], [0], [1], [0, 0, 1, 1], [], []>} : vector<4x8xf32>, vector<8x2048xf32>, vector<4x2048xf32> -> vector<4x2048xf32>
      %cst_17 = arith.constant dense<0.000000e+00> : vector<8x4xf32>
      %20 = tpu.matmul %17, %19, %cst_17 {dimension_numbers = #tpu.dot_dimension_numbers<[1], [1], [0], [0], [0, 0, 1, 0], [], []>} : vector<8x2048xf32>, vector<4x2048xf32>, vector<8x4xf32> -> vector<8x4xf32>
      %21 = arith.mulf %17, %17 : vector<8x2048xf32>
      %cst_18 = arith.constant dense<0.000000e+00> : vector<8xf32>
      %22 = vector.multi_reduction <add>, %21, %cst_18 [1] : vector<8x2048xf32> to vector<8xf32>
      %23 = vector.shape_cast %22 : vector<8xf32> to vector<8x1xf32>
      %24 = arith.mulf %19, %19 : vector<4x2048xf32>
      %cst_19 = arith.constant dense<0.000000e+00> : vector<4xf32>
      %25 = vector.multi_reduction <add>, %24, %cst_19 [1] : vector<4x2048xf32> to vector<4xf32>
      %26 = vector.shape_cast %25 : vector<4xf32> to vector<1x4xf32>
      %cst_20 = arith.constant 2.000000e+00 : f32
      %27 = vector.broadcast %cst_20 : f32 to vector<8x4xf32>
      %28 = arith.mulf %27, %20 : vector<8x4xf32>
      %29 = vector.broadcast %23 : vector<8x1xf32> to vector<8x4xf32>
      %30 = arith.subf %28, %29 : vector<8x4xf32>
      %31 = vector.broadcast %26 : vector<1x4xf32> to vector<8x4xf32>
      %32 = arith.subf %30, %31 : vector<8x4xf32>
      %c0_21 = arith.constant 0 : index
      %c0_22 = arith.constant 0 : index
      %33 = vector.load %arg5[%c0_21, %c0_22] : memref<8x4xf32, #tpu.memory_space<vmem>>, vector<8x4xf32>
      tpu.vector_store %arg5[%c0_21, %c0_22], %32 {strides = array<i32>} : memref<8x4xf32, #tpu.memory_space<vmem>>, vector<8x4xf32>,
    } else {
    }
    return
  }
  func.func @transform_0(%arg0: i32) -> (i32, i32) {
    %c0_i32 = arith.constant 0 : i32
    %c0_i32_0 = arith.constant 0 : i32
    %c0_i32_1 = arith.constant 0 : i32
    return %c0_i32, %c0_i32_0 : i32, i32
  }
  func.func @transform_1(%arg0: i32) -> (i32, i32) {
    %c0_i32 = arith.constant 0 : i32
    %c0_i32_0 = arith.constant 0 : i32
    return %c0_i32, %arg0 : i32, i32
  }
  func.func @transform_2(%arg0: i32) -> (i32, i32) {
    %c0_i32 = arith.constant 0 : i32
    %c0_i32_0 = arith.constant 0 : i32
    return %arg0, %c0_i32 : i32, i32
  }
  func.func @transform_3(%arg0: i32) -> (i32, i32) {
    %c0_i32 = arith.constant 0 : i32
    %c0_i32_0 = arith.constant 0 : i32
    %c0_i32_1 = arith.constant 0 : i32
    return %c0_i32, %c0_i32_0 : i32, i32
  }
  func.func @transform_4(%arg0: i32) -> (i32, i32) {
    %c0_i32 = arith.constant 0 : i32
    %c0_i32_0 = arith.constant 0 : i32
    %c0_i32_1 = arith.constant 0 : i32
    return %c0_i32, %c0_i32_0 : i32, i32
  }
}

</mosaic_0001>

<llo_original>
// kernel: tpu_custom_call.1
$region0: #{tpu_custom_call.1}
  #allocation0 [shape = 'u32[]', space=smem, size = 0x4, offset = 0x4, fixed_abs, tag = 'smem constant byte address 0x4 - core index']
  #allocation1 [shape = 'u32[144,128]{1,0:T(1,128)}', space=vmem, size = 0x12000, scoped, tag = 'internal scratch']
  #allocation2 [shape = 'f32[16,2048]{1,0:T(8,128)}', space=vmem, size = 0x20000, scoped, tag = 'scratch operand']
  %s0 = inlined_call_operand.hbm [shape: f32[4,8], index: 0, kind: input, shape index: {}]
  %s1 = inlined_call_operand.hbm [shape: bf16[16,768], index: 1, kind: input, shape index: {}]
  %s2 = inlined_call_operand.hbm [shape: bf16[768,2048], index: 2, kind: input, shape index: {}]
  %s3 = inlined_call_operand.hbm [shape: f32[1,2048], index: 3, kind: input, shape index: {}]
  %s4 = inlined_call_operand.vmem [shape: f32[8,4], index: 4, kind: output, shape index: {}]
  %s5 = sld [smem:[#allocation0]]
  $region50: #{tpu_custom_call.1} parent=0
    _
  %s7 = ssub.s32 1, %s5
  %s8 = scalar_select 0, %s7, %s5
  $region1: #{tpu_custom_call.1} parent=0
    #allocation3 [shape = 'u8[2048]{0}', space=vmem, size = 0x800, scoped, tag = 'input window, operand 0, single buffered']
    #allocation4 [shape = 's32[1]{0}', space=sflag, size = 0x4, scoped, tag = 'scoped memory for tpu_custom_call.1']
    #allocation5 [shape = 'u8[24576]{0}', space=vmem, size = 0x6000, scoped, tag = 'input window, operand 1, single buffered']
    #allocation6 [shape = 's32[1]{0}', space=sflag, size = 0x4, scoped, tag = 'scoped memory for tpu_custom_call.1']
    #allocation7 [shape = 'u8[3145728]{0}', space=vmem, size = 0x300000, scoped, tag = 'input window, operand 2, single buffered']
    #allocation8 [shape = 'u8[8192]{0}', space=vmem, size = 0x2000, scoped, tag = 'input window, operand 3, single buffered']
    #allocation9 [shape = 's32[1]{0}', space=sflag, size = 0x4, scoped, tag = 'scoped memory for tpu_custom_call.1']
    %9 = vsyncpa [#allocation4], 0
    %10 = vsyncpa [#allocation6], 0
    %11 = vsyncpa [#allocation9], 0
    // Predicated region
    $region2: #{tpu_custom_call.1} parent=1 // pred_check
      _
    $region3: #{tpu_custom_call.1} parent=1 // pred_check_branch
      %13 = sbr.rel (0) target = $region5
    $region4: #{tpu_custom_call.1} parent=1 // pred_region
      %s15 = ssub.s32 64, 64
      %16 = vsyncadd [#allocation4], %s15
      %s18 = sshll.u32 [#allocation3], 4
      %s19 = int_to_ptr.vmem [resolvable:$true] %s18
      %21 = dma.hbm_to_vmem [thread:$0]  %s0, 64, %s19, [#allocation4]
    $region5: #{tpu_custom_call.1} parent=1 // pred_fallthru
      _
    // Predicated region
    $region6: #{tpu_custom_call.1} parent=1 // pred_check
      _
    $region7: #{tpu_custom_call.1} parent=1 // pred_check_branch
      %23 = sbr.rel (0) target = $region9
    $region8: #{tpu_custom_call.1} parent=1 // pred_region
      %s25 = ssub.s32 768, 768
      %26 = vsyncadd [#allocation6], %s25
      %s27 = sshll.u32 [#allocation5], 4
      %s28 = int_to_ptr.vmem [resolvable:$true] %s27
      %33 = dma.hbm_to_vmem [thread:$0]  %s1, 768, %s28, [#allocation6], 384, 384, 24
    $region9: #{tpu_custom_call.1} parent=1 // pred_fallthru
      _
    // Predicated region
    $region10: #{tpu_custom_call.1} parent=1 // pred_check
      _
    $region11: #{tpu_custom_call.1} parent=1 // pred_check_branch
      %35 = sbr.rel (0) target = $region13
    $region12: #{tpu_custom_call.1} parent=1 // pred_region
      %s37 = ssub.s32 98304, 98304
      %38 = vsyncadd [#allocation6], %s37
      %s39 = sshll.u32 [#allocation7], 4
      %s40 = int_to_ptr.vmem [resolvable:$true] %s39
      %45 = dma.hbm_to_vmem [thread:$0]  %s2, 98304, %s40, [#allocation6], 1024, 1024, 64
    $region13: #{tpu_custom_call.1} parent=1 // pred_fallthru
      _
    // Predicated region
    $region14: #{tpu_custom_call.1} parent=1 // pred_check
      _
    $region15: #{tpu_custom_call.1} parent=1 // pred_check_branch
      %47 = sbr.rel (0) target = $region17
    $region16: #{tpu_custom_call.1} parent=1 // pred_region
      %s49 = ssub.s32 256, 256
      %50 = vsyncadd [#allocation9], %s49
      %s52 = sshll.u32 [#allocation8], 4
      %s53 = int_to_ptr.vmem [resolvable:$true] %s52
      %55 = dma.hbm_to_vmem [thread:$0]  %s3, 256, %s53, [#allocation9]
    $region17: #{tpu_custom_call.1} parent=1 // pred_fallthru
      _
    // Predicated region
    $region18: #{tpu_custom_call.1} parent=1 // pred_check
      _
    $region19: #{tpu_custom_call.1} parent=1 // pred_check_branch
      %57 = sbr.rel (0) target = $region21
    $region20: #{tpu_custom_call.1} parent=1 // pred_region
      %58 = dma.done [#allocation4], 64
    $region21: #{tpu_custom_call.1} parent=1 // pred_fallthru
      _
    // Predicated region
    $region22: #{tpu_custom_call.1} parent=1 // pred_check
      _
    $region23: #{tpu_custom_call.1} parent=1 // pred_check_branch
      %60 = sbr.rel (0) target = $region25
    $region24: #{tpu_custom_call.1} parent=1 // pred_region
      %61 = dma.done [#allocation6], 768
    $region25: #{tpu_custom_call.1} parent=1 // pred_fallthru
      _
    // Predicated region
    $region26: #{tpu_custom_call.1} parent=1 // pred_check
      _
    $region27: #{tpu_custom_call.1} parent=1 // pred_check_branch
      %63 = sbr.rel (0) target = $region29
    $region28: #{tpu_custom_call.1} parent=1 // pred_region
      %64 = dma.done [#allocation6], 98304
    $region29: #{tpu_custom_call.1} parent=1 // pred_fallthru
      _
    // Predicated region
    $region30: #{tpu_custom_call.1} parent=1 // pred_check
      _
    $region31: #{tpu_custom_call.1} parent=1 // pred_check_branch
      %66 = sbr.rel (0) target = $region33
    $region32: #{tpu_custom_call.1} parent=1 // pred_region
      %67 = dma.done [#allocation9], 256
    $region33: #{tpu_custom_call.1} parent=1 // pred_fallthru
      _
    %p68 = scmp.eq.s32.totalorder 0, 0
    // Predicated region
    $region34: #{tpu_custom_call.1} parent=1 // pred_check
      %p69 = pneg %p68
    $region35: #{tpu_custom_call.1} parent=1 // pred_check_branch
      %71 = sbr.rel (%p69) target = $region37
    $region36: #{tpu_custom_call.1} parent=1 // pred_region
      %72 = vst [vmem:[#allocation2] sm:$0xff] 0.0
      %73 = vst [vmem:[#allocation2 + $0x8] sm:$0xff] 0.0
      %74 = vst [vmem:[#allocation2 + $0x10] sm:$0xff] 0.0
      %75 = vst [vmem:[#allocation2 + $0x18] sm:$0xff] 0.0
      %76 = vst [vmem:[#allocation2 + $0x20] sm:$0xff] 0.0
      %77 = vst [vmem:[#allocation2 + $0x28] sm:$0xff] 0.0
      %78 = vst [vmem:[#allocation2 + $0x30] sm:$0xff] 0.0
      %79 = vst [vmem:[#allocation2 + $0x38] sm:$0xff] 0.0
      %80 = vst [vmem:[#allocation2 + $0x40] sm:$0xff] 0.0
      %81 = vst [vmem:[#allocation2 + $0x48] sm:$0xff] 0.0
      %82 = vst [vmem:[#allocation2 + $0x50] sm:$0xff] 0.0
      %83 = vst [vmem:[#allocation2 + $0x58] sm:$0xff] 0.0
      %84 = vst [vmem:[#allocation2 + $0x60] sm:$0xff] 0.0
      %85 = vst [vmem:[#allocation2 + $0x68] sm:$0xff] 0.0
      %86 = vst [vmem:[#allocation2 + $0x70] sm:$0xff] 0.0
      %87 = vst [vmem:[#allocation2 + $0x78] sm:$0xff] 0.0
      %88 = vst [vmem:[#allocation2 + $0x80] sm:$0xff] 0.0
      %89 = vst [vmem:[#allocation2 + $0x88] sm:$0xff] 0.0
      %90 = vst [vmem:[#allocation2 + $0x90] sm:$0xff] 0.0
      %91 = vst [vmem:[#allocation2 + $0x98] sm:$0xff] 0.0
      %92 = vst [vmem:[#allocation2 + $0xa0] sm:$0xff] 0.0
      %93 = vst [vmem:[#allocation2 + $0xa8] sm:$0xff] 0.0
      %94 = vst [vmem:[#allocation2 + $0xb0] sm:$0xff] 0.0
      %95 = vst [vmem:[#allocation2 + $0xb8] sm:$0xff] 0.0
      %96 = vst [vmem:[#allocation2 + $0xc0] sm:$0xff] 0.0
      %97 = vst [vmem:[#allocation2 + $0xc8] sm:$0xff] 0.0
      %98 = vst [vmem:[#allocation2 + $0xd0] sm:$0xff] 0.0
      %99 = vst [vmem:[#allocation2 + $0xd8] sm:$0xff] 0.0
      %100 = vst [vmem:[#allocation2 + $0xe0] sm:$0xff] 0.0
      %101 = vst [vmem:[#allocation2 + $0xe8] sm:$0xff] 0.0
      %102 = vst [vmem:[#allocation2 + $0xf0] sm:$0xff] 0.0
      %103 = vst [vmem:[#allocation2 + $0xf8] sm:$0xff] 0.0
    $region37: #{tpu_custom_call.1} parent=1 // pred_fallthru
      _
    %v104 = vld [vmem:[#allocation2] sm:$0xff]
    %v105 = vld [vmem:[#allocation2 + $0x8] sm:$0xff]
    %v106 = vld [vmem:[#allocation2 + $0x10] sm:$0xff]
    %v107 = vld [vmem:[#allocation2 + $0x18] sm:$0xff]
    %v108 = vld [vmem:[#allocation2 + $0x20] sm:$0xff]
    %v109 = vld [vmem:[#allocation2 + $0x28] sm:$0xff]
    %v110 = vld [vmem:[#allocation2 + $0x30] sm:$0xff]
    %v111 = vld [vmem:[#allocation2 + $0x38] sm:$0xff]
    %v112 = vld [vmem:[#allocation2 + $0x40] sm:$0xff]
    %v113 = vld [vmem:[#allocation2 + $0x48] sm:$0xff]
    %v114 = vld [vmem:[#allocation2 + $0x50] sm:$0xff]
    %v115 = vld [vmem:[#allocation2 + $0x58] sm:$0xff]
    %v116 = vld [vmem:[#allocation2 + $0x60] sm:$0xff]
    %v117 = vld [vmem:[#allocation2 + $0x68] sm:$0xff]
    %v118 = vld [vmem:[#allocation2 + $0x70] sm:$0xff]
    %v119 = vld [vmem:[#allocation2 + $0x78] sm:$0xff]
    %v120 = vld [vmem:[#allocation2 + $0x80] sm:$0xff]
    %v121 = vld [vmem:[#allocation2 + $0x88] sm:$0xff]
    %v122 = vld [vmem:[#allocation2 + $0x90] sm:$0xff]
    %v123 = vld [vmem:[#allocation2 + $0x98] sm:$0xff]
    %v124 = vld [vmem:[#allocation2 + $0xa0] sm:$0xff]
    %v125 = vld [vmem:[#allocation2 + $0xa8] sm:$0xff]
    %v126 = vld [vmem:[#allocation2 + $0xb0] sm:$0xff]
    %v127 = vld [vmem:[#allocation2 + $0xb8] sm:$0xff]
    %v128 = vld [vmem:[#allocation2 + $0xc0] sm:$0xff]
    %v129 = vld [vmem:[#allocation2 + $0xc8] sm:$0xff]
    %v130 = vld [vmem:[#allocation2 + $0xd0] sm:$0xff]
    %v131 = vld [vmem:[#allocation2 + $0xd8] sm:$0xff]
    %v132 = vld [vmem:[#allocation2 + $0xe0] sm:$0xff]
    %v133 = vld [vmem:[#allocation2 + $0xe8] sm:$0xff]
    %v134 = vld [vmem:[#allocation2 + $0xf0] sm:$0xff]
    %v135 = vld [vmem:[#allocation2 + $0xf8] sm:$0xff]
    %v136 = vld [vmem:[#allocation5] sm:$0xff]
    %v137 = vld [vmem:[#allocation5 + $0x8] sm:$0xff]
    %v138 = vld [vmem:[#allocation5 + $0x10] sm:$0xff]
    %v139 = vld [vmem:[#allocation5 + $0x18] sm:$0xff]
    %v140 = vld [vmem:[#allocation5 + $0x20] sm:$0xff]
    %v141 = vld [vmem:[#allocation5 + $0x28] sm:$0xff]
    %v142 = vld [vmem:[#allocation7] sm:$0xff]
    %v143 = vld [vmem:[#allocation7 + $0x8] sm:$0xff]
    %v144 = vld [vmem:[#allocation7 + $0x10] sm:$0xff]
    %v145 = vld [vmem:[#allocation7 + $0x18] sm:$0xff]
    %v146 = vld [vmem:[#allocation7 + $0x20] sm:$0xff]
    %v147 = vld [vmem:[#allocation7 + $0x28] sm:$0xff]
    %v148 = vld [vmem:[#allocation7 + $0x30] sm:$0xff]
    %v149 = vld [vmem:[#allocation7 + $0x38] sm:$0xff]
    %v150 = vld [vmem:[#allocation7 + $0x40] sm:$0xff]
    %v151 = vld [vmem:[#allocation7 + $0x48] sm:$0xff]
    %v152 = vld [vmem:[#allocation7 + $0x50] sm:$0xff]
    %v153 = vld [vmem:[#allocation7 + $0x58] sm:$0xff]
    %v154 = vld [vmem:[#allocation7 + $0x60] sm:$0xff]
    %v155 = vld [vmem:[#allocation7 + $0x68] sm:$0xff]
    %v156 = vld [vmem:[#allocation7 + $0x70] sm:$0xff]
    %v157 = vld [vmem:[#allocation7 + $0x78] sm:$0xff]
    %v158 = vld [vmem:[#allocation7 + $0x80] sm:$0xff]
    %v159 = vld [vmem:[#allocation7 + $0x88] sm:$0xff]
    %v160 = vld [vmem:[#allocation7 + $0x90] sm:$0xff]
    %v161 = vld [vmem:[#allocation7 + $0x98] sm:$0xff]
    %v162 = vld [vmem:[#allocation7 + $0xa0] sm:$0xff]
    %v163 = vld [vmem:[#allocation7 + $0xa8] sm:$0xff]
    %v164 = vld [vmem:[#allocation7 + $0xb0] sm:$0xff]
    %v165 = vld [vmem:[#allocation7 + $0xb8] sm:$0xff]
    %v166 = vld [vmem:[#allocation7 + $0xc0] sm:$0xff]
    %v167 = vld [vmem:[#allocation7 + $0xc8] sm:$0xff]
    %v168 = vld [vmem:[#allocation7 + $0xd0] sm:$0xff]
    %v169 = vld [vmem:[#allocation7 + $0xd8] sm:$0xff]
    %v170 = vld [vmem:[#allocation7 + $0xe0] sm:$0xff]
    %v171 = vld [vmem:[#allocation7 + $0xe8] sm:$0xff]
    %v172 = vld [vmem:[#allocation7 + $0xf0] sm:$0xff]
    %v173 = vld [vmem:[#allocation7 + $0xf8] sm:$0xff]
    %v174 = vld [vmem:[#allocation7 + $0x100] sm:$0xff]
    %v175 = vld [vmem:[#allocation7 + $0x108] sm:$0xff]
    %v176 = vld [vmem:[#allocation7 + $0x110] sm:$0xff]
    %v177 = vld [vmem:[#allocation7 + $0x118] sm:$0xff]
    %v178 = vld [vmem:[#allocation7 + $0x120] sm:$0xff]
    %v179 = vld [vmem:[#allocation7 + $0x128] sm:$0xff]
    %v180 = vld [vmem:[#allocation7 + $0x130] sm:$0xff]
    %v181 = vld [vmem:[#allocation7 + $0x138] sm:$0xff]
    %v182 = vld [vmem:[#allocation7 + $0x140] sm:$0xff]
    %v183 = vld [vmem:[#allocation7 + $0x148] sm:$0xff]
    %v184 = vld [vmem:[#allocation7 + $0x150] sm:$0xff]
    %v185 = vld [vmem:[#allocation7 + $0x158] sm:$0xff]
    %v186 = vld [vmem:[#allocation7 + $0x160] sm:$0xff]
    %v187 = vld [vmem:[#allocation7 + $0x168] sm:$0xff]
    %v188 = vld [vmem:[#allocation7 + $0x170] sm:$0xff]
    %v189 = vld [vmem:[#allocation7 + $0x178] sm:$0xff]
    %v190 = vld [vmem:[#allocation7 + $0x180] sm:$0xff]
    %v191 = vld [vmem:[#allocation7 + $0x188] sm:$0xff]
    %v192 = vld [vmem:[#allocation7 + $0x190] sm:$0xff]
    %v193 = vld [vmem:[#allocation7 + $0x198] sm:$0xff]
    %v194 = vld [vmem:[#allocation7 + $0x1a0] sm:$0xff]
    %v195 = vld [vmem:[#allocation7 + $0x1a8] sm:$0xff]
    %v196 = vld [vmem:[#allocation7 + $0x1b0] sm:$0xff]
    %v197 = vld [vmem:[#allocation7 + $0x1b8] sm:$0xff]
    %v198 = vld [vmem:[#allocation7 + $0x1c0] sm:$0xff]
    %v199 = vld [vmem:[#allocation7 + $0x1c8] sm:$0xff]
    %v200 = vld [vmem:[#allocation7 + $0x1d0] sm:$0xff]
    %v201 = vld [vmem:[#allocation7 + $0x1d8] sm:$0xff]
    %v202 = vld [vmem:[#allocation7 + $0x1e0] sm:$0xff]
    %v203 = vld [vmem:[#allocation7 + $0x1e8] sm:$0xff]
    %v204 = vld [vmem:[#allocation7 + $0x1f0] sm:$0xff]
    %v205 = vld [vmem:[#allocation7 + $0x1f8] sm:$0xff]
    %v206 = vld [vmem:[#allocation7 + $0x200] sm:$0xff]
    %v207 = vld [vmem:[#allocation7 + $0x208] sm:$0xff]
    %v208 = vld [vmem:[#allocation7 + $0x210] sm:$0xff]
    %v209 = vld [vmem:[#allocation7 + $0x218] sm:$0xff]
    %v210 = vld [vmem:[#allocation7 + $0x220] sm:$0xff]
    %v211 = vld [vmem:[#allocation7 + $0x228] sm:$0xff]
    %v212 = vld [vmem:[#allocation7 + $0x230] sm:$0xff]
    %v213 = vld [vmem:[#allocation7 + $0x238] sm:$0xff]
    %v214 = vld [vmem:[#allocation7 + $0x240] sm:$0xff]
    %v215 = vld [vmem:[#allocation7 + $0x248] sm:$0xff]
    %v216 = vld [vmem:[#allocation7 + $0x250] sm:$0xff]
    %v217 = vld [vmem:[#allocation7 + $0x258] sm:$0xff]
    %v218 = vld [vmem:[#allocation7 + $0x260] sm:$0xff]
    %v219 = vld [vmem:[#allocation7 + $0x268] sm:$0xff]
    %v220 = vld [vmem:[#allocation7 + $0x270] sm:$0xff]
    %v221 = vld [vmem:[#allocation7 + $0x278] sm:$0xff]
    %v222 = vld [vmem:[#allocation7 + $0x280] sm:$0xff]
    %v223 = vld [vmem:[#allocation7 + $0x288] sm:$0xff]
    %v224 = vld [vmem:[#allocation7 + $0x290] sm:$0xff]
    %v225 = vld [vmem:[#allocation7 + $0x298] sm:$0xff]
    %v226 = vld [vmem:[#allocation7 + $0x2a0] sm:$0xff]
    %v227 = vld [vmem:[#allocation7 + $0x2a8] sm:$0xff]
    %v228 = vld [vmem:[#allocation7 + $0x2b0] sm:$0xff]
    %v229 = vld [vmem:[#allocation7 + $0x2b8] sm:$0xff]
    %v230 = vld [vmem:[#allocation7 + $0x2c0] sm:$0xff]
    %v231 = vld [vmem:[#allocation7 + $0x2c8] sm:$0xff]
    %v232 = vld [vmem:[#allocation7 + $0x2d0] sm:$0xff]
    %v233 = vld [vmem:[#allocation7 + $0x2d8] sm:$0xff]
    %v234 = vld [vmem:[#allocation7 + $0x2e0] sm:$0xff]
    %v235 = vld [vmem:[#allocation7 + $0x2e8] sm:$0xff]
    %v236 = vld [vmem:[#allocation7 + $0x2f0] sm:$0xff]
    %v237 = vld [vmem:[#allocation7 + $0x2f8] sm:$0xff]
    %v238 = vld [vmem:[#allocation7 + $0x300] sm:$0xff]
    %v239 = vld [vmem:[#allocation7 + $0x308] sm:$0xff]
    %v240 = vld [vmem:[#allocation7 + $0x310] sm:$0xff]
    %v241 = vld [vmem:[#allocation7 + $0x318] sm:$0xff]
    %v242 = vld [vmem:[#allocation7 + $0x320] sm:$0xff]
    %v243 = vld [vmem:[#allocation7 + $0x328] sm:$0xff]
    %v244 = vld [vmem:[#allocation7 + $0x330] sm:$0xff]
    %v245 = vld [vmem:[#allocation7 + $0x338] sm:$0xff]
    %v246 = vld [vmem:[#allocation7 + $0x340] sm:$0xff]
    %v247 = vld [vmem:[#allocation7 + $0x348] sm:$0xff]
    %v248 = vld [vmem:[#allocation7 + $0x350] sm:$0xff]
    %v249 = vld [vmem:[#allocation7 + $0x358] sm:$0xff]
    %v250 = vld [vmem:[#allocation7 + $0x360] sm:$0xff]
    %v251 = vld [vmem:[#allocation7 + $0x368] sm:$0xff]
    %v252 = vld [vmem:[#allocation7 + $0x370] sm:$0xff]
    %v253 = vld [vmem:[#allocation7 + $0x378] sm:$0xff]
    %v254 = vld [vmem:[#allocation7 + $0x380] sm:$0xff]
    %v255 = vld [vmem:[#allocation7 + $0x388] sm:$0xff]
    %v256 = vld [vmem:[#allocation7 + $0x390] sm:$0xff]
    %v257 = vld [vmem:[#allocation7 + $0x398] sm:$0xff]
    %v258 = vld [vmem:[#allocation7 + $0x3a0] sm:$0xff]
    %v259 = vld [vmem:[#allocation7 + $0x3a8] sm:$0xff]
    %v260 = vld [vmem:[#allocation7 + $0x3b0] sm:$0xff]
    %v261 = vld [vmem:[#allocation7 + $0x3b8] sm:$0xff]
    %v262 = vld [vmem:[#allocation7 + $0x3c0] sm:$0xff]
    %v263 = vld [vmem:[#allocation7 + $0x3c8] sm:$0xff]
    %v264 = vld [vmem:[#allocation7 + $0x3d0] sm:$0xff]
    %v265 = vld [vmem:[#allocation7 + $0x3d8] sm:$0xff]
    %v266 = vld [vmem:[#allocation7 + $0x3e0] sm:$0xff]
    %v267 = vld [vmem:[#allocation7 + $0x3e8] sm:$0xff]
    %v268 = vld [vmem:[#allocation7 + $0x3f0] sm:$0xff]
    %v269 = vld [vmem:[#allocation7 + $0x3f8] sm:$0xff]
    %v270 = vld [vmem:[#allocation7 + $0x400] sm:$0xff]
    %v271 = vld [vmem:[#allocation7 + $0x408] sm:$0xff]
    %v272 = vld [vmem:[#allocation7 + $0x410] sm:$0xff]
    %v273 = vld [vmem:[#allocation7 + $0x418] sm:$0xff]
    %v274 = vld [vmem:[#allocation7 + $0x420] sm:$0xff]
    %v275 = vld [vmem:[#allocation7 + $0x428] sm:$0xff]
    %v276 = vld [vmem:[#allocation7 + $0x430] sm:$0xff]
    %v277 = vld [vmem:[#allocation7 + $0x438] sm:$0xff]
    %v278 = vld [vmem:[#allocation7 + $0x440] sm:$0xff]
    %v279 = vld [vmem:[#allocation7 + $0x448] sm:$0xff]
    %v280 = vld [vmem:[#allocation7 + $0x450] sm:$0xff]
    %v281 = vld [vmem:[#allocation7 + $0x458] sm:$0xff]
    %v282 = vld [vmem:[#allocation7 + $0x460] sm:$0xff]
    %v283 = vld [vmem:[#allocation7 + $0x468] sm:$0xff]
    %v284 = vld [vmem:[#allocation7 + $0x470] sm:$0xff]
    %v285 = vld [vmem:[#allocation7 + $0x478] sm:$0xff]
    %v286 = vld [vmem:[#allocation7 + $0x480] sm:$0xff]
    %v287 = vld [vmem:[#allocation7 + $0x488] sm:$0xff]
    %v288 = vld [vmem:[#allocation7 + $0x490] sm:$0xff]
    %v289 = vld [vmem:[#allocation7 + $0x498] sm:$0xff]
    %v290 = vld [vmem:[#allocation7 + $0x4a0] sm:$0xff]
    %v291 = vld [vmem:[#allocation7 + $0x4a8] sm:$0xff]
    %v292 = vld [vmem:[#allocation7 + $0x4b0] sm:$0xff]
    %v293 = vld [vmem:[#allocation7 + $0x4b8] sm:$0xff]
    %v294 = vld [vmem:[#allocation7 + $0x4c0] sm:$0xff]
    %v295 = vld [vmem:[#allocation7 + $0x4c8] sm:$0xff]
    %v296 = vld [vmem:[#allocation7 + $0x4d0] sm:$0xff]
    %v297 = vld [vmem:[#allocation7 + $0x4d8] sm:$0xff]
    %v298 = vld [vmem:[#allocation7 + $0x4e0] sm:$0xff]
    %v299 = vld [vmem:[#allocation7 + $0x4e8] sm:$0xff]
    %v300 = vld [vmem:[#allocation7 + $0x4f0] sm:$0xff]
    %v301 = vld [vmem:[#allocation7 + $0x4f8] sm:$0xff]
    %v302 = vld [vmem:[#allocation7 + $0x500] sm:$0xff]
    %v303 = vld [vmem:[#allocation7 + $0x508] sm:$0xff]
    %v304 = vld [vmem:[#allocation7 + $0x510] sm:$0xff]
    %v305 = vld [vmem:[#allocation7 + $0x518] sm:$0xff]
    %v306 = vld [vmem:[#allocation7 + $0x520] sm:$0xff]
    %v307 = vld [vmem:[#allocation7 + $0x528] sm:$0xff]
    %v308 = vld [vmem:[#allocation7 + $0x530] sm:$0xff]
    %v309 = vld [vmem:[#allocation7 + $0x538] sm:$0xff]
    %v310 = vld [vmem:[#allocation7 + $0x540] sm:$0xff]
    %v311 = vld [vmem:[#allocation7 + $0x548] sm:$0xff]
    %v312 = vld [vmem:[#allocation7 + $0x550] sm:$0xff]
    %v313 = vld [vmem:[#allocation7 + $0x558] sm:$0xff]
    %v314 = vld [vmem:[#allocation7 + $0x560] sm:$0xff]
    %v315 = vld [vmem:[#allocation7 + $0x568] sm:$0xff]
    %v316 = vld [vmem:[#allocation7 + $0x570] sm:$0xff]
    %v317 = vld [vmem:[#allocation7 + $0x578] sm:$0xff]
    %v318 = vld [vmem:[#allocation7 + $0x580] sm:$0xff]
    %v319 = vld [vmem:[#allocation7 + $0x588] sm:$0xff]
    %v320 = vld [vmem:[#allocation7 + $0x590] sm:$0xff]
    %v321 = vld [vmem:[#allocation7 + $0x598] sm:$0xff]
    %v322 = vld [vmem:[#allocation7 + $0x5a0] sm:$0xff]
    %v323 = vld [vmem:[#allocation7 + $0x5a8] sm:$0xff]
    %v324 = vld [vmem:[#allocation7 + $0x5b0] sm:$0xff]
    %v325 = vld [vmem:[#allocation7 + $0x5b8] sm:$0xff]
    %v326 = vld [vmem:[#allocation7 + $0x5c0] sm:$0xff]
    %v327 = vld [vmem:[#allocation7 + $0x5c8] sm:$0xff]
    %v328 = vld [vmem:[#allocation7 + $0x5d0] sm:$0xff]
    %v329 = vld [vmem:[#allocation7 + $0x5d8] sm:$0xff]
    %v330 = vld [vmem:[#allocation7 + $0x5e0] sm:$0xff]
    %v331 = vld [vmem:[#allocation7 + $0x5e8] sm:$0xff]
    %v332 = vld [vmem:[#allocation7 + $0x5f0] sm:$0xff]
    %v333 = vld [vmem:[#allocation7 + $0x5f8] sm:$0xff]
    %v334 = vld [vmem:[#allocation7 + $0x600] sm:$0xff]
    %v335 = vld [vmem:[#allocation7 + $0x608] sm:$0xff]
    %v336 = vld [vmem:[#allocation7 + $0x610] sm:$0xff]
    %v337 = vld [vmem:[#allocation7 + $0x618] sm:$0xff]
    %v338 = vld [vmem:[#allocation7 + $0x620] sm:$0xff]
    %v339 = vld [vmem:[#allocation7 + $0x628] sm:$0xff]
    %v340 = vld [vmem:[#allocation7 + $0x630] sm:$0xff]
    %v341 = vld [vmem:[#allocation7 + $0x638] sm:$0xff]
    %v342 = vld [vmem:[#allocation7 + $0x640] sm:$0xff]
    %v343 = vld [vmem:[#allocation7 + $0x648] sm:$0xff]
    %v344 = vld [vmem:[#allocation7 + $0x650] sm:$0xff]
    %v345 = vld [vmem:[#allocation7 + $0x658] sm:$0xff]
    %v346 = vld [vmem:[#allocation7 + $0x660] sm:$0xff]
    %v347 = vld [vmem:[#allocation7 + $0x668] sm:$0xff]
    %v348 = vld [vmem:[#allocation7 + $0x670] sm:$0xff]
    %v349 = vld [vmem:[#allocation7 + $0x678] sm:$0xff]
    %v350 = vld [vmem:[#allocation7 + $0x680] sm:$0xff]
    %v351 = vld [vmem:[#allocation7 + $0x688] sm:$0xff]
    %v352 = vld [vmem:[#allocation7 + $0x690] sm:$0xff]
    %v353 = vld [vmem:[#allocation7 + $0x698] sm:$0xff]
    %v354 = vld [vmem:[#allocation7 + $0x6a0] sm:$0xff]
    %v355 = vld [vmem:[#allocation7 + $0x6a8] sm:$0xff]
    %v356 = vld [vmem:[#allocation7 + $0x6b0] sm:$0xff]
    %v357 = vld [vmem:[#allocation7 + $0x6b8] sm:$0xff]
    %v358 = vld [vmem:[#allocation7 + $0x6c0] sm:$0xff]
    %v359 = vld [vmem:[#allocation7 + $0x6c8] sm:$0xff]
    %v360 = vld [vmem:[#allocation7 + $0x6d0] sm:$0xff]
    %v361 = vld [vmem:[#allocation7 + $0x6d8] sm:$0xff]
    %v362 = vld [vmem:[#allocation7 + $0x6e0] sm:$0xff]
    %v363 = vld [vmem:[#allocation7 + $0x6e8] sm:$0xff]
    %v364 = vld [vmem:[#allocation7 + $0x6f0] sm:$0xff]
    %v365 = vld [vmem:[#allocation7 + $0x6f8] sm:$0xff]
    %v366 = vld [vmem:[#allocation7 + $0x700] sm:$0xff]
    %v367 = vld [vmem:[#allocation7 + $0x708] sm:$0xff]
    %v368 = vld [vmem:[#allocation7 + $0x710] sm:$0xff]
    %v369 = vld [vmem:[#allocation7 + $0x718] sm:$0xff]
    %v370 = vld [vmem:[#allocation7 + $0x720] sm:$0xff]
    %v371 = vld [vmem:[#allocation7 + $0x728] sm:$0xff]
    %v372 = vld [vmem:[#allocation7 + $0x730] sm:$0xff]
    %v373 = vld [vmem:[#allocation7 + $0x738] sm:$0xff]
    %v374 = vld [vmem:[#allocation7 + $0x740] sm:$0xff]
    %v375 = vld [vmem:[#allocation7 + $0x748] sm:$0xff]
    %v376 = vld [vmem:[#allocation7 + $0x750] sm:$0xff]
    %v377 = vld [vmem:[#allocation7 + $0x758] sm:$0xff]
    %v378 = vld [vmem:[#allocation7 + $0x760] sm:$0xff]
    %v379 = vld [vmem:[#allocation7 + $0x768] sm:$0xff]
    %v380 = vld [vmem:[#allocation7 + $0x770] sm:$0xff]
    %v381 = vld [vmem:[#allocation7 + $0x778] sm:$0xff]
    %v382 = vld [vmem:[#allocation7 + $0x780] sm:$0xff]
    %v383 = vld [vmem:[#allocation7 + $0x788] sm:$0xff]
    %v384 = vld [vmem:[#allocation7 + $0x790] sm:$0xff]
    %v385 = vld [vmem:[#allocation7 + $0x798] sm:$0xff]
    %v386 = vld [vmem:[#allocation7 + $0x7a0] sm:$0xff]
    %v387 = vld [vmem:[#allocation7 + $0x7a8] sm:$0xff]
    %v388 = vld [vmem:[#allocation7 + $0x7b0] sm:$0xff]
    %v389 = vld [vmem:[#allocation7 + $0x7b8] sm:$0xff]
    %v390 = vld [vmem:[#allocation7 + $0x7c0] sm:$0xff]
    %v391 = vld [vmem:[#allocation7 + $0x7c8] sm:$0xff]
    %v392 = vld [vmem:[#allocation7 + $0x7d0] sm:$0xff]
    %v393 = vld [vmem:[#allocation7 + $0x7d8] sm:$0xff]
    %v394 = vld [vmem:[#allocation7 + $0x7e0] sm:$0xff]
    %v395 = vld [vmem:[#allocation7 + $0x7e8] sm:$0xff]
    %v396 = vld [vmem:[#allocation7 + $0x7f0] sm:$0xff]
    %v397 = vld [vmem:[#allocation7 + $0x7f8] sm:$0xff]
    %v398 = vld [vmem:[#allocation7 + $0x800] sm:$0xff]
    %v399 = vld [vmem:[#allocation7 + $0x808] sm:$0xff]
    %v400 = vld [vmem:[#allocation7 + $0x810] sm:$0xff]
    %v401 = vld [vmem:[#allocation7 + $0x818] sm:$0xff]
    %v402 = vld [vmem:[#allocation7 + $0x820] sm:$0xff]
    %v403 = vld [vmem:[#allocation7 + $0x828] sm:$0xff]
    %v404 = vld [vmem:[#allocation7 + $0x830] sm:$0xff]
    %v405 = vld [vmem:[#allocation7 + $0x838] sm:$0xff]
    %v406 = vld [vmem:[#allocation7 + $0x840] sm:$0xff]
    %v407 = vld [vmem:[#allocation7 + $0x848] sm:$0xff]
    %v408 = vld [vmem:[#allocation7 + $0x850] sm:$0xff]
    %v409 = vld [vmem:[#allocation7 + $0x858] sm:$0xff]
    %v410 = vld [vmem:[#allocation7 + $0x860] sm:$0xff]
    %v411 = vld [vmem:[#allocation7 + $0x868] sm:$0xff]
    %v412 = vld [vmem:[#allocation7 + $0x870] sm:$0xff]
    %v413 = vld [vmem:[#allocation7 + $0x878] sm:$0xff]
    %v414 = vld [vmem:[#allocation7 + $0x880] sm:$0xff]
    %v415 = vld [vmem:[#allocation7 + $0x888] sm:$0xff]
    %v416 = vld [vmem:[#allocation7 + $0x890] sm:$0xff]
    %v417 = vld [vmem:[#allocation7 + $0x898] sm:$0xff]
    %v418 = vld [vmem:[#allocation7 + $0x8a0] sm:$0xff]
    %v419 = vld [vmem:[#allocation7 + $0x8a8] sm:$0xff]
    %v420 = vld [vmem:[#allocation7 + $0x8b0] sm:$0xff]
    %v421 = vld [vmem:[#allocation7 + $0x8b8] sm:$0xff]
    %v422 = vld [vmem:[#allocation7 + $0x8c0] sm:$0xff]
    %v423 = vld [vmem:[#allocation7 + $0x8c8] sm:$0xff]
    %v424 = vld [vmem:[#allocation7 + $0x8d0] sm:$0xff]
    %v425 = vld [vmem:[#allocation7 + $0x8d8] sm:$0xff]
    %v426 = vld [vmem:[#allocation7 + $0x8e0] sm:$0xff]
    %v427 = vld [vmem:[#allocation7 + $0x8e8] sm:$0xff]
    %v428 = vld [vmem:[#allocation7 + $0x8f0] sm:$0xff]
    %v429 = vld [vmem:[#allocation7 + $0x8f8] sm:$0xff]
    %v430 = vld [vmem:[#allocation7 + $0x900] sm:$0xff]
    %v431 = vld [vmem:[#allocation7 + $0x908] sm:$0xff]
    %v432 = vld [vmem:[#allocation7 + $0x910] sm:$0xff]
    %v433 = vld [vmem:[#allocation7 + $0x918] sm:$0xff]
    %v434 = vld [vmem:[#allocation7 + $0x920] sm:$0xff]
    %v435 = vld [vmem:[#allocation7 + $0x928] sm:$0xff]
    %v436 = vld [vmem:[#allocation7 + $0x930] sm:$0xff]
    %v437 = vld [vmem:[#allocation7 + $0x938] sm:$0xff]
    %v438 = vld [vmem:[#allocation7 + $0x940] sm:$0xff]
    %v439 = vld [vmem:[#allocation7 + $0x948] sm:$0xff]
    %v440 = vld [vmem:[#allocation7 + $0x950] sm:$0xff]
    %v441 = vld [vmem:[#allocation7 + $0x958] sm:$0xff]
    %v442 = vld [vmem:[#allocation7 + $0x960] sm:$0xff]
    %v443 = vld [vmem:[#allocation7 + $0x968] sm:$0xff]
    %v444 = vld [vmem:[#allocation7 + $0x970] sm:$0xff]
    %v445 = vld [vmem:[#allocation7 + $0x978] sm:$0xff]
    %v446 = vld [vmem:[#allocation7 + $0x980] sm:$0xff]
    %v447 = vld [vmem:[#allocation7 + $0x988] sm:$0xff]
    %v448 = vld [vmem:[#allocation7 + $0x990] sm:$0xff]
    %v449 = vld [vmem:[#allocation7 + $0x998] sm:$0xff]
    %v450 = vld [vmem:[#allocation7 + $0x9a0] sm:$0xff]
    %v451 = vld [vmem:[#allocation7 + $0x9a8] sm:$0xff]
    %v452 = vld [vmem:[#allocation7 + $0x9b0] sm:$0xff]
    %v453 = vld [vmem:[#allocation7 + $0x9b8] sm:$0xff]
    %v454 = vld [vmem:[#allocation7 + $0x9c0] sm:$0xff]
    %v455 = vld [vmem:[#allocation7 + $0x9c8] sm:$0xff]
    %v456 = vld [vmem:[#allocation7 + $0x9d0] sm:$0xff]
    %v457 = vld [vmem:[#allocation7 + $0x9d8] sm:$0xff]
    %v458 = vld [vmem:[#allocation7 + $0x9e0] sm:$0xff]
    %v459 = vld [vmem:[#allocation7 + $0x9e8] sm:$0xff]
    %v460 = vld [vmem:[#allocation7 + $0x9f0] sm:$0xff]
    %v461 = vld [vmem:[#allocation7 + $0x9f8] sm:$0xff]
    %v462 = vld [vmem:[#allocation7 + $0xa00] sm:$0xff]
    %v463 = vld [vmem:[#allocation7 + $0xa08] sm:$0xff]
    %v464 = vld [vmem:[#allocation7 + $0xa10] sm:$0xff]
    %v465 = vld [vmem:[#allocation7 + $0xa18] sm:$0xff]
    %v466 = vld [vmem:[#allocation7 + $0xa20] sm:$0xff]
    %v467 = vld [vmem:[#allocation7 + $0xa28] sm:$0xff]
    %v468 = vld [vmem:[#allocation7 + $0xa30] sm:$0xff]
    %v469 = vld [vmem:[#allocation7 + $0xa38] sm:$0xff]
    %v470 = vld [vmem:[#allocation7 + $0xa40] sm:$0xff]
    %v471 = vld [vmem:[#allocation7 + $0xa48] sm:$0xff]
    %v472 = vld [vmem:[#allocation7 + $0xa50] sm:$0xff]
    %v473 = vld [vmem:[#allocation7 + $0xa58] sm:$0xff]
    %v474 = vld [vmem:[#allocation7 + $0xa60] sm:$0xff]
    %v475 = vld [vmem:[#allocation7 + $0xa68] sm:$0xff]
    %v476 = vld [vmem:[#allocation7 + $0xa70] sm:$0xff]
    %v477 = vld [vmem:[#allocation7 + $0xa78] sm:$0xff]
    %v478 = vld [vmem:[#allocation7 + $0xa80] sm:$0xff]
    %v479 = vld [vmem:[#allocation7 + $0xa88] sm:$0xff]
    %v480 = vld [vmem:[#allocation7 + $0xa90] sm:$0xff]
    %v481 = vld [vmem:[#allocation7 + $0xa98] sm:$0xff]
    %v482 = vld [vmem:[#allocation7 + $0xaa0] sm:$0xff]
    %v483 = vld [vmem:[#allocation7 + $0xaa8] sm:$0xff]
    %v484 = vld [vmem:[#allocation7 + $0xab0] sm:$0xff]
    %v485 = vld [vmem:[#allocation7 + $0xab8] sm:$0xff]
    %v486 = vld [vmem:[#allocation7 + $0xac0] sm:$0xff]
    %v487 = vld [vmem:[#allocation7 + $0xac8] sm:$0xff]
    %v488 = vld [vmem:[#allocation7 + $0xad0] sm:$0xff]
    %v489 = vld [vmem:[#allocation7 + $0xad8] sm:$0xff]
    %v490 = vld [vmem:[#allocation7 + $0xae0] sm:$0xff]
    %v491 = vld [vmem:[#allocation7 + $0xae8] sm:$0xff]
    %v492 = vld [vmem:[#allocation7 + $0xaf0] sm:$0xff]
    %v493 = vld [vmem:[#allocation7 + $0xaf8] sm:$0xff]
    %v494 = vld [vmem:[#allocation7 + $0xb00] sm:$0xff]
    %v495 = vld [vmem:[#allocation7 + $0xb08] sm:$0xff]
    %v496 = vld [vmem:[#allocation7 + $0xb10] sm:$0xff]
    %v497 = vld [vmem:[#allocation7 + $0xb18] sm:$0xff]
    %v498 = vld [vmem:[#allocation7 + $0xb20] sm:$0xff]
    %v499 = vld [vmem:[#allocation7 + $0xb28] sm:$0xff]
    %v500 = vld [vmem:[#allocation7 + $0xb30] sm:$0xff]
    %v501 = vld [vmem:[#allocation7 + $0xb38] sm:$0xff]
    %v502 = vld [vmem:[#allocation7 + $0xb40] sm:$0xff]
    %v503 = vld [vmem:[#allocation7 + $0xb48] sm:$0xff]
    %v504 = vld [vmem:[#allocation7 + $0xb50] sm:$0xff]
    %v505 = vld [vmem:[#allocation7 + $0xb58] sm:$0xff]
    %v506 = vld [vmem:[#allocation7 + $0xb60] sm:$0xff]
    %v507 = vld [vmem:[#allocation7 + $0xb68] sm:$0xff]
    %v508 = vld [vmem:[#allocation7 + $0xb70] sm:$0xff]
    %v509 = vld [vmem:[#allocation7 + $0xb78] sm:$0xff]
    %v510 = vld [vmem:[#allocation7 + $0xb80] sm:$0xff]
    %v511 = vld [vmem:[#allocation7 + $0xb88] sm:$0xff]
    %v512 = vld [vmem:[#allocation7 + $0xb90] sm:$0xff]
    %v513 = vld [vmem:[#allocation7 + $0xb98] sm:$0xff]
    %v514 = vld [vmem:[#allocation7 + $0xba0] sm:$0xff]
    %v515 = vld [vmem:[#allocation7 + $0xba8] sm:$0xff]
    %v516 = vld [vmem:[#allocation7 + $0xbb0] sm:$0xff]
    %v517 = vld [vmem:[#allocation7 + $0xbb8] sm:$0xff]
    %v518 = vld [vmem:[#allocation7 + $0xbc0] sm:$0xff]
    %v519 = vld [vmem:[#allocation7 + $0xbc8] sm:$0xff]
    %v520 = vld [vmem:[#allocation7 + $0xbd0] sm:$0xff]
    %v521 = vld [vmem:[#allocation7 + $0xbd8] sm:$0xff]
    %v522 = vld [vmem:[#allocation7 + $0xbe0] sm:$0xff]
    %v523 = vld [vmem:[#allocation7 + $0xbe8] sm:$0xff]
    %v524 = vld [vmem:[#allocation7 + $0xbf0] sm:$0xff]
    %v525 = vld [vmem:[#allocation7 + $0xbf8] sm:$0xff]
    %v526 = vld [vmem:[#allocation7 + $0xc00] sm:$0xff]
    %v527 = vld [vmem:[#allocation7 + $0xc08] sm:$0xff]
    %v528 = vld [vmem:[#allocation7 + $0xc10] sm:$0xff]
    %v529 = vld [vmem:[#allocation7 + $0xc18] sm:$0xff]
    %v530 = vld [vmem:[#allocation7 + $0xc20] sm:$0xff]
    %v531 = vld [vmem:[#allocation7 + $0xc28] sm:$0xff]
    %v532 = vld [vmem:[#allocation7 + $0xc30] sm:$0xff]
    %v533 = vld [vmem:[#allocation7 + $0xc38] sm:$0xff]
    %v534 = vld [vmem:[#allocation7 + $0xc40] sm:$0xff]
    %v535 = vld [vmem:[#allocation7 + $0xc48] sm:$0xff]
    %v536 = vld [vmem:[#allocation7 + $0xc50] sm:$0xff]
    %v537 = vld [vmem:[#allocation7 + $0xc58] sm:$0xff]
    %v538 = vld [vmem:[#allocation7 + $0xc60] sm:$0xff]
    %v539 = vld [vmem:[#allocation7 + $0xc68] sm:$0xff]
    %v540 = vld [vmem:[#allocation7 + $0xc70] sm:$0xff]
    %v541 = vld [vmem:[#allocation7 + $0xc78] sm:$0xff]
    %v542 = vld [vmem:[#allocation7 + $0xc80] sm:$0xff]
    %v543 = vld [vmem:[#allocation7 + $0xc88] sm:$0xff]
    %v544 = vld [vmem:[#allocation7 + $0xc90] sm:$0xff]
    %v545 = vld [vmem:[#allocation7 + $0xc98] sm:$0xff]
    %v546 = vld [vmem:[#allocation7 + $0xca0] sm:$0xff]
    %v547 = vld [vmem:[#allocation7 + $0xca8] sm:$0xff]
    %v548 = vld [vmem:[#allocation7 + $0xcb0] sm:$0xff]
    %v549 = vld [vmem:[#allocation7 + $0xcb8] sm:$0xff]
    %v550 = vld [vmem:[#allocation7 + $0xcc0] sm:$0xff]
    %v551 = vld [vmem:[#allocation7 + $0xcc8] sm:$0xff]
    %v552 = vld [vmem:[#allocation7 + $0xcd0] sm:$0xff]
    %v553 = vld [vmem:[#allocation7 + $0xcd8] sm:$0xff]
    %v554 = vld [vmem:[#allocation7 + $0xce0] sm:$0xff]
    %v555 = vld [vmem:[#allocation7 + $0xce8] sm:$0xff]
    %v556 = vld [vmem:[#allocation7 + $0xcf0] sm:$0xff]
    %v557 = vld [vmem:[#allocation7 + $0xcf8] sm:$0xff]
    %v558 = vld [vmem:[#allocation7 + $0xd00] sm:$0xff]
    %v559 = vld [vmem:[#allocation7 + $0xd08] sm:$0xff]
    %v560 = vld [vmem:[#allocation7 + $0xd10] sm:$0xff]
    %v561 = vld [vmem:[#allocation7 + $0xd18] sm:$0xff]
    %v562 = vld [vmem:[#allocation7 + $0xd20] sm:$0xff]
    %v563 = vld [vmem:[#allocation7 + $0xd28] sm:$0xff]
    %v564 = vld [vmem:[#allocation7 + $0xd30] sm:$0xff]
    %v565 = vld [vmem:[#allocation7 + $0xd38] sm:$0xff]
    %v566 = vld [vmem:[#allocation7 + $0xd40] sm:$0xff]
    %v567 = vld [vmem:[#allocation7 + $0xd48] sm:$0xff]
    %v568 = vld [vmem:[#allocation7 + $0xd50] sm:$0xff]
    %v569 = vld [vmem:[#allocation7 + $0xd58] sm:$0xff]
    %v570 = vld [vmem:[#allocation7 + $0xd60] sm:$0xff]
    %v571 = vld [vmem:[#allocation7 + $0xd68] sm:$0xff]
    %v572 = vld [vmem:[#allocation7 + $0xd70] sm:$0xff]
    %v573 = vld [vmem:[#allocation7 + $0xd78] sm:$0xff]
    %v574 = vld [vmem:[#allocation7 + $0xd80] sm:$0xff]
    %v575 = vld [vmem:[#allocation7 + $0xd88] sm:$0xff]
    %v576 = vld [vmem:[#allocation7 + $0xd90] sm:$0xff]
    %v577 = vld [vmem:[#allocation7 + $0xd98] sm:$0xff]
    %v578 = vld [vmem:[#allocation7 + $0xda0] sm:$0xff]
    %v579 = vld [vmem:[#allocation7 + $0xda8] sm:$0xff]
    %v580 = vld [vmem:[#allocation7 + $0xdb0] sm:$0xff]
    %v581 = vld [vmem:[#allocation7 + $0xdb8] sm:$0xff]
    %v582 = vld [vmem:[#allocation7 + $0xdc0] sm:$0xff]
    %v583 = vld [vmem:[#allocation7 + $0xdc8] sm:$0xff]
    %v584 = vld [vmem:[#allocation7 + $0xdd0] sm:$0xff]
    %v585 = vld [vmem:[#allocation7 + $0xdd8] sm:$0xff]
    %v586 = vld [vmem:[#allocation7 + $0xde0] sm:$0xff]
    %v587 = vld [vmem:[#allocation7 + $0xde8] sm:$0xff]
    %v588 = vld [vmem:[#allocation7 + $0xdf0] sm:$0xff]
    %v589 = vld [vmem:[#allocation7 + $0xdf8] sm:$0xff]
    %v590 = vld [vmem:[#allocation7 + $0xe00] sm:$0xff]
    %v591 = vld [vmem:[#allocation7 + $0xe08] sm:$0xff]
    %v592 = vld [vmem:[#allocation7 + $0xe10] sm:$0xff]
    %v593 = vld [vmem:[#allocation7 + $0xe18] sm:$0xff]
    %v594 = vld [vmem:[#allocation7 + $0xe20] sm:$0xff]
    %v595 = vld [vmem:[#allocation7 + $0xe28] sm:$0xff]
    %v596 = vld [vmem:[#allocation7 + $0xe30] sm:$0xff]
    %v597 = vld [vmem:[#allocation7 + $0xe38] sm:$0xff]
    %v598 = vld [vmem:[#allocation7 + $0xe40] sm:$0xff]
    %v599 = vld [vmem:[#allocation7 + $0xe48] sm:$0xff]
    %v600 = vld [vmem:[#allocation7 + $0xe50] sm:$0xff]
    %v601 = vld [vmem:[#allocation7 + $0xe58] sm:$0xff]
    %v602 = vld [vmem:[#allocation7 + $0xe60] sm:$0xff]
    %v603 = vld [vmem:[#allocation7 + $0xe68] sm:$0xff]
    %v604 = vld [vmem:[#allocation7 + $0xe70] sm:$0xff]
    %v605 = vld [vmem:[#allocation7 + $0xe78] sm:$0xff]
    %v606 = vld [vmem:[#allocation7 + $0xe80] sm:$0xff]
    %v607 = vld [vmem:[#allocation7 + $0xe88] sm:$0xff]
    %v608 = vld [vmem:[#allocation7 + $0xe90] sm:$0xff]
    %v609 = vld [vmem:[#allocation7 + $0xe98] sm:$0xff]
    %v610 = vld [vmem:[#allocation7 + $0xea0] sm:$0xff]
    %v611 = vld [vmem:[#allocation7 + $0xea8] sm:$0xff]
    %v612 = vld [vmem:[#allocation7 + $0xeb0] sm:$0xff]
    %v613 = vld [vmem:[#allocation7 + $0xeb8] sm:$0xff]
    %v614 = vld [vmem:[#allocation7 + $0xec0] sm:$0xff]
    %v615 = vld [vmem:[#allocation7 + $0xec8] sm:$0xff]
    %v616 = vld [vmem:[#allocation7 + $0xed0] sm:$0xff]
    %v617 = vld [vmem:[#allocation7 + $0xed8] sm:$0xff]
    %v618 = vld [vmem:[#allocation7 + $0xee0] sm:$0xff]
    %v619 = vld [vmem:[#allocation7 + $0xee8] sm:$0xff]
    %v620 = vld [vmem:[#allocation7 + $0xef0] sm:$0xff]
    %v621 = vld [vmem:[#allocation7 + $0xef8] sm:$0xff]
    %v622 = vld [vmem:[#allocation7 + $0xf00] sm:$0xff]
    %v623 = vld [vmem:[#allocation7 + $0xf08] sm:$0xff]
    %v624 = vld [vmem:[#allocation7 + $0xf10] sm:$0xff]
    %v625 = vld [vmem:[#allocation7 + $0xf18] sm:$0xff]
    %v626 = vld [vmem:[#allocation7 + $0xf20] sm:$0xff]
    %v627 = vld [vmem:[#allocation7 + $0xf28] sm:$0xff]
    %v628 = vld [vmem:[#allocation7 + $0xf30] sm:$0xff]
    %v629 = vld [vmem:[#allocation7 + $0xf38] sm:$0xff]
    %v630 = vld [vmem:[#allocation7 + $0xf40] sm:$0xff]
    %v631 = vld [vmem:[#allocation7 + $0xf48] sm:$0xff]
    %v632 = vld [vmem:[#allocation7 + $0xf50] sm:$0xff]
    %v633 = vld [vmem:[#allocation7 + $0xf58] sm:$0xff]
    %v634 = vld [vmem:[#allocation7 + $0xf60] sm:$0xff]
    %v635 = vld [vmem:[#allocation7 + $0xf68] sm:$0xff]
    %v636 = vld [vmem:[#allocation7 + $0xf70] sm:$0xff]
    %v637 = vld [vmem:[#allocation7 + $0xf78] sm:$0xff]
    %v638 = vld [vmem:[#allocation7 + $0xf80] sm:$0xff]
    %v639 = vld [vmem:[#allocation7 + $0xf88] sm:$0xff]
    %v640 = vld [vmem:[#allocation7 + $0xf90] sm:$0xff]
    %v641 = vld [vmem:[#allocation7 + $0xf98] sm:$0xff]
    %v642 = vld [vmem:[#allocation7 + $0xfa0] sm:$0xff]
    %v643 = vld [vmem:[#allocation7 + $0xfa8] sm:$0xff]
    %v644 = vld [vmem:[#allocation7 + $0xfb0] sm:$0xff]
    %v645 = vld [vmem:[#allocation7 + $0xfb8] sm:$0xff]
    %v646 = vld [vmem:[#allocation7 + $0xfc0] sm:$0xff]
    %v647 = vld [vmem:[#allocation7 + $0xfc8] sm:$0xff]
    %v648 = vld [vmem:[#allocation7 + $0xfd0] sm:$0xff]
    %v649 = vld [vmem:[#allocation7 + $0xfd8] sm:$0xff]
    %v650 = vld [vmem:[#allocation7 + $0xfe0] sm:$0xff]
    %v651 = vld [vmem:[#allocation7 + $0xfe8] sm:$0xff]
    %v652 = vld [vmem:[#allocation7 + $0xff0] sm:$0xff]
    %v653 = vld [vmem:[#allocation7 + $0xff8] sm:$0xff]
    %v654 = vld [vmem:[#allocation7 + $0x1000] sm:$0xff]
    %v655 = vld [vmem:[#allocation7 + $0x1008] sm:$0xff]
    %v656 = vld [vmem:[#allocation7 + $0x1010] sm:$0xff]
    %v657 = vld [vmem:[#allocation7 + $0x1018] sm:$0xff]
    %v658 = vld [vmem:[#allocation7 + $0x1020] sm:$0xff]
    %v659 = vld [vmem:[#allocation7 + $0x1028] sm:$0xff]
    %v660 = vld [vmem:[#allocation7 + $0x1030] sm:$0xff]
    %v661 = vld [vmem:[#allocation7 + $0x1038] sm:$0xff]
    %v662 = vld [vmem:[#allocation7 + $0x1040] sm:$0xff]
    %v663 = vld [vmem:[#allocation7 + $0x1048] sm:$0xff]
    %v664 = vld [vmem:[#allocation7 + $0x1050] sm:$0xff]
    %v665 = vld [vmem:[#allocation7 + $0x1058] sm:$0xff]
    %v666 = vld [vmem:[#allocation7 + $0x1060] sm:$0xff]
    %v667 = vld [vmem:[#allocation7 + $0x1068] sm:$0xff]
    %v668 = vld [vmem:[#allocation7 + $0x1070] sm:$0xff]
    %v669 = vld [vmem:[#allocation7 + $0x1078] sm:$0xff]
    %v670 = vld [vmem:[#allocation7 + $0x1080] sm:$0xff]
    %v671 = vld [vmem:[#allocation7 + $0x1088] sm:$0xff]
    %v672 = vld [vmem:[#allocation7 + $0x1090] sm:$0xff]
    %v673 = vld [vmem:[#allocation7 + $0x1098] sm:$0xff]
    %v674 = vld [vmem:[#allocation7 + $0x10a0] sm:$0xff]
    %v675 = vld [vmem:[#allocation7 + $0x10a8] sm:$0xff]
    %v676 = vld [vmem:[#allocation7 + $0x10b0] sm:$0xff]
    %v677 = vld [vmem:[#allocation7 + $0x10b8] sm:$0xff]
    %v678 = vld [vmem:[#allocation7 + $0x10c0] sm:$0xff]
    %v679 = vld [vmem:[#allocation7 + $0x10c8] sm:$0xff]
    %v680 = vld [vmem:[#allocation7 + $0x10d0] sm:$0xff]
    %v681 = vld [vmem:[#allocation7 + $0x10d8] sm:$0xff]
    %v682 = vld [vmem:[#allocation7 + $0x10e0] sm:$0xff]
    %v683 = vld [vmem:[#allocation7 + $0x10e8] sm:$0xff]
    %v684 = vld [vmem:[#allocation7 + $0x10f0] sm:$0xff]
    %v685 = vld [vmem:[#allocation7 + $0x10f8] sm:$0xff]
    %v686 = vld [vmem:[#allocation7 + $0x1100] sm:$0xff]
    %v687 = vld [vmem:[#allocation7 + $0x1108] sm:$0xff]
    %v688 = vld [vmem:[#allocation7 + $0x1110] sm:$0xff]
    %v689 = vld [vmem:[#allocation7 + $0x1118] sm:$0xff]
    %v690 = vld [vmem:[#allocation7 + $0x1120] sm:$0xff]
    %v691 = vld [vmem:[#allocation7 + $0x1128] sm:$0xff]
    %v692 = vld [vmem:[#allocation7 + $0x1130] sm:$0xff]
    %v693 = vld [vmem:[#allocation7 + $0x1138] sm:$0xff]
    %v694 = vld [vmem:[#allocation7 + $0x1140] sm:$0xff]
    %v695 = vld [vmem:[#allocation7 + $0x1148] sm:$0xff]
    %v696 = vld [vmem:[#allocation7 + $0x1150] sm:$0xff]
    %v697 = vld [vmem:[#allocation7 + $0x1158] sm:$0xff]
    %v698 = vld [vmem:[#allocation7 + $0x1160] sm:$0xff]
    %v699 = vld [vmem:[#allocation7 + $0x1168] sm:$0xff]
    %v700 = vld [vmem:[#allocation7 + $0x1170] sm:$0xff]
    %v701 = vld [vmem:[#allocation7 + $0x1178] sm:$0xff]
    %v702 = vld [vmem:[#allocation7 + $0x1180] sm:$0xff]
    %v703 = vld [vmem:[#allocation7 + $0x1188] sm:$0xff]
    %v704 = vld [vmem:[#allocation7 + $0x1190] sm:$0xff]
    %v705 = vld [vmem:[#allocation7 + $0x1198] sm:$0xff]
    %v706 = vld [vmem:[#allocation7 + $0x11a0] sm:$0xff]
    %v707 = vld [vmem:[#allocation7 + $0x11a8] sm:$0xff]
    %v708 = vld [vmem:[#allocation7 + $0x11b0] sm:$0xff]
    %v709 = vld [vmem:[#allocation7 + $0x11b8] sm:$0xff]
    %v710 = vld [vmem:[#allocation7 + $0x11c0] sm:$0xff]
    %v711 = vld [vmem:[#allocation7 + $0x11c8] sm:$0xff]
    %v712 = vld [vmem:[#allocation7 + $0x11d0] sm:$0xff]
    %v713 = vld [vmem:[#allocation7 + $0x11d8] sm:$0xff]
    %v714 = vld [vmem:[#allocation7 + $0x11e0] sm:$0xff]
    %v715 = vld [vmem:[#allocation7 + $0x11e8] sm:$0xff]
    %v716 = vld [vmem:[#allocation7 + $0x11f0] sm:$0xff]
    %v717 = vld [vmem:[#allocation7 + $0x11f8] sm:$0xff]
    %v718 = vld [vmem:[#allocation7 + $0x1200] sm:$0xff]
    %v719 = vld [vmem:[#allocation7 + $0x1208] sm:$0xff]
    %v720 = vld [vmem:[#allocation7 + $0x1210] sm:$0xff]
    %v721 = vld [vmem:[#allocation7 + $0x1218] sm:$0xff]
    %v722 = vld [vmem:[#allocation7 + $0x1220] sm:$0xff]
    %v723 = vld [vmem:[#allocation7 + $0x1228] sm:$0xff]
    %v724 = vld [vmem:[#allocation7 + $0x1230] sm:$0xff]
    %v725 = vld [vmem:[#allocation7 + $0x1238] sm:$0xff]
    %v726 = vld [vmem:[#allocation7 + $0x1240] sm:$0xff]
    %v727 = vld [vmem:[#allocation7 + $0x1248] sm:$0xff]
    %v728 = vld [vmem:[#allocation7 + $0x1250] sm:$0xff]
    %v729 = vld [vmem:[#allocation7 + $0x1258] sm:$0xff]
    %v730 = vld [vmem:[#allocation7 + $0x1260] sm:$0xff]
    %v731 = vld [vmem:[#allocation7 + $0x1268] sm:$0xff]
    %v732 = vld [vmem:[#allocation7 + $0x1270] sm:$0xff]
    %v733 = vld [vmem:[#allocation7 + $0x1278] sm:$0xff]
    %v734 = vld [vmem:[#allocation7 + $0x1280] sm:$0xff]
    %v735 = vld [vmem:[#allocation7 + $0x1288] sm:$0xff]
    %v736 = vld [vmem:[#allocation7 + $0x1290] sm:$0xff]
    %v737 = vld [vmem:[#allocation7 + $0x1298] sm:$0xff]
    %v738 = vld [vmem:[#allocation7 + $0x12a0] sm:$0xff]
    %v739 = vld [vmem:[#allocation7 + $0x12a8] sm:$0xff]
    %v740 = vld [vmem:[#allocation7 + $0x12b0] sm:$0xff]
    %v741 = vld [vmem:[#allocation7 + $0x12b8] sm:$0xff]
    %v742 = vld [vmem:[#allocation7 + $0x12c0] sm:$0xff]
    %v743 = vld [vmem:[#allocation7 + $0x12c8] sm:$0xff]
    %v744 = vld [vmem:[#allocation7 + $0x12d0] sm:$0xff]
    %v745 = vld [vmem:[#allocation7 + $0x12d8] sm:$0xff]
    %v746 = vld [vmem:[#allocation7 + $0x12e0] sm:$0xff]
    %v747 = vld [vmem:[#allocation7 + $0x12e8] sm:$0xff]
    %v748 = vld [vmem:[#allocation7 + $0x12f0] sm:$0xff]
    %v749 = vld [vmem:[#allocation7 + $0x12f8] sm:$0xff]
    %v750 = vld [vmem:[#allocation7 + $0x1300] sm:$0xff]
    %v751 = vld [vmem:[#allocation7 + $0x1308] sm:$0xff]
    %v752 = vld [vmem:[#allocation7 + $0x1310] sm:$0xff]
    %v753 = vld [vmem:[#allocation7 + $0x1318] sm:$0xff]
    %v754 = vld [vmem:[#allocation7 + $0x1320] sm:$0xff]
    %v755 = vld [vmem:[#allocation7 + $0x1328] sm:$0xff]
    %v756 = vld [vmem:[#allocation7 + $0x1330] sm:$0xff]
    %v757 = vld [vmem:[#allocation7 + $0x1338] sm:$0xff]
    %v758 = vld [vmem:[#allocation7 + $0x1340] sm:$0xff]
    %v759 = vld [vmem:[#allocation7 + $0x1348] sm:$0xff]
    %v760 = vld [vmem:[#allocation7 + $0x1350] sm:$0xff]
    %v761 = vld [vmem:[#allocation7 + $0x1358] sm:$0xff]
    %v762 = vld [vmem:[#allocation7 + $0x1360] sm:$0xff]
    %v763 = vld [vmem:[#allocation7 + $0x1368] sm:$0xff]
    %v764 = vld [vmem:[#allocation7 + $0x1370] sm:$0xff]
    %v765 = vld [vmem:[#allocation7 + $0x1378] sm:$0xff]
    %v766 = vld [vmem:[#allocation7 + $0x1380] sm:$0xff]
    %v767 = vld [vmem:[#allocation7 + $0x1388] sm:$0xff]
    %v768 = vld [vmem:[#allocation7 + $0x1390] sm:$0xff]
    %v769 = vld [vmem:[#allocation7 + $0x1398] sm:$0xff]
    %v770 = vld [vmem:[#allocation7 + $0x13a0] sm:$0xff]
    %v771 = vld [vmem:[#allocation7 + $0x13a8] sm:$0xff]
    %v772 = vld [vmem:[#allocation7 + $0x13b0] sm:$0xff]
    %v773 = vld [vmem:[#allocation7 + $0x13b8] sm:$0xff]
    %v774 = vld [vmem:[#allocation7 + $0x13c0] sm:$0xff]
    %v775 = vld [vmem:[#allocation7 + $0x13c8] sm:$0xff]
    %v776 = vld [vmem:[#allocation7 + $0x13d0] sm:$0xff]
    %v777 = vld [vmem:[#allocation7 + $0x13d8] sm:$0xff]
    %v778 = vld [vmem:[#allocation7 + $0x13e0] sm:$0xff]
    %v779 = vld [vmem:[#allocation7 + $0x13e8] sm:$0xff]
    %v780 = vld [vmem:[#allocation7 + $0x13f0] sm:$0xff]
    %v781 = vld [vmem:[#allocation7 + $0x13f8] sm:$0xff]
    %v782 = vld [vmem:[#allocation7 + $0x1400] sm:$0xff]
    %v783 = vld [vmem:[#allocation7 + $0x1408] sm:$0xff]
    %v784 = vld [vmem:[#allocation7 + $0x1410] sm:$0xff]
    %v785 = vld [vmem:[#allocation7 + $0x1418] sm:$0xff]
    %v786 = vld [vmem:[#allocation7 + $0x1420] sm:$0xff]
    %v787 = vld [vmem:[#allocation7 + $0x1428] sm:$0xff]
    %v788 = vld [vmem:[#allocation7 + $0x1430] sm:$0xff]
    %v789 = vld [vmem:[#allocation7 + $0x1438] sm:$0xff]
    %v790 = vld [vmem:[#allocation7 + $0x1440] sm:$0xff]
    %v791 = vld [vmem:[#allocation7 + $0x1448] sm:$0xff]
    %v792 = vld [vmem:[#allocation7 + $0x1450] sm:$0xff]
    %v793 = vld [vmem:[#allocation7 + $0x1458] sm:$0xff]
    %v794 = vld [vmem:[#allocation7 + $0x1460] sm:$0xff]
    %v795 = vld [vmem:[#allocation7 + $0x1468] sm:$0xff]
    %v796 = vld [vmem:[#allocation7 + $0x1470] sm:$0xff]
    %v797 = vld [vmem:[#allocation7 + $0x1478] sm:$0xff]
    %v798 = vld [vmem:[#allocation7 + $0x1480] sm:$0xff]
    %v799 = vld [vmem:[#allocation7 + $0x1488] sm:$0xff]
    %v800 = vld [vmem:[#allocation7 + $0x1490] sm:$0xff]
    %v801 = vld [vmem:[#allocation7 + $0x1498] sm:$0xff]
    %v802 = vld [vmem:[#allocation7 + $0x14a0] sm:$0xff]
    %v803 = vld [vmem:[#allocation7 + $0x14a8] sm:$0xff]
    %v804 = vld [vmem:[#allocation7 + $0x14b0] sm:$0xff]
    %v805 = vld [vmem:[#allocation7 + $0x14b8] sm:$0xff]
    %v806 = vld [vmem:[#allocation7 + $0x14c0] sm:$0xff]
    %v807 = vld [vmem:[#allocation7 + $0x14c8] sm:$0xff]
    %v808 = vld [vmem:[#allocation7 + $0x14d0] sm:$0xff]
    %v809 = vld [vmem:[#allocation7 + $0x14d8] sm:$0xff]
    %v810 = vld [vmem:[#allocation7 + $0x14e0] sm:$0xff]
    %v811 = vld [vmem:[#allocation7 + $0x14e8] sm:$0xff]
    %v812 = vld [vmem:[#allocation7 + $0x14f0] sm:$0xff]
    %v813 = vld [vmem:[#allocation7 + $0x14f8] sm:$0xff]
    %v814 = vld [vmem:[#allocation7 + $0x1500] sm:$0xff]
    %v815 = vld [vmem:[#allocation7 + $0x1508] sm:$0xff]
    %v816 = vld [vmem:[#allocation7 + $0x1510] sm:$0xff]
    %v817 = vld [vmem:[#allocation7 + $0x1518] sm:$0xff]
    %v818 = vld [vmem:[#allocation7 + $0x1520] sm:$0xff]
    %v819 = vld [vmem:[#allocation7 + $0x1528] sm:$0xff]
    %v820 = vld [vmem:[#allocation7 + $0x1530] sm:$0xff]
    %v821 = vld [vmem:[#allocation7 + $0x1538] sm:$0xff]
    %v822 = vld [vmem:[#allocation7 + $0x1540] sm:$0xff]
    %v823 = vld [vmem:[#allocation7 + $0x1548] sm:$0xff]
    %v824 = vld [vmem:[#allocation7 + $0x1550] sm:$0xff]
    %v825 = vld [vmem:[#allocation7 + $0x1558] sm:$0xff]
    %v826 = vld [vmem:[#allocation7 + $0x1560] sm:$0xff]
    %v827 = vld [vmem:[#allocation7 + $0x1568] sm:$0xff]
    %v828 = vld [vmem:[#allocation7 + $0x1570] sm:$0xff]
    %v829 = vld [vmem:[#allocation7 + $0x1578] sm:$0xff]
    %v830 = vld [vmem:[#allocation7 + $0x1580] sm:$0xff]
    %v831 = vld [vmem:[#allocation7 + $0x1588] sm:$0xff]
    %v832 = vld [vmem:[#allocation7 + $0x1590] sm:$0xff]
    %v833 = vld [vmem:[#allocation7 + $0x1598] sm:$0xff]
    %v834 = vld [vmem:[#allocation7 + $0x15a0] sm:$0xff]
    %v835 = vld [vmem:[#allocation7 + $0x15a8] sm:$0xff]
    %v836 = vld [vmem:[#allocation7 + $0x15b0] sm:$0xff]
    %v837 = vld [vmem:[#allocation7 + $0x15b8] sm:$0xff]
    %v838 = vld [vmem:[#allocation7 + $0x15c0] sm:$0xff]
    %v839 = vld [vmem:[#allocation7 + $0x15c8] sm:$0xff]
    %v840 = vld [vmem:[#allocation7 + $0x15d0] sm:$0xff]
    %v841 = vld [vmem:[#allocation7 + $0x15d8] sm:$0xff]
    %v842 = vld [vmem:[#allocation7 + $0x15e0] sm:$0xff]
    %v843 = vld [vmem:[#allocation7 + $0x15e8] sm:$0xff]
    %v844 = vld [vmem:[#allocation7 + $0x15f0] sm:$0xff]
    %v845 = vld [vmem:[#allocation7 + $0x15f8] sm:$0xff]
    %v846 = vld [vmem:[#allocation7 + $0x1600] sm:$0xff]
    %v847 = vld [vmem:[#allocation7 + $0x1608] sm:$0xff]
    %v848 = vld [vmem:[#allocation7 + $0x1610] sm:$0xff]
    %v849 = vld [vmem:[#allocation7 + $0x1618] sm:$0xff]
    %v850 = vld [vmem:[#allocation7 + $0x1620] sm:$0xff]
    %v851 = vld [vmem:[#allocation7 + $0x1628] sm:$0xff]
    %v852 = vld [vmem:[#allocation7 + $0x1630] sm:$0xff]
    %v853 = vld [vmem:[#allocation7 + $0x1638] sm:$0xff]
    %v854 = vld [vmem:[#allocation7 + $0x1640] sm:$0xff]
    %v855 = vld [vmem:[#allocation7 + $0x1648] sm:$0xff]
    %v856 = vld [vmem:[#allocation7 + $0x1650] sm:$0xff]
    %v857 = vld [vmem:[#allocation7 + $0x1658] sm:$0xff]
    %v858 = vld [vmem:[#allocation7 + $0x1660] sm:$0xff]
    %v859 = vld [vmem:[#allocation7 + $0x1668] sm:$0xff]
    %v860 = vld [vmem:[#allocation7 + $0x1670] sm:$0xff]
    %v861 = vld [vmem:[#allocation7 + $0x1678] sm:$0xff]
    %v862 = vld [vmem:[#allocation7 + $0x1680] sm:$0xff]
    %v863 = vld [vmem:[#allocation7 + $0x1688] sm:$0xff]
    %v864 = vld [vmem:[#allocation7 + $0x1690] sm:$0xff]
    %v865 = vld [vmem:[#allocation7 + $0x1698] sm:$0xff]
    %v866 = vld [vmem:[#allocation7 + $0x16a0] sm:$0xff]
    %v867 = vld [vmem:[#allocation7 + $0x16a8] sm:$0xff]
    %v868 = vld [vmem:[#allocation7 + $0x16b0] sm:$0xff]
    %v869 = vld [vmem:[#allocation7 + $0x16b8] sm:$0xff]
    %v870 = vld [vmem:[#allocation7 + $0x16c0] sm:$0xff]
    %v871 = vld [vmem:[#allocation7 + $0x16c8] sm:$0xff]
    %v872 = vld [vmem:[#allocation7 + $0x16d0] sm:$0xff]
    %v873 = vld [vmem:[#allocation7 + $0x16d8] sm:$0xff]
    %v874 = vld [vmem:[#allocation7 + $0x16e0] sm:$0xff]
    %v875 = vld [vmem:[#allocation7 + $0x16e8] sm:$0xff]
    %v876 = vld [vmem:[#allocation7 + $0x16f0] sm:$0xff]
    %v877 = vld [vmem:[#allocation7 + $0x16f8] sm:$0xff]
    %v878 = vld [vmem:[#allocation7 + $0x1700] sm:$0xff]
    %v879 = vld [vmem:[#allocation7 + $0x1708] sm:$0xff]
    %v880 = vld [vmem:[#allocation7 + $0x1710] sm:$0xff]
    %v881 = vld [vmem:[#allocation7 + $0x1718] sm:$0xff]
    %v882 = vld [vmem:[#allocation7 + $0x1720] sm:$0xff]
    %v883 = vld [vmem:[#allocation7 + $0x1728] sm:$0xff]
    %v884 = vld [vmem:[#allocation7 + $0x1730] sm:$0xff]
    %v885 = vld [vmem:[#allocation7 + $0x1738] sm:$0xff]
    %v886 = vld [vmem:[#allocation7 + $0x1740] sm:$0xff]
    %v887 = vld [vmem:[#allocation7 + $0x1748] sm:$0xff]
    %v888 = vld [vmem:[#allocation7 + $0x1750] sm:$0xff]
    %v889 = vld [vmem:[#allocation7 + $0x1758] sm:$0xff]
    %v890 = vld [vmem:[#allocation7 + $0x1760] sm:$0xff]
    %v891 = vld [vmem:[#allocation7 + $0x1768] sm:$0xff]
    %v892 = vld [vmem:[#allocation7 + $0x1770] sm:$0xff]
    %v893 = vld [vmem:[#allocation7 + $0x1778] sm:$0xff]
    %v894 = vld [vmem:[#allocation7 + $0x1780] sm:$0xff]
    %v895 = vld [vmem:[#allocation7 + $0x1788] sm:$0xff]
    %v896 = vld [vmem:[#allocation7 + $0x1790] sm:$0xff]
    %v897 = vld [vmem:[#allocation7 + $0x1798] sm:$0xff]
    %v898 = vld [vmem:[#allocation7 + $0x17a0] sm:$0xff]
    %v899 = vld [vmem:[#allocation7 + $0x17a8] sm:$0xff]
    %v900 = vld [vmem:[#allocation7 + $0x17b0] sm:$0xff]
    %v901 = vld [vmem:[#allocation7 + $0x17b8] sm:$0xff]
    %v902 = vld [vmem:[#allocation7 + $0x17c0] sm:$0xff]
    %v903 = vld [vmem:[#allocation7 + $0x17c8] sm:$0xff]
    %v904 = vld [vmem:[#allocation7 + $0x17d0] sm:$0xff]
    %v905 = vld [vmem:[#allocation7 + $0x17d8] sm:$0xff]
    %v906 = vld [vmem:[#allocation7 + $0x17e0] sm:$0xff]
    %v907 = vld [vmem:[#allocation7 + $0x17e8] sm:$0xff]
    %v908 = vld [vmem:[#allocation7 + $0x17f0] sm:$0xff]
    %v909 = vld [vmem:[#allocation7 + $0x17f8] sm:$0xff]
    %v916 = vunpack.c.l.b16 %v136
    %v917 = vunpack.c.h.b16 %v136
    %v918 = vunpack.c.l.b16 %v137
    %v919 = vunpack.c.h.b16 %v137
    %v920 = vunpack.c.l.b16 %v138
    %v921 = vunpack.c.h.b16 %v138
    %v922 = vunpack.c.l.b16 %v139
    %v923 = vunpack.c.h.b16 %v139
    %v924 = vunpack.c.l.b16 %v140
    %v925 = vunpack.c.h.b16 %v140
    %v926 = vunpack.c.l.b16 %v141
    %v927 = vunpack.c.h.b16 %v141
    %v928 = vpack.c.b16 %v922, %v916
    %v929 = vpack.c.b16 %v923, %v917
    %v930 = vpack.c.b16 %v924, %v918
    %v931 = vpack.c.b16 %v925, %v919
    %v932 = vpack.c.b16 %v926, %v920
    %v933 = vpack.c.b16 %v927, %v921
    %v1708 = vunpack.c.l.b16 %v142
    %v1709 = vunpack.c.h.b16 %v142
    %v1710 = vunpack.c.l.b16 %v143
    %v1711 = vunpack.c.h.b16 %v143
    %v1712 = vunpack.c.l.b16 %v144
    %v1713 = vunpack.c.h.b16 %v144
    %v1714 = vunpack.c.l.b16 %v145
    %v1715 = vunpack.c.h.b16 %v145
    %v1716 = vunpack.c.l.b16 %v146
    %v1717 = vunpack.c.h.b16 %v146
    %v1718 = vunpack.c.l.b16 %v147
    %v1719 = vunpack.c.h.b16 %v147
    %v1720 = vunpack.c.l.b16 %v148
    %v1721 = vunpack.c.h.b16 %v148
    %v1722 = vunpack.c.l.b16 %v149
    %v1723 = vunpack.c.h.b16 %v149
    %v1724 = vunpack.c.l.b16 %v150
    %v1725 = vunpack.c.h.b16 %v150
    %v1726 = vunpack.c.l.b16 %v151
    %v1727 = vunpack.c.h.b16 %v151
    %v1728 = vunpack.c.l.b16 %v152
    %v1729 = vunpack.c.h.b16 %v152
    %v1730 = vunpack.c.l.b16 %v153
    %v1731 = vunpack.c.h.b16 %v153
    %v1732 = vunpack.c.l.b16 %v154
    %v1733 = vunpack.c.h.b16 %v154
    %v1734 = vunpack.c.l.b16 %v155
    %v1735 = vunpack.c.h.b16 %v155
    %v1736 = vunpack.c.l.b16 %v156
    %v1737 = vunpack.c.h.b16 %v156
    %v1738 = vunpack.c.l.b16 %v157
    %v1739 = vunpack.c.h.b16 %v157
    %v1740 = vunpack.c.l.b16 %v158
    %v1741 = vunpack.c.h.b16 %v158
    %v1742 = vunpack.c.l.b16 %v159
    %v1743 = vunpack.c.h.b16 %v159
    %v1744 = vunpack.c.l.b16 %v160
    %v1745 = vunpack.c.h.b16 %v160
    %v1746 = vunpack.c.l.b16 %v161
    %v1747 = vunpack.c.h.b16 %v161
    %v1748 = vunpack.c.l.b16 %v162
    %v1749 = vunpack.c.h.b16 %v162
    %v1750 = vunpack.c.l.b16 %v163
    %v1751 = vunpack.c.h.b16 %v163
    %v1752 = vunpack.c.l.b16 %v164
    %v1753 = vunpack.c.h.b16 %v164
    %v1754 = vunpack.c.l.b16 %v165
    %v1755 = vunpack.c.h.b16 %v165
    %v1756 = vunpack.c.l.b16 %v166
    %v1757 = vunpack.c.h.b16 %v166
    %v1758 = vunpack.c.l.b16 %v167
    %v1759 = vunpack.c.h.b16 %v167
    %v1760 = vunpack.c.l.b16 %v168
    %v1761 = vunpack.c.h.b16 %v168
    %v1762 = vunpack.c.l.b16 %v169
    %v1763 = vunpack.c.h.b16 %v169
    %v1764 = vunpack.c.l.b16 %v170
    %v1765 = vunpack.c.h.b16 %v170
    %v1766 = vunpack.c.l.b16 %v171
    %v1767 = vunpack.c.h.b16 %v171
    %v1768 = vunpack.c.l.b16 %v172
    %v1769 = vunpack.c.h.b16 %v172
    %v1770 = vunpack.c.l.b16 %v173
    %v1771 = vunpack.c.h.b16 %v173
    %v1772 = vunpack.c.l.b16 %v174
    %v1773 = vunpack.c.h.b16 %v174
    %v1774 = vunpack.c.l.b16 %v175
    %v1775 = vunpack.c.h.b16 %v175
    %v1776 = vunpack.c.l.b16 %v176
    %v1777 = vunpack.c.h.b16 %v176
    %v1778 = vunpack.c.l.b16 %v177
    %v1779 = vunpack.c.h.b16 %v177
    %v1780 = vunpack.c.l.b16 %v178
    %v1781 = vunpack.c.h.b16 %v178
    %v1782 = vunpack.c.l.b16 %v179
    %v1783 = vunpack.c.h.b16 %v179
    %v1784 = vunpack.c.l.b16 %v180
    %v1785 = vunpack.c.h.b16 %v180
    %v1786 = vunpack.c.l.b16 %v181
    %v1787 = vunpack.c.h.b16 %v181
    %v1788 = vunpack.c.l.b16 %v182
    %v1789 = vunpack.c.h.b16 %v182
    %v1790 = vunpack.c.l.b16 %v183
    %v1791 = vunpack.c.h.b16 %v183
    %v1792 = vunpack.c.l.b16 %v184
    %v1793 = vunpack.c.h.b16 %v184
    %v1794 = vunpack.c.l.b16 %v185
    %v1795 = vunpack.c.h.b16 %v185
    %v1796 = vunpack.c.l.b16 %v186
    %v1797 = vunpack.c.h.b16 %v186
    %v1798 = vunpack.c.l.b16 %v187
    %v1799 = vunpack.c.h.b16 %v187
    %v1800 = vunpack.c.l.b16 %v188
    %v1801 = vunpack.c.h.b16 %v188
    %v1802 = vunpack.c.l.b16 %v189
    %v1803 = vunpack.c.h.b16 %v189
    %v1804 = vunpack.c.l.b16 %v190
    %v1805 = vunpack.c.h.b16 %v190
    %v1806 = vunpack.c.l.b16 %v191
    %v1807 = vunpack.c.h.b16 %v191
    %v1808 = vunpack.c.l.b16 %v192
    %v1809 = vunpack.c.h.b16 %v192
    %v1810 = vunpack.c.l.b16 %v193
    %v1811 = vunpack.c.h.b16 %v193
    %v1812 = vunpack.c.l.b16 %v194
    %v1813 = vunpack.c.h.b16 %v194
    %v1814 = vunpack.c.l.b16 %v195
    %v1815 = vunpack.c.h.b16 %v195
    %v1816 = vunpack.c.l.b16 %v196
    %v1817 = vunpack.c.h.b16 %v196
    %v1818 = vunpack.c.l.b16 %v197
    %v1819 = vunpack.c.h.b16 %v197
    %v1820 = vunpack.c.l.b16 %v198
    %v1821 = vunpack.c.h.b16 %v198
    %v1822 = vunpack.c.l.b16 %v199
    %v1823 = vunpack.c.h.b16 %v199
    %v1824 = vunpack.c.l.b16 %v200
    %v1825 = vunpack.c.h.b16 %v200
    %v1826 = vunpack.c.l.b16 %v201
    %v1827 = vunpack.c.h.b16 %v201
    %v1828 = vunpack.c.l.b16 %v202
    %v1829 = vunpack.c.h.b16 %v202
    %v1830 = vunpack.c.l.b16 %v203
    %v1831 = vunpack.c.h.b16 %v203
    %v1832 = vunpack.c.l.b16 %v204
    %v1833 = vunpack.c.h.b16 %v204
    %v1834 = vunpack.c.l.b16 %v205
    %v1835 = vunpack.c.h.b16 %v205
    %v1836 = vunpack.c.l.b16 %v206
    %v1837 = vunpack.c.h.b16 %v206
    %v1838 = vunpack.c.l.b16 %v207
    %v1839 = vunpack.c.h.b16 %v207
    %v1840 = vunpack.c.l.b16 %v208
    %v1841 = vunpack.c.h.b16 %v208
    %v1842 = vunpack.c.l.b16 %v209
    %v1843 = vunpack.c.h.b16 %v209
    %v1844 = vunpack.c.l.b16 %v210
    %v1845 = vunpack.c.h.b16 %v210
    %v1846 = vunpack.c.l.b16 %v211
    %v1847 = vunpack.c.h.b16 %v211
    %v1848 = vunpack.c.l.b16 %v212
    %v1849 = vunpack.c.h.b16 %v212
    %v1850 = vunpack.c.l.b16 %v213
    %v1851 = vunpack.c.h.b16 %v213
    %v1852 = vunpack.c.l.b16 %v214
    %v1853 = vunpack.c.h.b16 %v214
    %v1854 = vunpack.c.l.b16 %v215
    %v1855 = vunpack.c.h.b16 %v215
    %v1856 = vunpack.c.l.b16 %v216
    %v1857 = vunpack.c.h.b16 %v216
    %v1858 = vunpack.c.l.b16 %v217
    %v1859 = vunpack.c.h.b16 %v217
    %v1860 = vunpack.c.l.b16 %v218
    %v1861 = vunpack.c.h.b16 %v218
    %v1862 = vunpack.c.l.b16 %v219
    %v1863 = vunpack.c.h.b16 %v219
    %v1864 = vunpack.c.l.b16 %v220
    %v1865 = vunpack.c.h.b16 %v220
    %v1866 = vunpack.c.l.b16 %v221
    %v1867 = vunpack.c.h.b16 %v221
    %v1868 = vunpack.c.l.b16 %v222
    %v1869 = vunpack.c.h.b16 %v222
    %v1870 = vunpack.c.l.b16 %v223
    %v1871 = vunpack.c.h.b16 %v223
    %v1872 = vunpack.c.l.b16 %v224
    %v1873 = vunpack.c.h.b16 %v224
    %v1874 = vunpack.c.l.b16 %v225
    %v1875 = vunpack.c.h.b16 %v225
    %v1876 = vunpack.c.l.b16 %v226
    %v1877 = vunpack.c.h.b16 %v226
    %v1878 = vunpack.c.l.b16 %v227
    %v1879 = vunpack.c.h.b16 %v227
    %v1880 = vunpack.c.l.b16 %v228
    %v1881 = vunpack.c.h.b16 %v228
    %v1882 = vunpack.c.l.b16 %v229
    %v1883 = vunpack.c.h.b16 %v229
    %v1884 = vunpack.c.l.b16 %v230
    %v1885 = vunpack.c.h.b16 %v230
    %v1886 = vunpack.c.l.b16 %v231
    %v1887 = vunpack.c.h.b16 %v231
    %v1888 = vunpack.c.l.b16 %v232
    %v1889 = vunpack.c.h.b16 %v232
    %v1890 = vunpack.c.l.b16 %v233
    %v1891 = vunpack.c.h.b16 %v233
    %v1892 = vunpack.c.l.b16 %v234
    %v1893 = vunpack.c.h.b16 %v234
    %v1894 = vunpack.c.l.b16 %v235
    %v1895 = vunpack.c.h.b16 %v235
    %v1896 = vunpack.c.l.b16 %v236
    %v1897 = vunpack.c.h.b16 %v236
    %v1898 = vunpack.c.l.b16 %v237
    %v1899 = vunpack.c.h.b16 %v237
    %v1900 = vunpack.c.l.b16 %v238
    %v1901 = vunpack.c.h.b16 %v238
    %v1902 = vunpack.c.l.b16 %v239
    %v1903 = vunpack.c.h.b16 %v239
    %v1904 = vunpack.c.l.b16 %v240
    %v1905 = vunpack.c.h.b16 %v240
    %v1906 = vunpack.c.l.b16 %v241
    %v1907 = vunpack.c.h.b16 %v241
    %v1908 = vunpack.c.l.b16 %v242
    %v1909 = vunpack.c.h.b16 %v242
    %v1910 = vunpack.c.l.b16 %v243
    %v1911 = vunpack.c.h.b16 %v243
    %v1912 = vunpack.c.l.b16 %v244
    %v1913 = vunpack.c.h.b16 %v244
    %v1914 = vunpack.c.l.b16 %v245
    %v1915 = vunpack.c.h.b16 %v245
    %v1916 = vunpack.c.l.b16 %v246
    %v1917 = vunpack.c.h.b16 %v246
    %v1918 = vunpack.c.l.b16 %v247
    %v1919 = vunpack.c.h.b16 %v247
    %v1920 = vunpack.c.l.b16 %v248
    %v1921 = vunpack.c.h.b16 %v248
    %v1922 = vunpack.c.l.b16 %v249
    %v1923 = vunpack.c.h.b16 %v249
    %v1924 = vunpack.c.l.b16 %v250
    %v1925 = vunpack.c.h.b16 %v250
    %v1926 = vunpack.c.l.b16 %v251
    %v1927 = vunpack.c.h.b16 %v251
    %v1928 = vunpack.c.l.b16 %v252
    %v1929 = vunpack.c.h.b16 %v252
    %v1930 = vunpack.c.l.b16 %v253
    %v1931 = vunpack.c.h.b16 %v253
    %v1932 = vunpack.c.l.b16 %v254
    %v1933 = vunpack.c.h.b16 %v254
    %v1934 = vunpack.c.l.b16 %v255
    %v1935 = vunpack.c.h.b16 %v255
    %v1936 = vunpack.c.l.b16 %v256
    %v1937 = vunpack.c.h.b16 %v256
    %v1938 = vunpack.c.l.b16 %v257
    %v1939 = vunpack.c.h.b16 %v257
    %v1940 = vunpack.c.l.b16 %v258
    %v1941 = vunpack.c.h.b16 %v258
    %v1942 = vunpack.c.l.b16 %v259
    %v1943 = vunpack.c.h.b16 %v259
    %v1944 = vunpack.c.l.b16 %v260
    %v1945 = vunpack.c.h.b16 %v260
    %v1946 = vunpack.c.l.b16 %v261
    %v1947 = vunpack.c.h.b16 %v261
    %v1948 = vunpack.c.l.b16 %v262
    %v1949 = vunpack.c.h.b16 %v262
    %v1950 = vunpack.c.l.b16 %v263
    %v1951 = vunpack.c.h.b16 %v263
    %v1952 = vunpack.c.l.b16 %v264
    %v1953 = vunpack.c.h.b16 %v264
    %v1954 = vunpack.c.l.b16 %v265
    %v1955 = vunpack.c.h.b16 %v265
    %v1956 = vunpack.c.l.b16 %v266
    %v1957 = vunpack.c.h.b16 %v266
    %v1958 = vunpack.c.l.b16 %v267
    %v1959 = vunpack.c.h.b16 %v267
    %v1960 = vunpack.c.l.b16 %v268
    %v1961 = vunpack.c.h.b16 %v268
    %v1962 = vunpack.c.l.b16 %v269
    %v1963 = vunpack.c.h.b16 %v269
    %v1964 = vunpack.c.l.b16 %v270
    %v1965 = vunpack.c.h.b16 %v270
    %v1966 = vunpack.c.l.b16 %v271
    %v1967 = vunpack.c.h.b16 %v271
    %v1968 = vunpack.c.l.b16 %v272
    %v1969 = vunpack.c.h.b16 %v272
    %v1970 = vunpack.c.l.b16 %v273
    %v1971 = vunpack.c.h.b16 %v273
    %v1972 = vunpack.c.l.b16 %v274
    %v1973 = vunpack.c.h.b16 %v274
    %v1974 = vunpack.c.l.b16 %v275
    %v1975 = vunpack.c.h.b16 %v275
    %v1976 = vunpack.c.l.b16 %v276
    %v1977 = vunpack.c.h.b16 %v276
    %v1978 = vunpack.c.l.b16 %v277
    %v1979 = vunpack.c.h.b16 %v277
    %v1980 = vunpack.c.l.b16 %v278
    %v1981 = vunpack.c.h.b16 %v278
    %v1982 = vunpack.c.l.b16 %v279
    %v1983 = vunpack.c.h.b16 %v279
    %v1984 = vunpack.c.l.b16 %v280
    %v1985 = vunpack.c.h.b16 %v280
    %v1986 = vunpack.c.l.b16 %v281
    %v1987 = vunpack.c.h.b16 %v281
    %v1988 = vunpack.c.l.b16 %v282
    %v1989 = vunpack.c.h.b16 %v282
    %v1990 = vunpack.c.l.b16 %v283
    %v1991 = vunpack.c.h.b16 %v283
    %v1992 = vunpack.c.l.b16 %v284
    %v1993 = vunpack.c.h.b16 %v284
    %v1994 = vunpack.c.l.b16 %v285
    %v1995 = vunpack.c.h.b16 %v285
    %v1996 = vunpack.c.l.b16 %v286
    %v1997 = vunpack.c.h.b16 %v286
    %v1998 = vunpack.c.l.b16 %v287
    %v1999 = vunpack.c.h.b16 %v287
    %v2000 = vunpack.c.l.b16 %v288
    %v2001 = vunpack.c.h.b16 %v288
    %v2002 = vunpack.c.l.b16 %v289
    %v2003 = vunpack.c.h.b16 %v289
    %v2004 = vunpack.c.l.b16 %v290
    %v2005 = vunpack.c.h.b16 %v290
    %v2006 = vunpack.c.l.b16 %v291
    %v2007 = vunpack.c.h.b16 %v291
    %v2008 = vunpack.c.l.b16 %v292
    %v2009 = vunpack.c.h.b16 %v292
    %v2010 = vunpack.c.l.b16 %v293
    %v2011 = vunpack.c.h.b16 %v293
    %v2012 = vunpack.c.l.b16 %v294
    %v2013 = vunpack.c.h.b16 %v294
    %v2014 = vunpack.c.l.b16 %v295
    %v2015 = vunpack.c.h.b16 %v295
    %v2016 = vunpack.c.l.b16 %v296
    %v2017 = vunpack.c.h.b16 %v296
    %v2018 = vunpack.c.l.b16 %v297
    %v2019 = vunpack.c.h.b16 %v297
    %v2020 = vunpack.c.l.b16 %v298
    %v2021 = vunpack.c.h.b16 %v298
    %v2022 = vunpack.c.l.b16 %v299
    %v2023 = vunpack.c.h.b16 %v299
    %v2024 = vunpack.c.l.b16 %v300
    %v2025 = vunpack.c.h.b16 %v300
    %v2026 = vunpack.c.l.b16 %v301
    %v2027 = vunpack.c.h.b16 %v301
    %v2028 = vunpack.c.l.b16 %v302
    %v2029 = vunpack.c.h.b16 %v302
    %v2030 = vunpack.c.l.b16 %v303
    %v2031 = vunpack.c.h.b16 %v303
    %v2032 = vunpack.c.l.b16 %v304
    %v2033 = vunpack.c.h.b16 %v304
    %v2034 = vunpack.c.l.b16 %v305
    %v2035 = vunpack.c.h.b16 %v305
    %v2036 = vunpack.c.l.b16 %v306
    %v2037 = vunpack.c.h.b16 %v306
    %v2038 = vunpack.c.l.b16 %v307
    %v2039 = vunpack.c.h.b16 %v307
    %v2040 = vunpack.c.l.b16 %v308
    %v2041 = vunpack.c.h.b16 %v308
    %v2042 = vunpack.c.l.b16 %v309
    %v2043 = vunpack.c.h.b16 %v309
    %v2044 = vunpack.c.l.b16 %v310
    %v2045 = vunpack.c.h.b16 %v310
    %v2046 = vunpack.c.l.b16 %v311
    %v2047 = vunpack.c.h.b16 %v311
    %v2048 = vunpack.c.l.b16 %v312
    %v2049 = vunpack.c.h.b16 %v312
    %v2050 = vunpack.c.l.b16 %v313
    %v2051 = vunpack.c.h.b16 %v313
    %v2052 = vunpack.c.l.b16 %v314
    %v2053 = vunpack.c.h.b16 %v314
    %v2054 = vunpack.c.l.b16 %v315
    %v2055 = vunpack.c.h.b16 %v315
    %v2056 = vunpack.c.l.b16 %v316
    %v2057 = vunpack.c.h.b16 %v316
    %v2058 = vunpack.c.l.b16 %v317
    %v2059 = vunpack.c.h.b16 %v317
    %v2060 = vunpack.c.l.b16 %v318
    %v2061 = vunpack.c.h.b16 %v318
    %v2062 = vunpack.c.l.b16 %v319
    %v2063 = vunpack.c.h.b16 %v319
    %v2064 = vunpack.c.l.b16 %v320
    %v2065 = vunpack.c.h.b16 %v320
    %v2066 = vunpack.c.l.b16 %v321
    %v2067 = vunpack.c.h.b16 %v321
    %v2068 = vunpack.c.l.b16 %v322
    %v2069 = vunpack.c.h.b16 %v322
    %v2070 = vunpack.c.l.b16 %v323
    %v2071 = vunpack.c.h.b16 %v323
    %v2072 = vunpack.c.l.b16 %v324
    %v2073 = vunpack.c.h.b16 %v324
    %v2074 = vunpack.c.l.b16 %v325
    %v2075 = vunpack.c.h.b16 %v325
    %v2076 = vunpack.c.l.b16 %v326
    %v2077 = vunpack.c.h.b16 %v326
    %v2078 = vunpack.c.l.b16 %v327
    %v2079 = vunpack.c.h.b16 %v327
    %v2080 = vunpack.c.l.b16 %v328
    %v2081 = vunpack.c.h.b16 %v328
    %v2082 = vunpack.c.l.b16 %v329
    %v2083 = vunpack.c.h.b16 %v329
    %v2084 = vunpack.c.l.b16 %v330
    %v2085 = vunpack.c.h.b16 %v330
    %v2086 = vunpack.c.l.b16 %v331
    %v2087 = vunpack.c.h.b16 %v331
    %v2088 = vunpack.c.l.b16 %v332
    %v2089 = vunpack.c.h.b16 %v332
    %v2090 = vunpack.c.l.b16 %v333
    %v2091 = vunpack.c.h.b16 %v333
    %v2092 = vunpack.c.l.b16 %v334
    %v2093 = vunpack.c.h.b16 %v334
    %v2094 = vunpack.c.l.b16 %v335
    %v2095 = vunpack.c.h.b16 %v335
    %v2096 = vunpack.c.l.b16 %v336
    %v2097 = vunpack.c.h.b16 %v336
    %v2098 = vunpack.c.l.b16 %v337
    %v2099 = vunpack.c.h.b16 %v337
    %v2100 = vunpack.c.l.b16 %v338
    %v2101 = vunpack.c.h.b16 %v338
    %v2102 = vunpack.c.l.b16 %v339
    %v2103 = vunpack.c.h.b16 %v339
    %v2104 = vunpack.c.l.b16 %v340
    %v2105 = vunpack.c.h.b16 %v340
    %v2106 = vunpack.c.l.b16 %v341
    %v2107 = vunpack.c.h.b16 %v341
    %v2108 = vunpack.c.l.b16 %v342
    %v2109 = vunpack.c.h.b16 %v342
    %v2110 = vunpack.c.l.b16 %v343
    %v2111 = vunpack.c.h.b16 %v343
    %v2112 = vunpack.c.l.b16 %v344
    %v2113 = vunpack.c.h.b16 %v344
    %v2114 = vunpack.c.l.b16 %v345
    %v2115 = vunpack.c.h.b16 %v345
    %v2116 = vunpack.c.l.b16 %v346
    %v2117 = vunpack.c.h.b16 %v346
    %v2118 = vunpack.c.l.b16 %v347
    %v2119 = vunpack.c.h.b16 %v347
    %v2120 = vunpack.c.l.b16 %v348
    %v2121 = vunpack.c.h.b16 %v348
    %v2122 = vunpack.c.l.b16 %v349
    %v2123 = vunpack.c.h.b16 %v349
    %v2124 = vunpack.c.l.b16 %v350
    %v2125 = vunpack.c.h.b16 %v350
    %v2126 = vunpack.c.l.b16 %v351
    %v2127 = vunpack.c.h.b16 %v351
    %v2128 = vunpack.c.l.b16 %v352
    %v2129 = vunpack.c.h.b16 %v352
    %v2130 = vunpack.c.l.b16 %v353
    %v2131 = vunpack.c.h.b16 %v353
    %v2132 = vunpack.c.l.b16 %v354
    %v2133 = vunpack.c.h.b16 %v354
    %v2134 = vunpack.c.l.b16 %v355
    %v2135 = vunpack.c.h.b16 %v355
    %v2136 = vunpack.c.l.b16 %v356
    %v2137 = vunpack.c.h.b16 %v356
    %v2138 = vunpack.c.l.b16 %v357
    %v2139 = vunpack.c.h.b16 %v357
    %v2140 = vunpack.c.l.b16 %v358
    %v2141 = vunpack.c.h.b16 %v358
    %v2142 = vunpack.c.l.b16 %v359
    %v2143 = vunpack.c.h.b16 %v359
    %v2144 = vunpack.c.l.b16 %v360
    %v2145 = vunpack.c.h.b16 %v360
    %v2146 = vunpack.c.l.b16 %v361
    %v2147 = vunpack.c.h.b16 %v361
    %v2148 = vunpack.c.l.b16 %v362
    %v2149 = vunpack.c.h.b16 %v362
    %v2150 = vunpack.c.l.b16 %v363
    %v2151 = vunpack.c.h.b16 %v363
    %v2152 = vunpack.c.l.b16 %v364
    %v2153 = vunpack.c.h.b16 %v364
    %v2154 = vunpack.c.l.b16 %v365
    %v2155 = vunpack.c.h.b16 %v365
    %v2156 = vunpack.c.l.b16 %v366
    %v2157 = vunpack.c.h.b16 %v366
    %v2158 = vunpack.c.l.b16 %v367
    %v2159 = vunpack.c.h.b16 %v367
    %v2160 = vunpack.c.l.b16 %v368
    %v2161 = vunpack.c.h.b16 %v368
    %v2162 = vunpack.c.l.b16 %v369
    %v2163 = vunpack.c.h.b16 %v369
    %v2164 = vunpack.c.l.b16 %v370
    %v2165 = vunpack.c.h.b16 %v370
    %v2166 = vunpack.c.l.b16 %v371
    %v2167 = vunpack.c.h.b16 %v371
    %v2168 = vunpack.c.l.b16 %v372
    %v2169 = vunpack.c.h.b16 %v372
    %v2170 = vunpack.c.l.b16 %v373
    %v2171 = vunpack.c.h.b16 %v373
    %v2172 = vunpack.c.l.b16 %v374
    %v2173 = vunpack.c.h.b16 %v374
    %v2174 = vunpack.c.l.b16 %v375
    %v2175 = vunpack.c.h.b16 %v375
    %v2176 = vunpack.c.l.b16 %v376
    %v2177 = vunpack.c.h.b16 %v376
    %v2178 = vunpack.c.l.b16 %v377
    %v2179 = vunpack.c.h.b16 %v377
    %v2180 = vunpack.c.l.b16 %v378
    %v2181 = vunpack.c.h.b16 %v378
    %v2182 = vunpack.c.l.b16 %v379
    %v2183 = vunpack.c.h.b16 %v379
    %v2184 = vunpack.c.l.b16 %v380
    %v2185 = vunpack.c.h.b16 %v380
    %v2186 = vunpack.c.l.b16 %v381
    %v2187 = vunpack.c.h.b16 %v381
    %v2188 = vunpack.c.l.b16 %v382
    %v2189 = vunpack.c.h.b16 %v382
    %v2190 = vunpack.c.l.b16 %v383
    %v2191 = vunpack.c.h.b16 %v383
    %v2192 = vunpack.c.l.b16 %v384
    %v2193 = vunpack.c.h.b16 %v384
    %v2194 = vunpack.c.l.b16 %v385
    %v2195 = vunpack.c.h.b16 %v385
    %v2196 = vunpack.c.l.b16 %v386
    %v2197 = vunpack.c.h.b16 %v386
    %v2198 = vunpack.c.l.b16 %v387
    %v2199 = vunpack.c.h.b16 %v387
    %v2200 = vunpack.c.l.b16 %v388
    %v2201 = vunpack.c.h.b16 %v388
    %v2202 = vunpack.c.l.b16 %v389
    %v2203 = vunpack.c.h.b16 %v389
    %v2204 = vunpack.c.l.b16 %v390
    %v2205 = vunpack.c.h.b16 %v390
    %v2206 = vunpack.c.l.b16 %v391
    %v2207 = vunpack.c.h.b16 %v391
    %v2208 = vunpack.c.l.b16 %v392
    %v2209 = vunpack.c.h.b16 %v392
    %v2210 = vunpack.c.l.b16 %v393
    %v2211 = vunpack.c.h.b16 %v393
    %v2212 = vunpack.c.l.b16 %v394
    %v2213 = vunpack.c.h.b16 %v394
    %v2214 = vunpack.c.l.b16 %v395
    %v2215 = vunpack.c.h.b16 %v395
    %v2216 = vunpack.c.l.b16 %v396
    %v2217 = vunpack.c.h.b16 %v396
    %v2218 = vunpack.c.l.b16 %v397
    %v2219 = vunpack.c.h.b16 %v397
    %v2220 = vunpack.c.l.b16 %v398
    %v2221 = vunpack.c.h.b16 %v398
    %v2222 = vunpack.c.l.b16 %v399
    %v2223 = vunpack.c.h.b16 %v399
    %v2224 = vunpack.c.l.b16 %v400
    %v2225 = vunpack.c.h.b16 %v400
    %v2226 = vunpack.c.l.b16 %v401
    %v2227 = vunpack.c.h.b16 %v401
    %v2228 = vunpack.c.l.b16 %v402
    %v2229 = vunpack.c.h.b16 %v402
    %v2230 = vunpack.c.l.b16 %v403
    %v2231 = vunpack.c.h.b16 %v403
    %v2232 = vunpack.c.l.b16 %v404
    %v2233 = vunpack.c.h.b16 %v404
    %v2234 = vunpack.c.l.b16 %v405
    %v2235 = vunpack.c.h.b16 %v405
    %v2236 = vunpack.c.l.b16 %v406
    %v2237 = vunpack.c.h.b16 %v406
    %v2238 = vunpack.c.l.b16 %v407
    %v2239 = vunpack.c.h.b16 %v407
    %v2240 = vunpack.c.l.b16 %v408
    %v2241 = vunpack.c.h.b16 %v408
    %v2242 = vunpack.c.l.b16 %v409
    %v2243 = vunpack.c.h.b16 %v409
    %v2244 = vunpack.c.l.b16 %v410
    %v2245 = vunpack.c.h.b16 %v410
    %v2246 = vunpack.c.l.b16 %v411
    %v2247 = vunpack.c.h.b16 %v411
    %v2248 = vunpack.c.l.b16 %v412
    %v2249 = vunpack.c.h.b16 %v412
    %v2250 = vunpack.c.l.b16 %v413
    %v2251 = vunpack.c.h.b16 %v413
    %v2252 = vunpack.c.l.b16 %v414
    %v2253 = vunpack.c.h.b16 %v414
    %v2254 = vunpack.c.l.b16 %v415
    %v2255 = vunpack.c.h.b16 %v415
    %v2256 = vunpack.c.l.b16 %v416
    %v2257 = vunpack.c.h.b16 %v416
    %v2258 = vunpack.c.l.b16 %v417
    %v2259 = vunpack.c.h.b16 %v417
    %v2260 = vunpack.c.l.b16 %v418
    %v2261 = vunpack.c.h.b16 %v418
    %v2262 = vunpack.c.l.b16 %v419
    %v2263 = vunpack.c.h.b16 %v419
    %v2264 = vunpack.c.l.b16 %v420
    %v2265 = vunpack.c.h.b16 %v420
    %v2266 = vunpack.c.l.b16 %v421
    %v2267 = vunpack.c.h.b16 %v421
    %v2268 = vunpack.c.l.b16 %v422
    %v2269 = vunpack.c.h.b16 %v422
    %v2270 = vunpack.c.l.b16 %v423
    %v2271 = vunpack.c.h.b16 %v423
    %v2272 = vunpack.c.l.b16 %v424
    %v2273 = vunpack.c.h.b16 %v424
    %v2274 = vunpack.c.l.b16 %v425
    %v2275 = vunpack.c.h.b16 %v425
    %v2276 = vunpack.c.l.b16 %v426
    %v2277 = vunpack.c.h.b16 %v426
    %v2278 = vunpack.c.l.b16 %v427
    %v2279 = vunpack.c.h.b16 %v427
    %v2280 = vunpack.c.l.b16 %v428
    %v2281 = vunpack.c.h.b16 %v428
    %v2282 = vunpack.c.l.b16 %v429
    %v2283 = vunpack.c.h.b16 %v429
    %v2284 = vunpack.c.l.b16 %v430
    %v2285 = vunpack.c.h.b16 %v430
    %v2286 = vunpack.c.l.b16 %v431
    %v2287 = vunpack.c.h.b16 %v431
    %v2288 = vunpack.c.l.b16 %v432
    %v2289 = vunpack.c.h.b16 %v432
    %v2290 = vunpack.c.l.b16 %v433
    %v2291 = vunpack.c.h.b16 %v433
    %v2292 = vunpack.c.l.b16 %v434
    %v2293 = vunpack.c.h.b16 %v434
    %v2294 = vunpack.c.l.b16 %v435
    %v2295 = vunpack.c.h.b16 %v435
    %v2296 = vunpack.c.l.b16 %v436
    %v2297 = vunpack.c.h.b16 %v436
    %v2298 = vunpack.c.l.b16 %v437
    %v2299 = vunpack.c.h.b16 %v437
    %v2300 = vunpack.c.l.b16 %v438
    %v2301 = vunpack.c.h.b16 %v438
    %v2302 = vunpack.c.l.b16 %v439
    %v2303 = vunpack.c.h.b16 %v439
    %v2304 = vunpack.c.l.b16 %v440
    %v2305 = vunpack.c.h.b16 %v440
    %v2306 = vunpack.c.l.b16 %v441
    %v2307 = vunpack.c.h.b16 %v441
    %v2308 = vunpack.c.l.b16 %v442
    %v2309 = vunpack.c.h.b16 %v442
    %v2310 = vunpack.c.l.b16 %v443
    %v2311 = vunpack.c.h.b16 %v443
    %v2312 = vunpack.c.l.b16 %v444
    %v2313 = vunpack.c.h.b16 %v444
    %v2314 = vunpack.c.l.b16 %v445
    %v2315 = vunpack.c.h.b16 %v445
    %v2316 = vunpack.c.l.b16 %v446
    %v2317 = vunpack.c.h.b16 %v446
    %v2318 = vunpack.c.l.b16 %v447
    %v2319 = vunpack.c.h.b16 %v447
    %v2320 = vunpack.c.l.b16 %v448
    %v2321 = vunpack.c.h.b16 %v448
    %v2322 = vunpack.c.l.b16 %v449
    %v2323 = vunpack.c.h.b16 %v449
    %v2324 = vunpack.c.l.b16 %v450
    %v2325 = vunpack.c.h.b16 %v450
    %v2326 = vunpack.c.l.b16 %v451
    %v2327 = vunpack.c.h.b16 %v451
    %v2328 = vunpack.c.l.b16 %v452
    %v2329 = vunpack.c.h.b16 %v452
    %v2330 = vunpack.c.l.b16 %v453
    %v2331 = vunpack.c.h.b16 %v453
    %v2332 = vunpack.c.l.b16 %v454
    %v2333 = vunpack.c.h.b16 %v454
    %v2334 = vunpack.c.l.b16 %v455
    %v2335 = vunpack.c.h.b16 %v455
    %v2336 = vunpack.c.l.b16 %v456
    %v2337 = vunpack.c.h.b16 %v456
    %v2338 = vunpack.c.l.b16 %v457
    %v2339 = vunpack.c.h.b16 %v457
    %v2340 = vunpack.c.l.b16 %v458
    %v2341 = vunpack.c.h.b16 %v458
    %v2342 = vunpack.c.l.b16 %v459
    %v2343 = vunpack.c.h.b16 %v459
    %v2344 = vunpack.c.l.b16 %v460
    %v2345 = vunpack.c.h.b16 %v460
    %v2346 = vunpack.c.l.b16 %v461
    %v2347 = vunpack.c.h.b16 %v461
    %v2348 = vunpack.c.l.b16 %v462
    %v2349 = vunpack.c.h.b16 %v462
    %v2350 = vunpack.c.l.b16 %v463
    %v2351 = vunpack.c.h.b16 %v463
    %v2352 = vunpack.c.l.b16 %v464
    %v2353 = vunpack.c.h.b16 %v464
    %v2354 = vunpack.c.l.b16 %v465
    %v2355 = vunpack.c.h.b16 %v465
    %v2356 = vunpack.c.l.b16 %v466
    %v2357 = vunpack.c.h.b16 %v466
    %v2358 = vunpack.c.l.b16 %v467
    %v2359 = vunpack.c.h.b16 %v467
    %v2360 = vunpack.c.l.b16 %v468
    %v2361 = vunpack.c.h.b16 %v468
    %v2362 = vunpack.c.l.b16 %v469
    %v2363 = vunpack.c.h.b16 %v469
    %v2364 = vunpack.c.l.b16 %v470
    %v2365 = vunpack.c.h.b16 %v470
    %v2366 = vunpack.c.l.b16 %v471
    %v2367 = vunpack.c.h.b16 %v471
    %v2368 = vunpack.c.l.b16 %v472
    %v2369 = vunpack.c.h.b16 %v472
    %v2370 = vunpack.c.l.b16 %v473
    %v2371 = vunpack.c.h.b16 %v473
    %v2372 = vunpack.c.l.b16 %v474
    %v2373 = vunpack.c.h.b16 %v474
    %v2374 = vunpack.c.l.b16 %v475
    %v2375 = vunpack.c.h.b16 %v475
    %v2376 = vunpack.c.l.b16 %v476
    %v2377 = vunpack.c.h.b16 %v476
    %v2378 = vunpack.c.l.b16 %v477
    %v2379 = vunpack.c.h.b16 %v477
    %v2380 = vunpack.c.l.b16 %v478
    %v2381 = vunpack.c.h.b16 %v478
    %v2382 = vunpack.c.l.b16 %v479
    %v2383 = vunpack.c.h.b16 %v479
    %v2384 = vunpack.c.l.b16 %v480
    %v2385 = vunpack.c.h.b16 %v480
    %v2386 = vunpack.c.l.b16 %v481
    %v2387 = vunpack.c.h.b16 %v481
    %v2388 = vunpack.c.l.b16 %v482
    %v2389 = vunpack.c.h.b16 %v482
    %v2390 = vunpack.c.l.b16 %v483
    %v2391 = vunpack.c.h.b16 %v483
    %v2392 = vunpack.c.l.b16 %v484
    %v2393 = vunpack.c.h.b16 %v484
    %v2394 = vunpack.c.l.b16 %v485
    %v2395 = vunpack.c.h.b16 %v485
    %v2396 = vunpack.c.l.b16 %v486
    %v2397 = vunpack.c.h.b16 %v486
    %v2398 = vunpack.c.l.b16 %v487
    %v2399 = vunpack.c.h.b16 %v487
    %v2400 = vunpack.c.l.b16 %v488
    %v2401 = vunpack.c.h.b16 %v488
    %v2402 = vunpack.c.l.b16 %v489
    %v2403 = vunpack.c.h.b16 %v489
    %v2404 = vunpack.c.l.b16 %v490
    %v2405 = vunpack.c.h.b16 %v490
    %v2406 = vunpack.c.l.b16 %v491
    %v2407 = vunpack.c.h.b16 %v491
    %v2408 = vunpack.c.l.b16 %v492
    %v2409 = vunpack.c.h.b16 %v492
    %v2410 = vunpack.c.l.b16 %v493
    %v2411 = vunpack.c.h.b16 %v493
    %v2412 = vunpack.c.l.b16 %v494
    %v2413 = vunpack.c.h.b16 %v494
    %v2414 = vunpack.c.l.b16 %v495
    %v2415 = vunpack.c.h.b16 %v495
    %v2416 = vunpack.c.l.b16 %v496
    %v2417 = vunpack.c.h.b16 %v496
    %v2418 = vunpack.c.l.b16 %v497
    %v2419 = vunpack.c.h.b16 %v497
    %v2420 = vunpack.c.l.b16 %v498
    %v2421 = vunpack.c.h.b16 %v498
    %v2422 = vunpack.c.l.b16 %v499
    %v2423 = vunpack.c.h.b16 %v499
    %v2424 = vunpack.c.l.b16 %v500
    %v2425 = vunpack.c.h.b16 %v500
    %v2426 = vunpack.c.l.b16 %v501
    %v2427 = vunpack.c.h.b16 %v501
    %v2428 = vunpack.c.l.b16 %v502
    %v2429 = vunpack.c.h.b16 %v502
    %v2430 = vunpack.c.l.b16 %v503
    %v2431 = vunpack.c.h.b16 %v503
    %v2432 = vunpack.c.l.b16 %v504
    %v2433 = vunpack.c.h.b16 %v504
    %v2434 = vunpack.c.l.b16 %v505
    %v2435 = vunpack.c.h.b16 %v505
    %v2436 = vunpack.c.l.b16 %v506
    %v2437 = vunpack.c.h.b16 %v506
    %v2438 = vunpack.c.l.b16 %v507
    %v2439 = vunpack.c.h.b16 %v507
    %v2440 = vunpack.c.l.b16 %v508
    %v2441 = vunpack.c.h.b16 %v508
    %v2442 = vunpack.c.l.b16 %v509
    %v2443 = vunpack.c.h.b16 %v509
    %v2444 = vunpack.c.l.b16 %v510
    %v2445 = vunpack.c.h.b16 %v510
    %v2446 = vunpack.c.l.b16 %v511
    %v2447 = vunpack.c.h.b16 %v511
    %v2448 = vunpack.c.l.b16 %v512
    %v2449 = vunpack.c.h.b16 %v512
    %v2450 = vunpack.c.l.b16 %v513
    %v2451 = vunpack.c.h.b16 %v513
    %v2452 = vunpack.c.l.b16 %v514
    %v2453 = vunpack.c.h.b16 %v514
    %v2454 = vunpack.c.l.b16 %v515
    %v2455 = vunpack.c.h.b16 %v515
    %v2456 = vunpack.c.l.b16 %v516
    %v2457 = vunpack.c.h.b16 %v516
    %v2458 = vunpack.c.l.b16 %v517
    %v2459 = vunpack.c.h.b16 %v517
    %v2460 = vunpack.c.l.b16 %v518
    %v2461 = vunpack.c.h.b16 %v518
    %v2462 = vunpack.c.l.b16 %v519
    %v2463 = vunpack.c.h.b16 %v519
    %v2464 = vunpack.c.l.b16 %v520
    %v2465 = vunpack.c.h.b16 %v520
    %v2466 = vunpack.c.l.b16 %v521
    %v2467 = vunpack.c.h.b16 %v521
    %v2468 = vunpack.c.l.b16 %v522
    %v2469 = vunpack.c.h.b16 %v522
    %v2470 = vunpack.c.l.b16 %v523
    %v2471 = vunpack.c.h.b16 %v523
    %v2472 = vunpack.c.l.b16 %v524
    %v2473 = vunpack.c.h.b16 %v524
    %v2474 = vunpack.c.l.b16 %v525
    %v2475 = vunpack.c.h.b16 %v525
    %v2476 = vunpack.c.l.b16 %v526
    %v2477 = vunpack.c.h.b16 %v526
    %v2478 = vunpack.c.l.b16 %v527
    %v2479 = vunpack.c.h.b16 %v527
    %v2480 = vunpack.c.l.b16 %v528
    %v2481 = vunpack.c.h.b16 %v528
    %v2482 = vunpack.c.l.b16 %v529
    %v2483 = vunpack.c.h.b16 %v529
    %v2484 = vunpack.c.l.b16 %v530
    %v2485 = vunpack.c.h.b16 %v530
    %v2486 = vunpack.c.l.b16 %v531
    %v2487 = vunpack.c.h.b16 %v531
    %v2488 = vunpack.c.l.b16 %v532
    %v2489 = vunpack.c.h.b16 %v532
    %v2490 = vunpack.c.l.b16 %v533
    %v2491 = vunpack.c.h.b16 %v533
    %v2492 = vunpack.c.l.b16 %v534
    %v2493 = vunpack.c.h.b16 %v534
    %v2494 = vunpack.c.l.b16 %v535
    %v2495 = vunpack.c.h.b16 %v535
    %v2496 = vunpack.c.l.b16 %v536
    %v2497 = vunpack.c.h.b16 %v536
    %v2498 = vunpack.c.l.b16 %v537
    %v2499 = vunpack.c.h.b16 %v537
    %v2500 = vunpack.c.l.b16 %v538
    %v2501 = vunpack.c.h.b16 %v538
    %v2502 = vunpack.c.l.b16 %v539
    %v2503 = vunpack.c.h.b16 %v539
    %v2504 = vunpack.c.l.b16 %v540
    %v2505 = vunpack.c.h.b16 %v540
    %v2506 = vunpack.c.l.b16 %v541
    %v2507 = vunpack.c.h.b16 %v541
    %v2508 = vunpack.c.l.b16 %v542
    %v2509 = vunpack.c.h.b16 %v542
    %v2510 = vunpack.c.l.b16 %v543
    %v2511 = vunpack.c.h.b16 %v543
    %v2512 = vunpack.c.l.b16 %v544
    %v2513 = vunpack.c.h.b16 %v544
    %v2514 = vunpack.c.l.b16 %v545
    %v2515 = vunpack.c.h.b16 %v545
    %v2516 = vunpack.c.l.b16 %v546
    %v2517 = vunpack.c.h.b16 %v546
    %v2518 = vunpack.c.l.b16 %v547
    %v2519 = vunpack.c.h.b16 %v547
    %v2520 = vunpack.c.l.b16 %v548
    %v2521 = vunpack.c.h.b16 %v548
    %v2522 = vunpack.c.l.b16 %v549
    %v2523 = vunpack.c.h.b16 %v549
    %v2524 = vunpack.c.l.b16 %v550
    %v2525 = vunpack.c.h.b16 %v550
    %v2526 = vunpack.c.l.b16 %v551
    %v2527 = vunpack.c.h.b16 %v551
    %v2528 = vunpack.c.l.b16 %v552
    %v2529 = vunpack.c.h.b16 %v552
    %v2530 = vunpack.c.l.b16 %v553
    %v2531 = vunpack.c.h.b16 %v553
    %v2532 = vunpack.c.l.b16 %v554
    %v2533 = vunpack.c.h.b16 %v554
    %v2534 = vunpack.c.l.b16 %v555
    %v2535 = vunpack.c.h.b16 %v555
    %v2536 = vunpack.c.l.b16 %v556
    %v2537 = vunpack.c.h.b16 %v556
    %v2538 = vunpack.c.l.b16 %v557
    %v2539 = vunpack.c.h.b16 %v557
    %v2540 = vunpack.c.l.b16 %v558
    %v2541 = vunpack.c.h.b16 %v558
    %v2542 = vunpack.c.l.b16 %v559
    %v2543 = vunpack.c.h.b16 %v559
    %v2544 = vunpack.c.l.b16 %v560
    %v2545 = vunpack.c.h.b16 %v560
    %v2546 = vunpack.c.l.b16 %v561
    %v2547 = vunpack.c.h.b16 %v561
    %v2548 = vunpack.c.l.b16 %v562
    %v2549 = vunpack.c.h.b16 %v562
    %v2550 = vunpack.c.l.b16 %v563
    %v2551 = vunpack.c.h.b16 %v563
    %v2552 = vunpack.c.l.b16 %v564
    %v2553 = vunpack.c.h.b16 %v564
    %v2554 = vunpack.c.l.b16 %v565
    %v2555 = vunpack.c.h.b16 %v565
    %v2556 = vunpack.c.l.b16 %v566
    %v2557 = vunpack.c.h.b16 %v566
    %v2558 = vunpack.c.l.b16 %v567
    %v2559 = vunpack.c.h.b16 %v567
    %v2560 = vunpack.c.l.b16 %v568
    %v2561 = vunpack.c.h.b16 %v568
    %v2562 = vunpack.c.l.b16 %v569
    %v2563 = vunpack.c.h.b16 %v569
    %v2564 = vunpack.c.l.b16 %v570
    %v2565 = vunpack.c.h.b16 %v570
    %v2566 = vunpack.c.l.b16 %v571
    %v2567 = vunpack.c.h.b16 %v571
    %v2568 = vunpack.c.l.b16 %v572
    %v2569 = vunpack.c.h.b16 %v572
    %v2570 = vunpack.c.l.b16 %v573
    %v2571 = vunpack.c.h.b16 %v573
    %v2572 = vunpack.c.l.b16 %v574
    %v2573 = vunpack.c.h.b16 %v574
    %v2574 = vunpack.c.l.b16 %v575
    %v2575 = vunpack.c.h.b16 %v575
    %v2576 = vunpack.c.l.b16 %v576
    %v2577 = vunpack.c.h.b16 %v576
    %v2578 = vunpack.c.l.b16 %v577
    %v2579 = vunpack.c.h.b16 %v577
    %v2580 = vunpack.c.l.b16 %v578
    %v2581 = vunpack.c.h.b16 %v578
    %v2582 = vunpack.c.l.b16 %v579
    %v2583 = vunpack.c.h.b16 %v579
    %v2584 = vunpack.c.l.b16 %v580
    %v2585 = vunpack.c.h.b16 %v580
    %v2586 = vunpack.c.l.b16 %v581
    %v2587 = vunpack.c.h.b16 %v581
    %v2588 = vunpack.c.l.b16 %v582
    %v2589 = vunpack.c.h.b16 %v582
    %v2590 = vunpack.c.l.b16 %v583
    %v2591 = vunpack.c.h.b16 %v583
    %v2592 = vunpack.c.l.b16 %v584
    %v2593 = vunpack.c.h.b16 %v584
    %v2594 = vunpack.c.l.b16 %v585
    %v2595 = vunpack.c.h.b16 %v585
    %v2596 = vunpack.c.l.b16 %v586
    %v2597 = vunpack.c.h.b16 %v586
    %v2598 = vunpack.c.l.b16 %v587
    %v2599 = vunpack.c.h.b16 %v587
    %v2600 = vunpack.c.l.b16 %v588
    %v2601 = vunpack.c.h.b16 %v588
    %v2602 = vunpack.c.l.b16 %v589
    %v2603 = vunpack.c.h.b16 %v589
    %v2604 = vunpack.c.l.b16 %v590
    %v2605 = vunpack.c.h.b16 %v590
    %v2606 = vunpack.c.l.b16 %v591
    %v2607 = vunpack.c.h.b16 %v591
    %v2608 = vunpack.c.l.b16 %v592
    %v2609 = vunpack.c.h.b16 %v592
    %v2610 = vunpack.c.l.b16 %v593
    %v2611 = vunpack.c.h.b16 %v593
    %v2612 = vunpack.c.l.b16 %v594
    %v2613 = vunpack.c.h.b16 %v594
    %v2614 = vunpack.c.l.b16 %v595
    %v2615 = vunpack.c.h.b16 %v595
    %v2616 = vunpack.c.l.b16 %v596
    %v2617 = vunpack.c.h.b16 %v596
    %v2618 = vunpack.c.l.b16 %v597
    %v2619 = vunpack.c.h.b16 %v597
    %v2620 = vunpack.c.l.b16 %v598
    %v2621 = vunpack.c.h.b16 %v598
    %v2622 = vunpack.c.l.b16 %v599
    %v2623 = vunpack.c.h.b16 %v599
    %v2624 = vunpack.c.l.b16 %v600
    %v2625 = vunpack.c.h.b16 %v600
    %v2626 = vunpack.c.l.b16 %v601
    %v2627 = vunpack.c.h.b16 %v601
    %v2628 = vunpack.c.l.b16 %v602
    %v2629 = vunpack.c.h.b16 %v602
    %v2630 = vunpack.c.l.b16 %v603
    %v2631 = vunpack.c.h.b16 %v603
    %v2632 = vunpack.c.l.b16 %v604
    %v2633 = vunpack.c.h.b16 %v604
    %v2634 = vunpack.c.l.b16 %v605
    %v2635 = vunpack.c.h.b16 %v605
    %v2636 = vunpack.c.l.b16 %v606
    %v2637 = vunpack.c.h.b16 %v606
    %v2638 = vunpack.c.l.b16 %v607
    %v2639 = vunpack.c.h.b16 %v607
    %v2640 = vunpack.c.l.b16 %v608
    %v2641 = vunpack.c.h.b16 %v608
    %v2642 = vunpack.c.l.b16 %v609
    %v2643 = vunpack.c.h.b16 %v609
    %v2644 = vunpack.c.l.b16 %v610
    %v2645 = vunpack.c.h.b16 %v610
    %v2646 = vunpack.c.l.b16 %v611
    %v2647 = vunpack.c.h.b16 %v611
    %v2648 = vunpack.c.l.b16 %v612
    %v2649 = vunpack.c.h.b16 %v612
    %v2650 = vunpack.c.l.b16 %v613
    %v2651 = vunpack.c.h.b16 %v613
    %v2652 = vunpack.c.l.b16 %v614
    %v2653 = vunpack.c.h.b16 %v614
    %v2654 = vunpack.c.l.b16 %v615
    %v2655 = vunpack.c.h.b16 %v615
    %v2656 = vunpack.c.l.b16 %v616
    %v2657 = vunpack.c.h.b16 %v616
    %v2658 = vunpack.c.l.b16 %v617
    %v2659 = vunpack.c.h.b16 %v617
    %v2660 = vunpack.c.l.b16 %v618
    %v2661 = vunpack.c.h.b16 %v618
    %v2662 = vunpack.c.l.b16 %v619
    %v2663 = vunpack.c.h.b16 %v619
    %v2664 = vunpack.c.l.b16 %v620
    %v2665 = vunpack.c.h.b16 %v620
    %v2666 = vunpack.c.l.b16 %v621
    %v2667 = vunpack.c.h.b16 %v621
    %v2668 = vunpack.c.l.b16 %v622
    %v2669 = vunpack.c.h.b16 %v622
    %v2670 = vunpack.c.l.b16 %v623
    %v2671 = vunpack.c.h.b16 %v623
    %v2672 = vunpack.c.l.b16 %v624
    %v2673 = vunpack.c.h.b16 %v624
    %v2674 = vunpack.c.l.b16 %v625
    %v2675 = vunpack.c.h.b16 %v625
    %v2676 = vunpack.c.l.b16 %v626
    %v2677 = vunpack.c.h.b16 %v626
    %v2678 = vunpack.c.l.b16 %v627
    %v2679 = vunpack.c.h.b16 %v627
    %v2680 = vunpack.c.l.b16 %v628
    %v2681 = vunpack.c.h.b16 %v628
    %v2682 = vunpack.c.l.b16 %v629
    %v2683 = vunpack.c.h.b16 %v629
    %v2684 = vunpack.c.l.b16 %v630
    %v2685 = vunpack.c.h.b16 %v630
    %v2686 = vunpack.c.l.b16 %v631
    %v2687 = vunpack.c.h.b16 %v631
    %v2688 = vunpack.c.l.b16 %v632
    %v2689 = vunpack.c.h.b16 %v632
    %v2690 = vunpack.c.l.b16 %v633
    %v2691 = vunpack.c.h.b16 %v633
    %v2692 = vunpack.c.l.b16 %v634
    %v2693 = vunpack.c.h.b16 %v634
    %v2694 = vunpack.c.l.b16 %v635
    %v2695 = vunpack.c.h.b16 %v635
    %v2696 = vunpack.c.l.b16 %v636
    %v2697 = vunpack.c.h.b16 %v636
    %v2698 = vunpack.c.l.b16 %v637
    %v2699 = vunpack.c.h.b16 %v637
    %v2700 = vunpack.c.l.b16 %v638
    %v2701 = vunpack.c.h.b16 %v638
    %v2702 = vunpack.c.l.b16 %v639
    %v2703 = vunpack.c.h.b16 %v639
    %v2704 = vunpack.c.l.b16 %v640
    %v2705 = vunpack.c.h.b16 %v640
    %v2706 = vunpack.c.l.b16 %v641
    %v2707 = vunpack.c.h.b16 %v641
    %v2708 = vunpack.c.l.b16 %v642
    %v2709 = vunpack.c.h.b16 %v642
    %v2710 = vunpack.c.l.b16 %v643
    %v2711 = vunpack.c.h.b16 %v643
    %v2712 = vunpack.c.l.b16 %v644
    %v2713 = vunpack.c.h.b16 %v644
    %v2714 = vunpack.c.l.b16 %v645
    %v2715 = vunpack.c.h.b16 %v645
    %v2716 = vunpack.c.l.b16 %v646
    %v2717 = vunpack.c.h.b16 %v646
    %v2718 = vunpack.c.l.b16 %v647
    %v2719 = vunpack.c.h.b16 %v647
    %v2720 = vunpack.c.l.b16 %v648
    %v2721 = vunpack.c.h.b16 %v648
    %v2722 = vunpack.c.l.b16 %v649
    %v2723 = vunpack.c.h.b16 %v649
    %v2724 = vunpack.c.l.b16 %v650
    %v2725 = vunpack.c.h.b16 %v650
    %v2726 = vunpack.c.l.b16 %v651
    %v2727 = vunpack.c.h.b16 %v651
    %v2728 = vunpack.c.l.b16 %v652
    %v2729 = vunpack.c.h.b16 %v652
    %v2730 = vunpack.c.l.b16 %v653
    %v2731 = vunpack.c.h.b16 %v653
    %v2732 = vunpack.c.l.b16 %v654
    %v2733 = vunpack.c.h.b16 %v654
    %v2734 = vunpack.c.l.b16 %v655
    %v2735 = vunpack.c.h.b16 %v655
    %v2736 = vunpack.c.l.b16 %v656
    %v2737 = vunpack.c.h.b16 %v656
    %v2738 = vunpack.c.l.b16 %v657
    %v2739 = vunpack.c.h.b16 %v657
    %v2740 = vunpack.c.l.b16 %v658
    %v2741 = vunpack.c.h.b16 %v658
    %v2742 = vunpack.c.l.b16 %v659
    %v2743 = vunpack.c.h.b16 %v659
    %v2744 = vunpack.c.l.b16 %v660
    %v2745 = vunpack.c.h.b16 %v660
    %v2746 = vunpack.c.l.b16 %v661
    %v2747 = vunpack.c.h.b16 %v661
    %v2748 = vunpack.c.l.b16 %v662
    %v2749 = vunpack.c.h.b16 %v662
    %v2750 = vunpack.c.l.b16 %v663
    %v2751 = vunpack.c.h.b16 %v663
    %v2752 = vunpack.c.l.b16 %v664
    %v2753 = vunpack.c.h.b16 %v664
    %v2754 = vunpack.c.l.b16 %v665
    %v2755 = vunpack.c.h.b16 %v665
    %v2756 = vunpack.c.l.b16 %v666
    %v2757 = vunpack.c.h.b16 %v666
    %v2758 = vunpack.c.l.b16 %v667
    %v2759 = vunpack.c.h.b16 %v667
    %v2760 = vunpack.c.l.b16 %v668
    %v2761 = vunpack.c.h.b16 %v668
    %v2762 = vunpack.c.l.b16 %v669
    %v2763 = vunpack.c.h.b16 %v669
    %v2764 = vunpack.c.l.b16 %v670
    %v2765 = vunpack.c.h.b16 %v670
    %v2766 = vunpack.c.l.b16 %v671
    %v2767 = vunpack.c.h.b16 %v671
    %v2768 = vunpack.c.l.b16 %v672
    %v2769 = vunpack.c.h.b16 %v672
    %v2770 = vunpack.c.l.b16 %v673
    %v2771 = vunpack.c.h.b16 %v673
    %v2772 = vunpack.c.l.b16 %v674
    %v2773 = vunpack.c.h.b16 %v674
    %v2774 = vunpack.c.l.b16 %v675
    %v2775 = vunpack.c.h.b16 %v675
    %v2776 = vunpack.c.l.b16 %v676
    %v2777 = vunpack.c.h.b16 %v676
    %v2778 = vunpack.c.l.b16 %v677
    %v2779 = vunpack.c.h.b16 %v677
    %v2780 = vunpack.c.l.b16 %v678
    %v2781 = vunpack.c.h.b16 %v678
    %v2782 = vunpack.c.l.b16 %v679
    %v2783 = vunpack.c.h.b16 %v679
    %v2784 = vunpack.c.l.b16 %v680
    %v2785 = vunpack.c.h.b16 %v680
    %v2786 = vunpack.c.l.b16 %v681
    %v2787 = vunpack.c.h.b16 %v681
    %v2788 = vunpack.c.l.b16 %v682
    %v2789 = vunpack.c.h.b16 %v682
    %v2790 = vunpack.c.l.b16 %v683
    %v2791 = vunpack.c.h.b16 %v683
    %v2792 = vunpack.c.l.b16 %v684
    %v2793 = vunpack.c.h.b16 %v684
    %v2794 = vunpack.c.l.b16 %v685
    %v2795 = vunpack.c.h.b16 %v685
    %v2796 = vunpack.c.l.b16 %v686
    %v2797 = vunpack.c.h.b16 %v686
    %v2798 = vunpack.c.l.b16 %v687
    %v2799 = vunpack.c.h.b16 %v687
    %v2800 = vunpack.c.l.b16 %v688
    %v2801 = vunpack.c.h.b16 %v688
    %v2802 = vunpack.c.l.b16 %v689
    %v2803 = vunpack.c.h.b16 %v689
    %v2804 = vunpack.c.l.b16 %v690
    %v2805 = vunpack.c.h.b16 %v690
    %v2806 = vunpack.c.l.b16 %v691
    %v2807 = vunpack.c.h.b16 %v691
    %v2808 = vunpack.c.l.b16 %v692
    %v2809 = vunpack.c.h.b16 %v692
    %v2810 = vunpack.c.l.b16 %v693
    %v2811 = vunpack.c.h.b16 %v693
    %v2812 = vunpack.c.l.b16 %v694
    %v2813 = vunpack.c.h.b16 %v694
    %v2814 = vunpack.c.l.b16 %v695
    %v2815 = vunpack.c.h.b16 %v695
    %v2816 = vunpack.c.l.b16 %v696
    %v2817 = vunpack.c.h.b16 %v696
    %v2818 = vunpack.c.l.b16 %v697
    %v2819 = vunpack.c.h.b16 %v697
    %v2820 = vunpack.c.l.b16 %v698
    %v2821 = vunpack.c.h.b16 %v698
    %v2822 = vunpack.c.l.b16 %v699
    %v2823 = vunpack.c.h.b16 %v699
    %v2824 = vunpack.c.l.b16 %v700
    %v2825 = vunpack.c.h.b16 %v700
    %v2826 = vunpack.c.l.b16 %v701
    %v2827 = vunpack.c.h.b16 %v701
    %v2828 = vunpack.c.l.b16 %v702
    %v2829 = vunpack.c.h.b16 %v702
    %v2830 = vunpack.c.l.b16 %v703
    %v2831 = vunpack.c.h.b16 %v703
    %v2832 = vunpack.c.l.b16 %v704
    %v2833 = vunpack.c.h.b16 %v704
    %v2834 = vunpack.c.l.b16 %v705
    %v2835 = vunpack.c.h.b16 %v705
    %v2836 = vunpack.c.l.b16 %v706
    %v2837 = vunpack.c.h.b16 %v706
    %v2838 = vunpack.c.l.b16 %v707
    %v2839 = vunpack.c.h.b16 %v707
    %v2840 = vunpack.c.l.b16 %v708
    %v2841 = vunpack.c.h.b16 %v708
    %v2842 = vunpack.c.l.b16 %v709
    %v2843 = vunpack.c.h.b16 %v709
    %v2844 = vunpack.c.l.b16 %v710
    %v2845 = vunpack.c.h.b16 %v710
    %v2846 = vunpack.c.l.b16 %v711
    %v2847 = vunpack.c.h.b16 %v711
    %v2848 = vunpack.c.l.b16 %v712
    %v2849 = vunpack.c.h.b16 %v712
    %v2850 = vunpack.c.l.b16 %v713
    %v2851 = vunpack.c.h.b16 %v713
    %v2852 = vunpack.c.l.b16 %v714
    %v2853 = vunpack.c.h.b16 %v714
    %v2854 = vunpack.c.l.b16 %v715
    %v2855 = vunpack.c.h.b16 %v715
    %v2856 = vunpack.c.l.b16 %v716
    %v2857 = vunpack.c.h.b16 %v716
    %v2858 = vunpack.c.l.b16 %v717
    %v2859 = vunpack.c.h.b16 %v717
    %v2860 = vunpack.c.l.b16 %v718
    %v2861 = vunpack.c.h.b16 %v718
    %v2862 = vunpack.c.l.b16 %v719
    %v2863 = vunpack.c.h.b16 %v719
    %v2864 = vunpack.c.l.b16 %v720
    %v2865 = vunpack.c.h.b16 %v720
    %v2866 = vunpack.c.l.b16 %v721
    %v2867 = vunpack.c.h.b16 %v721
    %v2868 = vunpack.c.l.b16 %v722
    %v2869 = vunpack.c.h.b16 %v722
    %v2870 = vunpack.c.l.b16 %v723
    %v2871 = vunpack.c.h.b16 %v723
    %v2872 = vunpack.c.l.b16 %v724
    %v2873 = vunpack.c.h.b16 %v724
    %v2874 = vunpack.c.l.b16 %v725
    %v2875 = vunpack.c.h.b16 %v725
    %v2876 = vunpack.c.l.b16 %v726
    %v2877 = vunpack.c.h.b16 %v726
    %v2878 = vunpack.c.l.b16 %v727
    %v2879 = vunpack.c.h.b16 %v727
    %v2880 = vunpack.c.l.b16 %v728
    %v2881 = vunpack.c.h.b16 %v728
    %v2882 = vunpack.c.l.b16 %v729
    %v2883 = vunpack.c.h.b16 %v729
    %v2884 = vunpack.c.l.b16 %v730
    %v2885 = vunpack.c.h.b16 %v730
    %v2886 = vunpack.c.l.b16 %v731
    %v2887 = vunpack.c.h.b16 %v731
    %v2888 = vunpack.c.l.b16 %v732
    %v2889 = vunpack.c.h.b16 %v732
    %v2890 = vunpack.c.l.b16 %v733
    %v2891 = vunpack.c.h.b16 %v733
    %v2892 = vunpack.c.l.b16 %v734
    %v2893 = vunpack.c.h.b16 %v734
    %v2894 = vunpack.c.l.b16 %v735
    %v2895 = vunpack.c.h.b16 %v735
    %v2896 = vunpack.c.l.b16 %v736
    %v2897 = vunpack.c.h.b16 %v736
    %v2898 = vunpack.c.l.b16 %v737
    %v2899 = vunpack.c.h.b16 %v737
    %v2900 = vunpack.c.l.b16 %v738
    %v2901 = vunpack.c.h.b16 %v738
    %v2902 = vunpack.c.l.b16 %v739
    %v2903 = vunpack.c.h.b16 %v739
    %v2904 = vunpack.c.l.b16 %v740
    %v2905 = vunpack.c.h.b16 %v740
    %v2906 = vunpack.c.l.b16 %v741
    %v2907 = vunpack.c.h.b16 %v741
    %v2908 = vunpack.c.l.b16 %v742
    %v2909 = vunpack.c.h.b16 %v742
    %v2910 = vunpack.c.l.b16 %v743
    %v2911 = vunpack.c.h.b16 %v743
    %v2912 = vunpack.c.l.b16 %v744
    %v2913 = vunpack.c.h.b16 %v744
    %v2914 = vunpack.c.l.b16 %v745
    %v2915 = vunpack.c.h.b16 %v745
    %v2916 = vunpack.c.l.b16 %v746
    %v2917 = vunpack.c.h.b16 %v746
    %v2918 = vunpack.c.l.b16 %v747
    %v2919 = vunpack.c.h.b16 %v747
    %v2920 = vunpack.c.l.b16 %v748
    %v2921 = vunpack.c.h.b16 %v748
    %v2922 = vunpack.c.l.b16 %v749
    %v2923 = vunpack.c.h.b16 %v749
    %v2924 = vunpack.c.l.b16 %v750
    %v2925 = vunpack.c.h.b16 %v750
    %v2926 = vunpack.c.l.b16 %v751
    %v2927 = vunpack.c.h.b16 %v751
    %v2928 = vunpack.c.l.b16 %v752
    %v2929 = vunpack.c.h.b16 %v752
    %v2930 = vunpack.c.l.b16 %v753
    %v2931 = vunpack.c.h.b16 %v753
    %v2932 = vunpack.c.l.b16 %v754
    %v2933 = vunpack.c.h.b16 %v754
    %v2934 = vunpack.c.l.b16 %v755
    %v2935 = vunpack.c.h.b16 %v755
    %v2936 = vunpack.c.l.b16 %v756
    %v2937 = vunpack.c.h.b16 %v756
    %v2938 = vunpack.c.l.b16 %v757
    %v2939 = vunpack.c.h.b16 %v757
    %v2940 = vunpack.c.l.b16 %v758
    %v2941 = vunpack.c.h.b16 %v758
    %v2942 = vunpack.c.l.b16 %v759
    %v2943 = vunpack.c.h.b16 %v759
    %v2944 = vunpack.c.l.b16 %v760
    %v2945 = vunpack.c.h.b16 %v760
    %v2946 = vunpack.c.l.b16 %v761
    %v2947 = vunpack.c.h.b16 %v761
    %v2948 = vunpack.c.l.b16 %v762
    %v2949 = vunpack.c.h.b16 %v762
    %v2950 = vunpack.c.l.b16 %v763
    %v2951 = vunpack.c.h.b16 %v763
    %v2952 = vunpack.c.l.b16 %v764
    %v2953 = vunpack.c.h.b16 %v764
    %v2954 = vunpack.c.l.b16 %v765
    %v2955 = vunpack.c.h.b16 %v765
    %v2956 = vunpack.c.l.b16 %v766
    %v2957 = vunpack.c.h.b16 %v766
    %v2958 = vunpack.c.l.b16 %v767
    %v2959 = vunpack.c.h.b16 %v767
    %v2960 = vunpack.c.l.b16 %v768
    %v2961 = vunpack.c.h.b16 %v768
    %v2962 = vunpack.c.l.b16 %v769
    %v2963 = vunpack.c.h.b16 %v769
    %v2964 = vunpack.c.l.b16 %v770
    %v2965 = vunpack.c.h.b16 %v770
    %v2966 = vunpack.c.l.b16 %v771
    %v2967 = vunpack.c.h.b16 %v771
    %v2968 = vunpack.c.l.b16 %v772
    %v2969 = vunpack.c.h.b16 %v772
    %v2970 = vunpack.c.l.b16 %v773
    %v2971 = vunpack.c.h.b16 %v773
    %v2972 = vunpack.c.l.b16 %v774
    %v2973 = vunpack.c.h.b16 %v774
    %v2974 = vunpack.c.l.b16 %v775
    %v2975 = vunpack.c.h.b16 %v775
    %v2976 = vunpack.c.l.b16 %v776
    %v2977 = vunpack.c.h.b16 %v776
    %v2978 = vunpack.c.l.b16 %v777
    %v2979 = vunpack.c.h.b16 %v777
    %v2980 = vunpack.c.l.b16 %v778
    %v2981 = vunpack.c.h.b16 %v778
    %v2982 = vunpack.c.l.b16 %v779
    %v2983 = vunpack.c.h.b16 %v779
    %v2984 = vunpack.c.l.b16 %v780
    %v2985 = vunpack.c.h.b16 %v780
    %v2986 = vunpack.c.l.b16 %v781
    %v2987 = vunpack.c.h.b16 %v781
    %v2988 = vunpack.c.l.b16 %v782
    %v2989 = vunpack.c.h.b16 %v782
    %v2990 = vunpack.c.l.b16 %v783
    %v2991 = vunpack.c.h.b16 %v783
    %v2992 = vunpack.c.l.b16 %v784
    %v2993 = vunpack.c.h.b16 %v784
    %v2994 = vunpack.c.l.b16 %v785
    %v2995 = vunpack.c.h.b16 %v785
    %v2996 = vunpack.c.l.b16 %v786
    %v2997 = vunpack.c.h.b16 %v786
    %v2998 = vunpack.c.l.b16 %v787
    %v2999 = vunpack.c.h.b16 %v787
    %v3000 = vunpack.c.l.b16 %v788
    %v3001 = vunpack.c.h.b16 %v788
    %v3002 = vunpack.c.l.b16 %v789
    %v3003 = vunpack.c.h.b16 %v789
    %v3004 = vunpack.c.l.b16 %v790
    %v3005 = vunpack.c.h.b16 %v790
    %v3006 = vunpack.c.l.b16 %v791
    %v3007 = vunpack.c.h.b16 %v791
    %v3008 = vunpack.c.l.b16 %v792
    %v3009 = vunpack.c.h.b16 %v792
    %v3010 = vunpack.c.l.b16 %v793
    %v3011 = vunpack.c.h.b16 %v793
    %v3012 = vunpack.c.l.b16 %v794
    %v3013 = vunpack.c.h.b16 %v794
    %v3014 = vunpack.c.l.b16 %v795
    %v3015 = vunpack.c.h.b16 %v795
    %v3016 = vunpack.c.l.b16 %v796
    %v3017 = vunpack.c.h.b16 %v796
    %v3018 = vunpack.c.l.b16 %v797
    %v3019 = vunpack.c.h.b16 %v797
    %v3020 = vunpack.c.l.b16 %v798
    %v3021 = vunpack.c.h.b16 %v798
    %v3022 = vunpack.c.l.b16 %v799
    %v3023 = vunpack.c.h.b16 %v799
    %v3024 = vunpack.c.l.b16 %v800
    %v3025 = vunpack.c.h.b16 %v800
    %v3026 = vunpack.c.l.b16 %v801
    %v3027 = vunpack.c.h.b16 %v801
    %v3028 = vunpack.c.l.b16 %v802
    %v3029 = vunpack.c.h.b16 %v802
    %v3030 = vunpack.c.l.b16 %v803
    %v3031 = vunpack.c.h.b16 %v803
    %v3032 = vunpack.c.l.b16 %v804
    %v3033 = vunpack.c.h.b16 %v804
    %v3034 = vunpack.c.l.b16 %v805
    %v3035 = vunpack.c.h.b16 %v805
    %v3036 = vunpack.c.l.b16 %v806
    %v3037 = vunpack.c.h.b16 %v806
    %v3038 = vunpack.c.l.b16 %v807
    %v3039 = vunpack.c.h.b16 %v807
    %v3040 = vunpack.c.l.b16 %v808
    %v3041 = vunpack.c.h.b16 %v808
    %v3042 = vunpack.c.l.b16 %v809
    %v3043 = vunpack.c.h.b16 %v809
    %v3044 = vunpack.c.l.b16 %v810
    %v3045 = vunpack.c.h.b16 %v810
    %v3046 = vunpack.c.l.b16 %v811
    %v3047 = vunpack.c.h.b16 %v811
    %v3048 = vunpack.c.l.b16 %v812
    %v3049 = vunpack.c.h.b16 %v812
    %v3050 = vunpack.c.l.b16 %v813
    %v3051 = vunpack.c.h.b16 %v813
    %v3052 = vunpack.c.l.b16 %v814
    %v3053 = vunpack.c.h.b16 %v814
    %v3054 = vunpack.c.l.b16 %v815
    %v3055 = vunpack.c.h.b16 %v815
    %v3056 = vunpack.c.l.b16 %v816
    %v3057 = vunpack.c.h.b16 %v816
    %v3058 = vunpack.c.l.b16 %v817
    %v3059 = vunpack.c.h.b16 %v817
    %v3060 = vunpack.c.l.b16 %v818
    %v3061 = vunpack.c.h.b16 %v818
    %v3062 = vunpack.c.l.b16 %v819
    %v3063 = vunpack.c.h.b16 %v819
    %v3064 = vunpack.c.l.b16 %v820
    %v3065 = vunpack.c.h.b16 %v820
    %v3066 = vunpack.c.l.b16 %v821
    %v3067 = vunpack.c.h.b16 %v821
    %v3068 = vunpack.c.l.b16 %v822
    %v3069 = vunpack.c.h.b16 %v822
    %v3070 = vunpack.c.l.b16 %v823
    %v3071 = vunpack.c.h.b16 %v823
    %v3072 = vunpack.c.l.b16 %v824
    %v3073 = vunpack.c.h.b16 %v824
    %v3074 = vunpack.c.l.b16 %v825
    %v3075 = vunpack.c.h.b16 %v825
    %v3076 = vunpack.c.l.b16 %v826
    %v3077 = vunpack.c.h.b16 %v826
    %v3078 = vunpack.c.l.b16 %v827
    %v3079 = vunpack.c.h.b16 %v827
    %v3080 = vunpack.c.l.b16 %v828
    %v3081 = vunpack.c.h.b16 %v828
    %v3082 = vunpack.c.l.b16 %v829
    %v3083 = vunpack.c.h.b16 %v829
    %v3084 = vunpack.c.l.b16 %v830
    %v3085 = vunpack.c.h.b16 %v830
    %v3086 = vunpack.c.l.b16 %v831
    %v3087 = vunpack.c.h.b16 %v831
    %v3088 = vunpack.c.l.b16 %v832
    %v3089 = vunpack.c.h.b16 %v832
    %v3090 = vunpack.c.l.b16 %v833
    %v3091 = vunpack.c.h.b16 %v833
    %v3092 = vunpack.c.l.b16 %v834
    %v3093 = vunpack.c.h.b16 %v834
    %v3094 = vunpack.c.l.b16 %v835
    %v3095 = vunpack.c.h.b16 %v835
    %v3096 = vunpack.c.l.b16 %v836
    %v3097 = vunpack.c.h.b16 %v836
    %v3098 = vunpack.c.l.b16 %v837
    %v3099 = vunpack.c.h.b16 %v837
    %v3100 = vunpack.c.l.b16 %v838
    %v3101 = vunpack.c.h.b16 %v838
    %v3102 = vunpack.c.l.b16 %v839
    %v3103 = vunpack.c.h.b16 %v839
    %v3104 = vunpack.c.l.b16 %v840
    %v3105 = vunpack.c.h.b16 %v840
    %v3106 = vunpack.c.l.b16 %v841
    %v3107 = vunpack.c.h.b16 %v841
    %v3108 = vunpack.c.l.b16 %v842
    %v3109 = vunpack.c.h.b16 %v842
    %v3110 = vunpack.c.l.b16 %v843
    %v3111 = vunpack.c.h.b16 %v843
    %v3112 = vunpack.c.l.b16 %v844
    %v3113 = vunpack.c.h.b16 %v844
    %v3114 = vunpack.c.l.b16 %v845
    %v3115 = vunpack.c.h.b16 %v845
    %v3116 = vunpack.c.l.b16 %v846
    %v3117 = vunpack.c.h.b16 %v846
    %v3118 = vunpack.c.l.b16 %v847
    %v3119 = vunpack.c.h.b16 %v847
    %v3120 = vunpack.c.l.b16 %v848
    %v3121 = vunpack.c.h.b16 %v848
    %v3122 = vunpack.c.l.b16 %v849
    %v3123 = vunpack.c.h.b16 %v849
    %v3124 = vunpack.c.l.b16 %v850
    %v3125 = vunpack.c.h.b16 %v850
    %v3126 = vunpack.c.l.b16 %v851
    %v3127 = vunpack.c.h.b16 %v851
    %v3128 = vunpack.c.l.b16 %v852
    %v3129 = vunpack.c.h.b16 %v852
    %v3130 = vunpack.c.l.b16 %v853
    %v3131 = vunpack.c.h.b16 %v853
    %v3132 = vunpack.c.l.b16 %v854
    %v3133 = vunpack.c.h.b16 %v854
    %v3134 = vunpack.c.l.b16 %v855
    %v3135 = vunpack.c.h.b16 %v855
    %v3136 = vunpack.c.l.b16 %v856
    %v3137 = vunpack.c.h.b16 %v856
    %v3138 = vunpack.c.l.b16 %v857
    %v3139 = vunpack.c.h.b16 %v857
    %v3140 = vunpack.c.l.b16 %v858
    %v3141 = vunpack.c.h.b16 %v858
    %v3142 = vunpack.c.l.b16 %v859
    %v3143 = vunpack.c.h.b16 %v859
    %v3144 = vunpack.c.l.b16 %v860
    %v3145 = vunpack.c.h.b16 %v860
    %v3146 = vunpack.c.l.b16 %v861
    %v3147 = vunpack.c.h.b16 %v861
    %v3148 = vunpack.c.l.b16 %v862
    %v3149 = vunpack.c.h.b16 %v862
    %v3150 = vunpack.c.l.b16 %v863
    %v3151 = vunpack.c.h.b16 %v863
    %v3152 = vunpack.c.l.b16 %v864
    %v3153 = vunpack.c.h.b16 %v864
    %v3154 = vunpack.c.l.b16 %v865
    %v3155 = vunpack.c.h.b16 %v865
    %v3156 = vunpack.c.l.b16 %v866
    %v3157 = vunpack.c.h.b16 %v866
    %v3158 = vunpack.c.l.b16 %v867
    %v3159 = vunpack.c.h.b16 %v867
    %v3160 = vunpack.c.l.b16 %v868
    %v3161 = vunpack.c.h.b16 %v868
    %v3162 = vunpack.c.l.b16 %v869
    %v3163 = vunpack.c.h.b16 %v869
    %v3164 = vunpack.c.l.b16 %v870
    %v3165 = vunpack.c.h.b16 %v870
    %v3166 = vunpack.c.l.b16 %v871
    %v3167 = vunpack.c.h.b16 %v871
    %v3168 = vunpack.c.l.b16 %v872
    %v3169 = vunpack.c.h.b16 %v872
    %v3170 = vunpack.c.l.b16 %v873
    %v3171 = vunpack.c.h.b16 %v873
    %v3172 = vunpack.c.l.b16 %v874
    %v3173 = vunpack.c.h.b16 %v874
    %v3174 = vunpack.c.l.b16 %v875
    %v3175 = vunpack.c.h.b16 %v875
    %v3176 = vunpack.c.l.b16 %v876
    %v3177 = vunpack.c.h.b16 %v876
    %v3178 = vunpack.c.l.b16 %v877
    %v3179 = vunpack.c.h.b16 %v877
    %v3180 = vunpack.c.l.b16 %v878
    %v3181 = vunpack.c.h.b16 %v878
    %v3182 = vunpack.c.l.b16 %v879
    %v3183 = vunpack.c.h.b16 %v879
    %v3184 = vunpack.c.l.b16 %v880
    %v3185 = vunpack.c.h.b16 %v880
    %v3186 = vunpack.c.l.b16 %v881
    %v3187 = vunpack.c.h.b16 %v881
    %v3188 = vunpack.c.l.b16 %v882
    %v3189 = vunpack.c.h.b16 %v882
    %v3190 = vunpack.c.l.b16 %v883
    %v3191 = vunpack.c.h.b16 %v883
    %v3192 = vunpack.c.l.b16 %v884
    %v3193 = vunpack.c.h.b16 %v884
    %v3194 = vunpack.c.l.b16 %v885
    %v3195 = vunpack.c.h.b16 %v885
    %v3196 = vunpack.c.l.b16 %v886
    %v3197 = vunpack.c.h.b16 %v886
    %v3198 = vunpack.c.l.b16 %v887
    %v3199 = vunpack.c.h.b16 %v887
    %v3200 = vunpack.c.l.b16 %v888
    %v3201 = vunpack.c.h.b16 %v888
    %v3202 = vunpack.c.l.b16 %v889
    %v3203 = vunpack.c.h.b16 %v889
    %v3204 = vunpack.c.l.b16 %v890
    %v3205 = vunpack.c.h.b16 %v890
    %v3206 = vunpack.c.l.b16 %v891
    %v3207 = vunpack.c.h.b16 %v891
    %v3208 = vunpack.c.l.b16 %v892
    %v3209 = vunpack.c.h.b16 %v892
    %v3210 = vunpack.c.l.b16 %v893
    %v3211 = vunpack.c.h.b16 %v893
    %v3212 = vunpack.c.l.b16 %v894
    %v3213 = vunpack.c.h.b16 %v894
    %v3214 = vunpack.c.l.b16 %v895
    %v3215 = vunpack.c.h.b16 %v895
    %v3216 = vunpack.c.l.b16 %v896
    %v3217 = vunpack.c.h.b16 %v896
    %v3218 = vunpack.c.l.b16 %v897
    %v3219 = vunpack.c.h.b16 %v897
    %v3220 = vunpack.c.l.b16 %v898
    %v3221 = vunpack.c.h.b16 %v898
    %v3222 = vunpack.c.l.b16 %v899
    %v3223 = vunpack.c.h.b16 %v899
    %v3224 = vunpack.c.l.b16 %v900
    %v3225 = vunpack.c.h.b16 %v900
    %v3226 = vunpack.c.l.b16 %v901
    %v3227 = vunpack.c.h.b16 %v901
    %v3228 = vunpack.c.l.b16 %v902
    %v3229 = vunpack.c.h.b16 %v902
    %v3230 = vunpack.c.l.b16 %v903
    %v3231 = vunpack.c.h.b16 %v903
    %v3232 = vunpack.c.l.b16 %v904
    %v3233 = vunpack.c.h.b16 %v904
    %v3234 = vunpack.c.l.b16 %v905
    %v3235 = vunpack.c.h.b16 %v905
    %v3236 = vunpack.c.l.b16 %v906
    %v3237 = vunpack.c.h.b16 %v906
    %v3238 = vunpack.c.l.b16 %v907
    %v3239 = vunpack.c.h.b16 %v907
    %v3240 = vunpack.c.l.b16 %v908
    %v3241 = vunpack.c.h.b16 %v908
    %v3242 = vunpack.c.l.b16 %v909
    %v3243 = vunpack.c.h.b16 %v909
    %v3244 = vpack.c.b16 %v1724, %v1708
    %v3245 = vpack.c.b16 %v1725, %v1709
    %v3246 = vpack.c.b16 %v1726, %v1710
    %v3247 = vpack.c.b16 %v1727, %v1711
    %v3248 = vpack.c.b16 %v1728, %v1712
    %v3249 = vpack.c.b16 %v1729, %v1713
    %v3250 = vpack.c.b16 %v1730, %v1714
    %v3251 = vpack.c.b16 %v1731, %v1715
    %v3252 = vpack.c.b16 %v1732, %v1716
    %v3253 = vpack.c.b16 %v1733, %v1717
    %v3254 = vpack.c.b16 %v1734, %v1718
    %v3255 = vpack.c.b16 %v1735, %v1719
    %v3256 = vpack.c.b16 %v1736, %v1720
    %v3257 = vpack.c.b16 %v1737, %v1721
    %v3258 = vpack.c.b16 %v1738, %v1722
    %v3259 = vpack.c.b16 %v1739, %v1723
    %v3260 = vpack.c.b16 %v1756, %v1740
    %v3261 = vpack.c.b16 %v1757, %v1741
    %v3262 = vpack.c.b16 %v1758, %v1742
    %v3263 = vpack.c.b16 %v1759, %v1743
    %v3264 = vpack.c.b16 %v1760, %v1744
    %v3265 = vpack.c.b16 %v1761, %v1745
    %v3266 = vpack.c.b16 %v1762, %v1746
    %v3267 = vpack.c.b16 %v1763, %v1747
    %v3268 = vpack.c.b16 %v1764, %v1748
    %v3269 = vpack.c.b16 %v1765, %v1749
    %v3270 = vpack.c.b16 %v1766, %v1750
    %v3271 = vpack.c.b16 %v1767, %v1751
    %v3272 = vpack.c.b16 %v1768, %v1752
    %v3273 = vpack.c.b16 %v1769, %v1753
    %v3274 = vpack.c.b16 %v1770, %v1754
    %v3275 = vpack.c.b16 %v1771, %v1755
    %v3276 = vpack.c.b16 %v1788, %v1772
    %v3277 = vpack.c.b16 %v1789, %v1773
    %v3278 = vpack.c.b16 %v1790, %v1774
    %v3279 = vpack.c.b16 %v1791, %v1775
    %v3280 = vpack.c.b16 %v1792, %v1776
    %v3281 = vpack.c.b16 %v1793, %v1777
    %v3282 = vpack.c.b16 %v1794, %v1778
    %v3283 = vpack.c.b16 %v1795, %v1779
    %v3284 = vpack.c.b16 %v1796, %v1780
    %v3285 = vpack.c.b16 %v1797, %v1781
    %v3286 = vpack.c.b16 %v1798, %v1782
    %v3287 = vpack.c.b16 %v1799, %v1783
    %v3288 = vpack.c.b16 %v1800, %v1784
    %v3289 = vpack.c.b16 %v1801, %v1785
    %v3290 = vpack.c.b16 %v1802, %v1786
    %v3291 = vpack.c.b16 %v1803, %v1787
    %v3292 = vpack.c.b16 %v1820, %v1804
    %v3293 = vpack.c.b16 %v1821, %v1805
    %v3294 = vpack.c.b16 %v1822, %v1806
    %v3295 = vpack.c.b16 %v1823, %v1807
    %v3296 = vpack.c.b16 %v1824, %v1808
    %v3297 = vpack.c.b16 %v1825, %v1809
    %v3298 = vpack.c.b16 %v1826, %v1810
    %v3299 = vpack.c.b16 %v1827, %v1811
    %v3300 = vpack.c.b16 %v1828, %v1812
    %v3301 = vpack.c.b16 %v1829, %v1813
    %v3302 = vpack.c.b16 %v1830, %v1814
    %v3303 = vpack.c.b16 %v1831, %v1815
    %v3304 = vpack.c.b16 %v1832, %v1816
    %v3305 = vpack.c.b16 %v1833, %v1817
    %v3306 = vpack.c.b16 %v1834, %v1818
    %v3307 = vpack.c.b16 %v1835, %v1819
    %v3308 = vpack.c.b16 %v1852, %v1836
    %v3309 = vpack.c.b16 %v1853, %v1837
    %v3310 = vpack.c.b16 %v1854, %v1838
    %v3311 = vpack.c.b16 %v1855, %v1839
    %v3312 = vpack.c.b16 %v1856, %v1840
    %v3313 = vpack.c.b16 %v1857, %v1841
    %v3314 = vpack.c.b16 %v1858, %v1842
    %v3315 = vpack.c.b16 %v1859, %v1843
    %v3316 = vpack.c.b16 %v1860, %v1844
    %v3317 = vpack.c.b16 %v1861, %v1845
    %v3318 = vpack.c.b16 %v1862, %v1846
    %v3319 = vpack.c.b16 %v1863, %v1847
    %v3320 = vpack.c.b16 %v1864, %v1848
    %v3321 = vpack.c.b16 %v1865, %v1849
    %v3322 = vpack.c.b16 %v1866, %v1850
    %v3323 = vpack.c.b16 %v1867, %v1851
    %v3324 = vpack.c.b16 %v1884, %v1868
    %v3325 = vpack.c.b16 %v1885, %v1869
    %v3326 = vpack.c.b16 %v1886, %v1870
    %v3327 = vpack.c.b16 %v1887, %v1871
    %v3328 = vpack.c.b16 %v1888, %v1872
    %v3329 = vpack.c.b16 %v1889, %v1873
    %v3330 = vpack.c.b16 %v1890, %v1874
    %v3331 = vpack.c.b16 %v1891, %v1875
    %v3332 = vpack.c.b16 %v1892, %v1876
    %v3333 = vpack.c.b16 %v1893, %v1877
    %v3334 = vpack.c.b16 %v1894, %v1878
    %v3335 = vpack.c.b16 %v1895, %v1879
    %v3336 = vpack.c.b16 %v1896, %v1880
    %v3337 = vpack.c.b16 %v1897, %v1881
    %v3338 = vpack.c.b16 %v1898, %v1882
    %v3339 = vpack.c.b16 %v1899, %v1883
    %v3340 = vpack.c.b16 %v1916, %v1900
    %v3341 = vpack.c.b16 %v1917, %v1901
    %v3342 = vpack.c.b16 %v1918, %v1902
    %v3343 = vpack.c.b16 %v1919, %v1903
    %v3344 = vpack.c.b16 %v1920, %v1904
    %v3345 = vpack.c.b16 %v1921, %v1905
    %v3346 = vpack.c.b16 %v1922, %v1906
    %v3347 = vpack.c.b16 %v1923, %v1907
    %v3348 = vpack.c.b16 %v1924, %v1908
    %v3349 = vpack.c.b16 %v1925, %v1909
    %v3350 = vpack.c.b16 %v1926, %v1910
    %v3351 = vpack.c.b16 %v1927, %v1911
    %v3352 = vpack.c.b16 %v1928, %v1912
    %v3353 = vpack.c.b16 %v1929, %v1913
    %v3354 = vpack.c.b16 %v1930, %v1914
    %v3355 = vpack.c.b16 %v1931, %v1915
    %v3356 = vpack.c.b16 %v1948, %v1932
    %v3357 = vpack.c.b16 %v1949, %v1933
    %v3358 = vpack.c.b16 %v1950, %v1934
    %v3359 = vpack.c.b16 %v1951, %v1935
    %v3360 = vpack.c.b16 %v1952, %v1936
    %v3361 = vpack.c.b16 %v1953, %v1937
    %v3362 = vpack.c.b16 %v1954, %v1938
    %v3363 = vpack.c.b16 %v1955, %v1939
    %v3364 = vpack.c.b16 %v1956, %v1940
    %v3365 = vpack.c.b16 %v1957, %v1941
    %v3366 = vpack.c.b16 %v1958, %v1942
    %v3367 = vpack.c.b16 %v1959, %v1943
    %v3368 = vpack.c.b16 %v1960, %v1944
    %v3369 = vpack.c.b16 %v1961, %v1945
    %v3370 = vpack.c.b16 %v1962, %v1946
    %v3371 = vpack.c.b16 %v1963, %v1947
    %v3372 = vpack.c.b16 %v1980, %v1964
    %v3373 = vpack.c.b16 %v1981, %v1965
    %v3374 = vpack.c.b16 %v1982, %v1966
    %v3375 = vpack.c.b16 %v1983, %v1967
    %v3376 = vpack.c.b16 %v1984, %v1968
    %v3377 = vpack.c.b16 %v1985, %v1969
    %v3378 = vpack.c.b16 %v1986, %v1970
    %v3379 = vpack.c.b16 %v1987, %v1971
    %v3380 = vpack.c.b16 %v1988, %v1972
    %v3381 = vpack.c.b16 %v1989, %v1973
    %v3382 = vpack.c.b16 %v1990, %v1974
    %v3383 = vpack.c.b16 %v1991, %v1975
    %v3384 = vpack.c.b16 %v1992, %v1976
    %v3385 = vpack.c.b16 %v1993, %v1977
    %v3386 = vpack.c.b16 %v1994, %v1978
    %v3387 = vpack.c.b16 %v1995, %v1979
    %v3388 = vpack.c.b16 %v2012, %v1996
    %v3389 = vpack.c.b16 %v2013, %v1997
    %v3390 = vpack.c.b16 %v2014, %v1998
    %v3391 = vpack.c.b16 %v2015, %v1999
    %v3392 = vpack.c.b16 %v2016, %v2000
    %v3393 = vpack.c.b16 %v2017, %v2001
    %v3394 = vpack.c.b16 %v2018, %v2002
    %v3395 = vpack.c.b16 %v2019, %v2003
    %v3396 = vpack.c.b16 %v2020, %v2004
    %v3397 = vpack.c.b16 %v2021, %v2005
    %v3398 = vpack.c.b16 %v2022, %v2006
    %v3399 = vpack.c.b16 %v2023, %v2007
    %v3400 = vpack.c.b16 %v2024, %v2008
    %v3401 = vpack.c.b16 %v2025, %v2009
    %v3402 = vpack.c.b16 %v2026, %v2010
    %v3403 = vpack.c.b16 %v2027, %v2011
    %v3404 = vpack.c.b16 %v2044, %v2028
    %v3405 = vpack.c.b16 %v2045, %v2029
    %v3406 = vpack.c.b16 %v2046, %v2030
    %v3407 = vpack.c.b16 %v2047, %v2031
    %v3408 = vpack.c.b16 %v2048, %v2032
    %v3409 = vpack.c.b16 %v2049, %v2033
    %v3410 = vpack.c.b16 %v2050, %v2034
    %v3411 = vpack.c.b16 %v2051, %v2035
    %v3412 = vpack.c.b16 %v2052, %v2036
    %v3413 = vpack.c.b16 %v2053, %v2037
    %v3414 = vpack.c.b16 %v2054, %v2038
    %v3415 = vpack.c.b16 %v2055, %v2039
    %v3416 = vpack.c.b16 %v2056, %v2040
    %v3417 = vpack.c.b16 %v2057, %v2041
    %v3418 = vpack.c.b16 %v2058, %v2042
    %v3419 = vpack.c.b16 %v2059, %v2043
    %v3420 = vpack.c.b16 %v2076, %v2060
    %v3421 = vpack.c.b16 %v2077, %v2061
    %v3422 = vpack.c.b16 %v2078, %v2062
    %v3423 = vpack.c.b16 %v2079, %v2063
    %v3424 = vpack.c.b16 %v2080, %v2064
    %v3425 = vpack.c.b16 %v2081, %v2065
    %v3426 = vpack.c.b16 %v2082, %v2066
    %v3427 = vpack.c.b16 %v2083, %v2067
    %v3428 = vpack.c.b16 %v2084, %v2068
    %v3429 = vpack.c.b16 %v2085, %v2069
    %v3430 = vpack.c.b16 %v2086, %v2070
    %v3431 = vpack.c.b16 %v2087, %v2071
    %v3432 = vpack.c.b16 %v2088, %v2072
    %v3433 = vpack.c.b16 %v2089, %v2073
    %v3434 = vpack.c.b16 %v2090, %v2074
    %v3435 = vpack.c.b16 %v2091, %v2075
    %v3436 = vpack.c.b16 %v2108, %v2092
    %v3437 = vpack.c.b16 %v2109, %v2093
    %v3438 = vpack.c.b16 %v2110, %v2094
    %v3439 = vpack.c.b16 %v2111, %v2095
    %v3440 = vpack.c.b16 %v2112, %v2096
    %v3441 = vpack.c.b16 %v2113, %v2097
    %v3442 = vpack.c.b16 %v2114, %v2098
    %v3443 = vpack.c.b16 %v2115, %v2099
    %v3444 = vpack.c.b16 %v2116, %v2100
    %v3445 = vpack.c.b16 %v2117, %v2101
    %v3446 = vpack.c.b16 %v2118, %v2102
    %v3447 = vpack.c.b16 %v2119, %v2103
    %v3448 = vpack.c.b16 %v2120, %v2104
    %v3449 = vpack.c.b16 %v2121, %v2105
    %v3450 = vpack.c.b16 %v2122, %v2106
    %v3451 = vpack.c.b16 %v2123, %v2107
    %v3452 = vpack.c.b16 %v2140, %v2124
    %v3453 = vpack.c.b16 %v2141, %v2125
    %v3454 = vpack.c.b16 %v2142, %v2126
    %v3455 = vpack.c.b16 %v2143, %v2127
    %v3456 = vpack.c.b16 %v2144, %v2128
    %v3457 = vpack.c.b16 %v2145, %v2129
    %v3458 = vpack.c.b16 %v2146, %v2130
    %v3459 = vpack.c.b16 %v2147, %v2131
    %v3460 = vpack.c.b16 %v2148, %v2132
    %v3461 = vpack.c.b16 %v2149, %v2133
    %v3462 = vpack.c.b16 %v2150, %v2134
    %v3463 = vpack.c.b16 %v2151, %v2135
    %v3464 = vpack.c.b16 %v2152, %v2136
    %v3465 = vpack.c.b16 %v2153, %v2137
    %v3466 = vpack.c.b16 %v2154, %v2138
    %v3467 = vpack.c.b16 %v2155, %v2139
    %v3468 = vpack.c.b16 %v2172, %v2156
    %v3469 = vpack.c.b16 %v2173, %v2157
    %v3470 = vpack.c.b16 %v2174, %v2158
    %v3471 = vpack.c.b16 %v2175, %v2159
    %v3472 = vpack.c.b16 %v2176, %v2160
    %v3473 = vpack.c.b16 %v2177, %v2161
    %v3474 = vpack.c.b16 %v2178, %v2162
    %v3475 = vpack.c.b16 %v2179, %v2163
    %v3476 = vpack.c.b16 %v2180, %v2164
    %v3477 = vpack.c.b16 %v2181, %v2165
    %v3478 = vpack.c.b16 %v2182, %v2166
    %v3479 = vpack.c.b16 %v2183, %v2167
    %v3480 = vpack.c.b16 %v2184, %v2168
    %v3481 = vpack.c.b16 %v2185, %v2169
    %v3482 = vpack.c.b16 %v2186, %v2170
    %v3483 = vpack.c.b16 %v2187, %v2171
    %v3484 = vpack.c.b16 %v2204, %v2188
    %v3485 = vpack.c.b16 %v2205, %v2189
    %v3486 = vpack.c.b16 %v2206, %v2190
    %v3487 = vpack.c.b16 %v2207, %v2191
    %v3488 = vpack.c.b16 %v2208, %v2192
    %v3489 = vpack.c.b16 %v2209, %v2193
    %v3490 = vpack.c.b16 %v2210, %v2194
    %v3491 = vpack.c.b16 %v2211, %v2195
    %v3492 = vpack.c.b16 %v2212, %v2196
    %v3493 = vpack.c.b16 %v2213, %v2197
    %v3494 = vpack.c.b16 %v2214, %v2198
    %v3495 = vpack.c.b16 %v2215, %v2199
    %v3496 = vpack.c.b16 %v2216, %v2200
    %v3497 = vpack.c.b16 %v2217, %v2201
    %v3498 = vpack.c.b16 %v2218, %v2202
    %v3499 = vpack.c.b16 %v2219, %v2203
    %v3500 = vpack.c.b16 %v2236, %v2220
    %v3501 = vpack.c.b16 %v2237, %v2221
    %v3502 = vpack.c.b16 %v2238, %v2222
    %v3503 = vpack.c.b16 %v2239, %v2223
    %v3504 = vpack.c.b16 %v2240, %v2224
    %v3505 = vpack.c.b16 %v2241, %v2225
    %v3506 = vpack.c.b16 %v2242, %v2226
    %v3507 = vpack.c.b16 %v2243, %v2227
    %v3508 = vpack.c.b16 %v2244, %v2228
    %v3509 = vpack.c.b16 %v2245, %v2229
    %v3510 = vpack.c.b16 %v2246, %v2230
    %v3511 = vpack.c.b16 %v2247, %v2231
    %v3512 = vpack.c.b16 %v2248, %v2232
    %v3513 = vpack.c.b16 %v2249, %v2233
    %v3514 = vpack.c.b16 %v2250, %v2234
    %v3515 = vpack.c.b16 %v2251, %v2235
    %v3516 = vpack.c.b16 %v2268, %v2252
    %v3517 = vpack.c.b16 %v2269, %v2253
    %v3518 = vpack.c.b16 %v2270, %v2254
    %v3519 = vpack.c.b16 %v2271, %v2255
    %v3520 = vpack.c.b16 %v2272, %v2256
    %v3521 = vpack.c.b16 %v2273, %v2257
    %v3522 = vpack.c.b16 %v2274, %v2258
    %v3523 = vpack.c.b16 %v2275, %v2259
    %v3524 = vpack.c.b16 %v2276, %v2260
    %v3525 = vpack.c.b16 %v2277, %v2261
    %v3526 = vpack.c.b16 %v2278, %v2262
    %v3527 = vpack.c.b16 %v2279, %v2263
    %v3528 = vpack.c.b16 %v2280, %v2264
    %v3529 = vpack.c.b16 %v2281, %v2265
    %v3530 = vpack.c.b16 %v2282, %v2266
    %v3531 = vpack.c.b16 %v2283, %v2267
    %v3532 = vpack.c.b16 %v2300, %v2284
    %v3533 = vpack.c.b16 %v2301, %v2285
    %v3534 = vpack.c.b16 %v2302, %v2286
    %v3535 = vpack.c.b16 %v2303, %v2287
    %v3536 = vpack.c.b16 %v2304, %v2288
    %v3537 = vpack.c.b16 %v2305, %v2289
    %v3538 = vpack.c.b16 %v2306, %v2290
    %v3539 = vpack.c.b16 %v2307, %v2291
    %v3540 = vpack.c.b16 %v2308, %v2292
    %v3541 = vpack.c.b16 %v2309, %v2293
    %v3542 = vpack.c.b16 %v2310, %v2294
    %v3543 = vpack.c.b16 %v2311, %v2295
    %v3544 = vpack.c.b16 %v2312, %v2296
    %v3545 = vpack.c.b16 %v2313, %v2297
    %v3546 = vpack.c.b16 %v2314, %v2298
    %v3547 = vpack.c.b16 %v2315, %v2299
    %v3548 = vpack.c.b16 %v2332, %v2316
    %v3549 = vpack.c.b16 %v2333, %v2317
    %v3550 = vpack.c.b16 %v2334, %v2318
    %v3551 = vpack.c.b16 %v2335, %v2319
    %v3552 = vpack.c.b16 %v2336, %v2320
    %v3553 = vpack.c.b16 %v2337, %v2321
    %v3554 = vpack.c.b16 %v2338, %v2322
    %v3555 = vpack.c.b16 %v2339, %v2323
    %v3556 = vpack.c.b16 %v2340, %v2324
    %v3557 = vpack.c.b16 %v2341, %v2325
    %v3558 = vpack.c.b16 %v2342, %v2326
    %v3559 = vpack.c.b16 %v2343, %v2327
    %v3560 = vpack.c.b16 %v2344, %v2328
    %v3561 = vpack.c.b16 %v2345, %v2329
    %v3562 = vpack.c.b16 %v2346, %v2330
    %v3563 = vpack.c.b16 %v2347, %v2331
    %v3564 = vpack.c.b16 %v2364, %v2348
    %v3565 = vpack.c.b16 %v2365, %v2349
    %v3566 = vpack.c.b16 %v2366, %v2350
    %v3567 = vpack.c.b16 %v2367, %v2351
    %v3568 = vpack.c.b16 %v2368, %v2352
    %v3569 = vpack.c.b16 %v2369, %v2353
    %v3570 = vpack.c.b16 %v2370, %v2354
    %v3571 = vpack.c.b16 %v2371, %v2355
    %v3572 = vpack.c.b16 %v2372, %v2356
    %v3573 = vpack.c.b16 %v2373, %v2357
    %v3574 = vpack.c.b16 %v2374, %v2358
    %v3575 = vpack.c.b16 %v2375, %v2359
    %v3576 = vpack.c.b16 %v2376, %v2360
    %v3577 = vpack.c.b16 %v2377, %v2361
    %v3578 = vpack.c.b16 %v2378, %v2362
    %v3579 = vpack.c.b16 %v2379, %v2363
    %v3580 = vpack.c.b16 %v2396, %v2380
    %v3581 = vpack.c.b16 %v2397, %v2381
    %v3582 = vpack.c.b16 %v2398, %v2382
    %v3583 = vpack.c.b16 %v2399, %v2383
    %v3584 = vpack.c.b16 %v2400, %v2384
    %v3585 = vpack.c.b16 %v2401, %v2385
    %v3586 = vpack.c.b16 %v2402, %v2386
    %v3587 = vpack.c.b16 %v2403, %v2387
    %v3588 = vpack.c.b16 %v2404, %v2388
    %v3589 = vpack.c.b16 %v2405, %v2389
    %v3590 = vpack.c.b16 %v2406, %v2390
    %v3591 = vpack.c.b16 %v2407, %v2391
    %v3592 = vpack.c.b16 %v2408, %v2392
    %v3593 = vpack.c.b16 %v2409, %v2393
    %v3594 = vpack.c.b16 %v2410, %v2394
    %v3595 = vpack.c.b16 %v2411, %v2395
    %v3596 = vpack.c.b16 %v2428, %v2412
    %v3597 = vpack.c.b16 %v2429, %v2413
    %v3598 = vpack.c.b16 %v2430, %v2414
    %v3599 = vpack.c.b16 %v2431, %v2415
    %v3600 = vpack.c.b16 %v2432, %v2416
    %v3601 = vpack.c.b16 %v2433, %v2417
    %v3602 = vpack.c.b16 %v2434, %v2418
    %v3603 = vpack.c.b16 %v2435, %v2419
    %v3604 = vpack.c.b16 %v2436, %v2420
    %v3605 = vpack.c.b16 %v2437, %v2421
    %v3606 = vpack.c.b16 %v2438, %v2422
    %v3607 = vpack.c.b16 %v2439, %v2423
    %v3608 = vpack.c.b16 %v2440, %v2424
    %v3609 = vpack.c.b16 %v2441, %v2425
    %v3610 = vpack.c.b16 %v2442, %v2426
    %v3611 = vpack.c.b16 %v2443, %v2427
    %v3612 = vpack.c.b16 %v2460, %v2444
    %v3613 = vpack.c.b16 %v2461, %v2445
    %v3614 = vpack.c.b16 %v2462, %v2446
    %v3615 = vpack.c.b16 %v2463, %v2447
    %v3616 = vpack.c.b16 %v2464, %v2448
    %v3617 = vpack.c.b16 %v2465, %v2449
    %v3618 = vpack.c.b16 %v2466, %v2450
    %v3619 = vpack.c.b16 %v2467, %v2451
    %v3620 = vpack.c.b16 %v2468, %v2452
    %v3621 = vpack.c.b16 %v2469, %v2453
    %v3622 = vpack.c.b16 %v2470, %v2454
    %v3623 = vpack.c.b16 %v2471, %v2455
    %v3624 = vpack.c.b16 %v2472, %v2456
    %v3625 = vpack.c.b16 %v2473, %v2457
    %v3626 = vpack.c.b16 %v2474, %v2458
    %v3627 = vpack.c.b16 %v2475, %v2459
    %v3628 = vpack.c.b16 %v2492, %v2476
    %v3629 = vpack.c.b16 %v2493, %v2477
    %v3630 = vpack.c.b16 %v2494, %v2478
    %v3631 = vpack.c.b16 %v2495, %v2479
    %v3632 = vpack.c.b16 %v2496, %v2480
    %v3633 = vpack.c.b16 %v2497, %v2481
    %v3634 = vpack.c.b16 %v2498, %v2482
    %v3635 = vpack.c.b16 %v2499, %v2483
    %v3636 = vpack.c.b16 %v2500, %v2484
    %v3637 = vpack.c.b16 %v2501, %v2485
    %v3638 = vpack.c.b16 %v2502, %v2486
    %v3639 = vpack.c.b16 %v2503, %v2487
    %v3640 = vpack.c.b16 %v2504, %v2488
    %v3641 = vpack.c.b16 %v2505, %v2489
    %v3642 = vpack.c.b16 %v2506, %v2490
    %v3643 = vpack.c.b16 %v2507, %v2491
    %v3644 = vpack.c.b16 %v2524, %v2508
    %v3645 = vpack.c.b16 %v2525, %v2509
    %v3646 = vpack.c.b16 %v2526, %v2510
    %v3647 = vpack.c.b16 %v2527, %v2511
    %v3648 = vpack.c.b16 %v2528, %v2512
    %v3649 = vpack.c.b16 %v2529, %v2513
    %v3650 = vpack.c.b16 %v2530, %v2514
    %v3651 = vpack.c.b16 %v2531, %v2515
    %v3652 = vpack.c.b16 %v2532, %v2516
    %v3653 = vpack.c.b16 %v2533, %v2517
    %v3654 = vpack.c.b16 %v2534, %v2518
    %v3655 = vpack.c.b16 %v2535, %v2519
    %v3656 = vpack.c.b16 %v2536, %v2520
    %v3657 = vpack.c.b16 %v2537, %v2521
    %v3658 = vpack.c.b16 %v2538, %v2522
    %v3659 = vpack.c.b16 %v2539, %v2523
    %v3660 = vpack.c.b16 %v2556, %v2540
    %v3661 = vpack.c.b16 %v2557, %v2541
    %v3662 = vpack.c.b16 %v2558, %v2542
    %v3663 = vpack.c.b16 %v2559, %v2543
    %v3664 = vpack.c.b16 %v2560, %v2544
    %v3665 = vpack.c.b16 %v2561, %v2545
    %v3666 = vpack.c.b16 %v2562, %v2546
    %v3667 = vpack.c.b16 %v2563, %v2547
    %v3668 = vpack.c.b16 %v2564, %v2548
    %v3669 = vpack.c.b16 %v2565, %v2549
    %v3670 = vpack.c.b16 %v2566, %v2550
    %v3671 = vpack.c.b16 %v2567, %v2551
    %v3672 = vpack.c.b16 %v2568, %v2552
    %v3673 = vpack.c.b16 %v2569, %v2553
    %v3674 = vpack.c.b16 %v2570, %v2554
    %v3675 = vpack.c.b16 %v2571, %v2555
    %v3676 = vpack.c.b16 %v2588, %v2572
    %v3677 = vpack.c.b16 %v2589, %v2573
    %v3678 = vpack.c.b16 %v2590, %v2574
    %v3679 = vpack.c.b16 %v2591, %v2575
    %v3680 = vpack.c.b16 %v2592, %v2576
    %v3681 = vpack.c.b16 %v2593, %v2577
    %v3682 = vpack.c.b16 %v2594, %v2578
    %v3683 = vpack.c.b16 %v2595, %v2579
    %v3684 = vpack.c.b16 %v2596, %v2580
    %v3685 = vpack.c.b16 %v2597, %v2581
    %v3686 = vpack.c.b16 %v2598, %v2582
    %v3687 = vpack.c.b16 %v2599, %v2583
    %v3688 = vpack.c.b16 %v2600, %v2584
    %v3689 = vpack.c.b16 %v2601, %v2585
    %v3690 = vpack.c.b16 %v2602, %v2586
    %v3691 = vpack.c.b16 %v2603, %v2587
    %v3692 = vpack.c.b16 %v2620, %v2604
    %v3693 = vpack.c.b16 %v2621, %v2605
    %v3694 = vpack.c.b16 %v2622, %v2606
    %v3695 = vpack.c.b16 %v2623, %v2607
    %v3696 = vpack.c.b16 %v2624, %v2608
    %v3697 = vpack.c.b16 %v2625, %v2609
    %v3698 = vpack.c.b16 %v2626, %v2610
    %v3699 = vpack.c.b16 %v2627, %v2611
    %v3700 = vpack.c.b16 %v2628, %v2612
    %v3701 = vpack.c.b16 %v2629, %v2613
    %v3702 = vpack.c.b16 %v2630, %v2614
    %v3703 = vpack.c.b16 %v2631, %v2615
    %v3704 = vpack.c.b16 %v2632, %v2616
    %v3705 = vpack.c.b16 %v2633, %v2617
    %v3706 = vpack.c.b16 %v2634, %v2618
    %v3707 = vpack.c.b16 %v2635, %v2619
    %v3708 = vpack.c.b16 %v2652, %v2636
    %v3709 = vpack.c.b16 %v2653, %v2637
    %v3710 = vpack.c.b16 %v2654, %v2638
    %v3711 = vpack.c.b16 %v2655, %v2639
    %v3712 = vpack.c.b16 %v2656, %v2640
    %v3713 = vpack.c.b16 %v2657, %v2641
    %v3714 = vpack.c.b16 %v2658, %v2642
    %v3715 = vpack.c.b16 %v2659, %v2643
    %v3716 = vpack.c.b16 %v2660, %v2644
    %v3717 = vpack.c.b16 %v2661, %v2645
    %v3718 = vpack.c.b16 %v2662, %v2646
    %v3719 = vpack.c.b16 %v2663, %v2647
    %v3720 = vpack.c.b16 %v2664, %v2648
    %v3721 = vpack.c.b16 %v2665, %v2649
    %v3722 = vpack.c.b16 %v2666, %v2650
    %v3723 = vpack.c.b16 %v2667, %v2651
    %v3724 = vpack.c.b16 %v2684, %v2668
    %v3725 = vpack.c.b16 %v2685, %v2669
    %v3726 = vpack.c.b16 %v2686, %v2670
    %v3727 = vpack.c.b16 %v2687, %v2671
    %v3728 = vpack.c.b16 %v2688, %v2672
    %v3729 = vpack.c.b16 %v2689, %v2673
    %v3730 = vpack.c.b16 %v2690, %v2674
    %v3731 = vpack.c.b16 %v2691, %v2675
    %v3732 = vpack.c.b16 %v2692, %v2676
    %v3733 = vpack.c.b16 %v2693, %v2677
    %v3734 = vpack.c.b16 %v2694, %v2678
    %v3735 = vpack.c.b16 %v2695, %v2679
    %v3736 = vpack.c.b16 %v2696, %v2680
    %v3737 = vpack.c.b16 %v2697, %v2681
    %v3738 = vpack.c.b16 %v2698, %v2682
    %v3739 = vpack.c.b16 %v2699, %v2683
    %v3740 = vpack.c.b16 %v2716, %v2700
    %v3741 = vpack.c.b16 %v2717, %v2701
    %v3742 = vpack.c.b16 %v2718, %v2702
    %v3743 = vpack.c.b16 %v2719, %v2703
    %v3744 = vpack.c.b16 %v2720, %v2704
    %v3745 = vpack.c.b16 %v2721, %v2705
    %v3746 = vpack.c.b16 %v2722, %v2706
    %v3747 = vpack.c.b16 %v2723, %v2707
    %v3748 = vpack.c.b16 %v2724, %v2708
    %v3749 = vpack.c.b16 %v2725, %v2709
    %v3750 = vpack.c.b16 %v2726, %v2710
    %v3751 = vpack.c.b16 %v2727, %v2711
    %v3752 = vpack.c.b16 %v2728, %v2712
    %v3753 = vpack.c.b16 %v2729, %v2713
    %v3754 = vpack.c.b16 %v2730, %v2714
    %v3755 = vpack.c.b16 %v2731, %v2715
    %v3756 = vpack.c.b16 %v2748, %v2732
    %v3757 = vpack.c.b16 %v2749, %v2733
    %v3758 = vpack.c.b16 %v2750, %v2734
    %v3759 = vpack.c.b16 %v2751, %v2735
    %v3760 = vpack.c.b16 %v2752, %v2736
    %v3761 = vpack.c.b16 %v2753, %v2737
    %v3762 = vpack.c.b16 %v2754, %v2738
    %v3763 = vpack.c.b16 %v2755, %v2739
    %v3764 = vpack.c.b16 %v2756, %v2740
    %v3765 = vpack.c.b16 %v2757, %v2741
    %v3766 = vpack.c.b16 %v2758, %v2742
    %v3767 = vpack.c.b16 %v2759, %v2743
    %v3768 = vpack.c.b16 %v2760, %v2744
    %v3769 = vpack.c.b16 %v2761, %v2745
    %v3770 = vpack.c.b16 %v2762, %v2746
    %v3771 = vpack.c.b16 %v2763, %v2747
    %v3772 = vpack.c.b16 %v2780, %v2764
    %v3773 = vpack.c.b16 %v2781, %v2765
    %v3774 = vpack.c.b16 %v2782, %v2766
    %v3775 = vpack.c.b16 %v2783, %v2767
    %v3776 = vpack.c.b16 %v2784, %v2768
    %v3777 = vpack.c.b16 %v2785, %v2769
    %v3778 = vpack.c.b16 %v2786, %v2770
    %v3779 = vpack.c.b16 %v2787, %v2771
    %v3780 = vpack.c.b16 %v2788, %v2772
    %v3781 = vpack.c.b16 %v2789, %v2773
    %v3782 = vpack.c.b16 %v2790, %v2774
    %v3783 = vpack.c.b16 %v2791, %v2775
    %v3784 = vpack.c.b16 %v2792, %v2776
    %v3785 = vpack.c.b16 %v2793, %v2777
    %v3786 = vpack.c.b16 %v2794, %v2778
    %v3787 = vpack.c.b16 %v2795, %v2779
    %v3788 = vpack.c.b16 %v2812, %v2796
    %v3789 = vpack.c.b16 %v2813, %v2797
    %v3790 = vpack.c.b16 %v2814, %v2798
    %v3791 = vpack.c.b16 %v2815, %v2799
    %v3792 = vpack.c.b16 %v2816, %v2800
    %v3793 = vpack.c.b16 %v2817, %v2801
    %v3794 = vpack.c.b16 %v2818, %v2802
    %v3795 = vpack.c.b16 %v2819, %v2803
    %v3796 = vpack.c.b16 %v2820, %v2804
    %v3797 = vpack.c.b16 %v2821, %v2805
    %v3798 = vpack.c.b16 %v2822, %v2806
    %v3799 = vpack.c.b16 %v2823, %v2807
    %v3800 = vpack.c.b16 %v2824, %v2808
    %v3801 = vpack.c.b16 %v2825, %v2809
    %v3802 = vpack.c.b16 %v2826, %v2810
    %v3803 = vpack.c.b16 %v2827, %v2811
    %v3804 = vpack.c.b16 %v2844, %v2828
    %v3805 = vpack.c.b16 %v2845, %v2829
    %v3806 = vpack.c.b16 %v2846, %v2830
    %v3807 = vpack.c.b16 %v2847, %v2831
    %v3808 = vpack.c.b16 %v2848, %v2832
    %v3809 = vpack.c.b16 %v2849, %v2833
    %v3810 = vpack.c.b16 %v2850, %v2834
    %v3811 = vpack.c.b16 %v2851, %v2835
    %v3812 = vpack.c.b16 %v2852, %v2836
    %v3813 = vpack.c.b16 %v2853, %v2837
    %v3814 = vpack.c.b16 %v2854, %v2838
    %v3815 = vpack.c.b16 %v2855, %v2839
    %v3816 = vpack.c.b16 %v2856, %v2840
    %v3817 = vpack.c.b16 %v2857, %v2841
    %v3818 = vpack.c.b16 %v2858, %v2842
    %v3819 = vpack.c.b16 %v2859, %v2843
    %v3820 = vpack.c.b16 %v2876, %v2860
    %v3821 = vpack.c.b16 %v2877, %v2861
    %v3822 = vpack.c.b16 %v2878, %v2862
    %v3823 = vpack.c.b16 %v2879, %v2863
    %v3824 = vpack.c.b16 %v2880, %v2864
    %v3825 = vpack.c.b16 %v2881, %v2865
    %v3826 = vpack.c.b16 %v2882, %v2866
    %v3827 = vpack.c.b16 %v2883, %v2867
    %v3828 = vpack.c.b16 %v2884, %v2868
    %v3829 = vpack.c.b16 %v2885, %v2869
    %v3830 = vpack.c.b16 %v2886, %v2870
    %v3831 = vpack.c.b16 %v2887, %v2871
    %v3832 = vpack.c.b16 %v2888, %v2872
    %v3833 = vpack.c.b16 %v2889, %v2873
    %v3834 = vpack.c.b16 %v2890, %v2874
    %v3835 = vpack.c.b16 %v2891, %v2875
    %v3836 = vpack.c.b16 %v2908, %v2892
    %v3837 = vpack.c.b16 %v2909, %v2893
    %v3838 = vpack.c.b16 %v2910, %v2894
    %v3839 = vpack.c.b16 %v2911, %v2895
    %v3840 = vpack.c.b16 %v2912, %v2896
    %v3841 = vpack.c.b16 %v2913, %v2897
    %v3842 = vpack.c.b16 %v2914, %v2898
    %v3843 = vpack.c.b16 %v2915, %v2899
    %v3844 = vpack.c.b16 %v2916, %v2900
    %v3845 = vpack.c.b16 %v2917, %v2901
    %v3846 = vpack.c.b16 %v2918, %v2902
    %v3847 = vpack.c.b16 %v2919, %v2903
    %v3848 = vpack.c.b16 %v2920, %v2904
    %v3849 = vpack.c.b16 %v2921, %v2905
    %v3850 = vpack.c.b16 %v2922, %v2906
    %v3851 = vpack.c.b16 %v2923, %v2907
    %v3852 = vpack.c.b16 %v2940, %v2924
    %v3853 = vpack.c.b16 %v2941, %v2925
    %v3854 = vpack.c.b16 %v2942, %v2926
    %v3855 = vpack.c.b16 %v2943, %v2927
    %v3856 = vpack.c.b16 %v2944, %v2928
    %v3857 = vpack.c.b16 %v2945, %v2929
    %v3858 = vpack.c.b16 %v2946, %v2930
    %v3859 = vpack.c.b16 %v2947, %v2931
    %v3860 = vpack.c.b16 %v2948, %v2932
    %v3861 = vpack.c.b16 %v2949, %v2933
    %v3862 = vpack.c.b16 %v2950, %v2934
    %v3863 = vpack.c.b16 %v2951, %v2935
    %v3864 = vpack.c.b16 %v2952, %v2936
    %v3865 = vpack.c.b16 %v2953, %v2937
    %v3866 = vpack.c.b16 %v2954, %v2938
    %v3867 = vpack.c.b16 %v2955, %v2939
    %v3868 = vpack.c.b16 %v2972, %v2956
    %v3869 = vpack.c.b16 %v2973, %v2957
    %v3870 = vpack.c.b16 %v2974, %v2958
    %v3871 = vpack.c.b16 %v2975, %v2959
    %v3872 = vpack.c.b16 %v2976, %v2960
    %v3873 = vpack.c.b16 %v2977, %v2961
    %v3874 = vpack.c.b16 %v2978, %v2962
    %v3875 = vpack.c.b16 %v2979, %v2963
    %v3876 = vpack.c.b16 %v2980, %v2964
    %v3877 = vpack.c.b16 %v2981, %v2965
    %v3878 = vpack.c.b16 %v2982, %v2966
    %v3879 = vpack.c.b16 %v2983, %v2967
    %v3880 = vpack.c.b16 %v2984, %v2968
    %v3881 = vpack.c.b16 %v2985, %v2969
    %v3882 = vpack.c.b16 %v2986, %v2970
    %v3883 = vpack.c.b16 %v2987, %v2971
    %v3884 = vpack.c.b16 %v3004, %v2988
    %v3885 = vpack.c.b16 %v3005, %v2989
    %v3886 = vpack.c.b16 %v3006, %v2990
    %v3887 = vpack.c.b16 %v3007, %v2991
    %v3888 = vpack.c.b16 %v3008, %v2992
    %v3889 = vpack.c.b16 %v3009, %v2993
    %v3890 = vpack.c.b16 %v3010, %v2994
    %v3891 = vpack.c.b16 %v3011, %v2995
    %v3892 = vpack.c.b16 %v3012, %v2996
    %v3893 = vpack.c.b16 %v3013, %v2997
    %v3894 = vpack.c.b16 %v3014, %v2998
    %v3895 = vpack.c.b16 %v3015, %v2999
    %v3896 = vpack.c.b16 %v3016, %v3000
    %v3897 = vpack.c.b16 %v3017, %v3001
    %v3898 = vpack.c.b16 %v3018, %v3002
    %v3899 = vpack.c.b16 %v3019, %v3003
    %v3900 = vpack.c.b16 %v3036, %v3020
    %v3901 = vpack.c.b16 %v3037, %v3021
    %v3902 = vpack.c.b16 %v3038, %v3022
    %v3903 = vpack.c.b16 %v3039, %v3023
    %v3904 = vpack.c.b16 %v3040, %v3024
    %v3905 = vpack.c.b16 %v3041, %v3025
    %v3906 = vpack.c.b16 %v3042, %v3026
    %v3907 = vpack.c.b16 %v3043, %v3027
    %v3908 = vpack.c.b16 %v3044, %v3028
    %v3909 = vpack.c.b16 %v3045, %v3029
    %v3910 = vpack.c.b16 %v3046, %v3030
    %v3911 = vpack.c.b16 %v3047, %v3031
    %v3912 = vpack.c.b16 %v3048, %v3032
    %v3913 = vpack.c.b16 %v3049, %v3033
    %v3914 = vpack.c.b16 %v3050, %v3034
    %v3915 = vpack.c.b16 %v3051, %v3035
    %v3916 = vpack.c.b16 %v3068, %v3052
    %v3917 = vpack.c.b16 %v3069, %v3053
    %v3918 = vpack.c.b16 %v3070, %v3054
    %v3919 = vpack.c.b16 %v3071, %v3055
    %v3920 = vpack.c.b16 %v3072, %v3056
    %v3921 = vpack.c.b16 %v3073, %v3057
    %v3922 = vpack.c.b16 %v3074, %v3058
    %v3923 = vpack.c.b16 %v3075, %v3059
    %v3924 = vpack.c.b16 %v3076, %v3060
    %v3925 = vpack.c.b16 %v3077, %v3061
    %v3926 = vpack.c.b16 %v3078, %v3062
    %v3927 = vpack.c.b16 %v3079, %v3063
    %v3928 = vpack.c.b16 %v3080, %v3064
    %v3929 = vpack.c.b16 %v3081, %v3065
    %v3930 = vpack.c.b16 %v3082, %v3066
    %v3931 = vpack.c.b16 %v3083, %v3067
    %v3932 = vpack.c.b16 %v3100, %v3084
    %v3933 = vpack.c.b16 %v3101, %v3085
    %v3934 = vpack.c.b16 %v3102, %v3086
    %v3935 = vpack.c.b16 %v3103, %v3087
    %v3936 = vpack.c.b16 %v3104, %v3088
    %v3937 = vpack.c.b16 %v3105, %v3089
    %v3938 = vpack.c.b16 %v3106, %v3090
    %v3939 = vpack.c.b16 %v3107, %v3091
    %v3940 = vpack.c.b16 %v3108, %v3092
    %v3941 = vpack.c.b16 %v3109, %v3093
    %v3942 = vpack.c.b16 %v3110, %v3094
    %v3943 = vpack.c.b16 %v3111, %v3095
    %v3944 = vpack.c.b16 %v3112, %v3096
    %v3945 = vpack.c.b16 %v3113, %v3097
    %v3946 = vpack.c.b16 %v3114, %v3098
    %v3947 = vpack.c.b16 %v3115, %v3099
    %v3948 = vpack.c.b16 %v3132, %v3116
    %v3949 = vpack.c.b16 %v3133, %v3117
    %v3950 = vpack.c.b16 %v3134, %v3118
    %v3951 = vpack.c.b16 %v3135, %v3119
    %v3952 = vpack.c.b16 %v3136, %v3120
    %v3953 = vpack.c.b16 %v3137, %v3121
    %v3954 = vpack.c.b16 %v3138, %v3122
    %v3955 = vpack.c.b16 %v3139, %v3123
    %v3956 = vpack.c.b16 %v3140, %v3124
    %v3957 = vpack.c.b16 %v3141, %v3125
    %v3958 = vpack.c.b16 %v3142, %v3126
    %v3959 = vpack.c.b16 %v3143, %v3127
    %v3960 = vpack.c.b16 %v3144, %v3128
    %v3961 = vpack.c.b16 %v3145, %v3129
    %v3962 = vpack.c.b16 %v3146, %v3130
    %v3963 = vpack.c.b16 %v3147, %v3131
    %v3964 = vpack.c.b16 %v3164, %v3148
    %v3965 = vpack.c.b16 %v3165, %v3149
    %v3966 = vpack.c.b16 %v3166, %v3150
    %v3967 = vpack.c.b16 %v3167, %v3151
    %v3968 = vpack.c.b16 %v3168, %v3152
    %v3969 = vpack.c.b16 %v3169, %v3153
    %v3970 = vpack.c.b16 %v3170, %v3154
    %v3971 = vpack.c.b16 %v3171, %v3155
    %v3972 = vpack.c.b16 %v3172, %v3156
    %v3973 = vpack.c.b16 %v3173, %v3157
    %v3974 = vpack.c.b16 %v3174, %v3158
    %v3975 = vpack.c.b16 %v3175, %v3159
    %v3976 = vpack.c.b16 %v3176, %v3160
    %v3977 = vpack.c.b16 %v3177, %v3161
    %v3978 = vpack.c.b16 %v3178, %v3162
    %v3979 = vpack.c.b16 %v3179, %v3163
    %v3980 = vpack.c.b16 %v3196, %v3180
    %v3981 = vpack.c.b16 %v3197, %v3181
    %v3982 = vpack.c.b16 %v3198, %v3182
    %v3983 = vpack.c.b16 %v3199, %v3183
    %v3984 = vpack.c.b16 %v3200, %v3184
    %v3985 = vpack.c.b16 %v3201, %v3185
    %v3986 = vpack.c.b16 %v3202, %v3186
    %v3987 = vpack.c.b16 %v3203, %v3187
    %v3988 = vpack.c.b16 %v3204, %v3188
    %v3989 = vpack.c.b16 %v3205, %v3189
    %v3990 = vpack.c.b16 %v3206, %v3190
    %v3991 = vpack.c.b16 %v3207, %v3191
    %v3992 = vpack.c.b16 %v3208, %v3192
    %v3993 = vpack.c.b16 %v3209, %v3193
    %v3994 = vpack.c.b16 %v3210, %v3194
    %v3995 = vpack.c.b16 %v3211, %v3195
    %v3996 = vpack.c.b16 %v3228, %v3212
    %v3997 = vpack.c.b16 %v3229, %v3213
    %v3998 = vpack.c.b16 %v3230, %v3214
    %v3999 = vpack.c.b16 %v3231, %v3215
    %v4000 = vpack.c.b16 %v3232, %v3216
    %v4001 = vpack.c.b16 %v3233, %v3217
    %v4002 = vpack.c.b16 %v3234, %v3218
    %v4003 = vpack.c.b16 %v3235, %v3219
    %v4004 = vpack.c.b16 %v3236, %v3220
    %v4005 = vpack.c.b16 %v3237, %v3221
    %v4006 = vpack.c.b16 %v3238, %v3222
    %v4007 = vpack.c.b16 %v3239, %v3223
    %v4008 = vpack.c.b16 %v3240, %v3224
    %v4009 = vpack.c.b16 %v3241, %v3225
    %v4010 = vpack.c.b16 %v3242, %v3226
    %v4011 = vpack.c.b16 %v3243, %v3227
    %4780 = vmatprep.subr.bf16.mxu0 %v3357
    %4781 = vmatpush1.bf16.msra.mxu0 %v3356
    %4782 = vmatprep.subr.bf16.mxu0 %v3341
    %4783 = vmatpush1.bf16.msra.mxu0 %v3340
    %4784 = vmatprep.subr.bf16.mxu0 %v3325
    %4785 = vmatpush1.bf16.msra.mxu0 %v3324
    %4786 = vmatprep.subr.bf16.mxu0 %v3309
    %4787 = vmatpush1.bf16.msra.mxu0 %v3308
    %4788 = vmatprep.subr.bf16.mxu0 %v3293
    %4789 = vmatpush1.bf16.msra.mxu0 %v3292
    %4790 = vmatprep.subr.bf16.mxu0 %v3277
    %4791 = vmatpush1.bf16.msra.mxu0 %v3276
    %4792 = vmatprep.subr.bf16.mxu0 %v3261
    %4793 = vmatpush1.bf16.msra.mxu0 %v3260
    %4794 = vmatprep.subr.bf16.mxu0 %v3245
    %4795 = vmatpush1.bf16.msra.mxu0 %v3244
    %4796 = vmatprep.subr.bf16.mxu0 %v3485
    %4797 = vmatpush2.bf16.msra.mxu0 %v3484
    %4798 = vmatprep.subr.bf16.mxu0 %v3469
    %4799 = vmatpush2.bf16.msra.mxu0 %v3468
    %4800 = vmatprep.subr.bf16.mxu0 %v3453
    %4801 = vmatpush2.bf16.msra.mxu0 %v3452
    %4802 = vmatprep.subr.bf16.mxu0 %v3437
    %4803 = vmatpush2.bf16.msra.mxu0 %v3436
    %4804 = vmatprep.subr.bf16.mxu0 %v3421
    %4805 = vmatpush2.bf16.msra.mxu0 %v3420
    %4806 = vmatprep.subr.bf16.mxu0 %v3405
    %4807 = vmatpush2.bf16.msra.mxu0 %v3404
    %4808 = vmatprep.subr.bf16.mxu0 %v3389
    %4809 = vmatpush2.bf16.msra.mxu0 %v3388
    %4810 = vmatprep.subr.bf16.mxu0 %v3373
    %4811 = vmatpush2.bf16.msra.mxu0 %v3372
    %4812 = vmatprep.mubr.bf16.mxu0 %v929
    %4813 = vmatmul.mubr.bf16.gmra.mxu0 %v928
    %v4814 = vpop.f32.mrf.mxu0
    %v4815 = vadd.f32 0.0, %v4814
    %v4816 = vpop.f32.mrf.mxu0
    %v4817 = vadd.f32 0.0, %v4816
    %v4818 = vpop.f32.mrf.mxu0
    %v4819 = vadd.f32 0.0, %v4818
    %v4820 = vpop.f32.mrf.mxu0
    %v4821 = vadd.f32 0.0, %v4820
    %4822 = vdwg.mxu0
    %4823 = vmatprep.subr.bf16.mxu0 %v3613
    %4824 = vmatpush1.bf16.msra.mxu0 %v3612
    %4825 = vmatprep.subr.bf16.mxu0 %v3597
    %4826 = vmatpush1.bf16.msra.mxu0 %v3596
    %4827 = vmatprep.subr.bf16.mxu0 %v3581
    %4828 = vmatpush1.bf16.msra.mxu0 %v3580
    %4829 = vmatprep.subr.bf16.mxu0 %v3565
    %4830 = vmatpush1.bf16.msra.mxu0 %v3564
    %4831 = vmatprep.subr.bf16.mxu0 %v3549
    %4832 = vmatpush1.bf16.msra.mxu0 %v3548
    %4833 = vmatprep.subr.bf16.mxu0 %v3533
    %4834 = vmatpush1.bf16.msra.mxu0 %v3532
    %4835 = vmatprep.subr.bf16.mxu0 %v3517
    %4836 = vmatpush1.bf16.msra.mxu0 %v3516
    %4837 = vmatprep.subr.bf16.mxu0 %v3501
    %4838 = vmatpush1.bf16.msra.mxu0 %v3500
    %4839 = vmatprep.subr.bf16.mxu0 %v3741
    %4840 = vmatpush2.bf16.msra.mxu0 %v3740
    %4841 = vmatprep.subr.bf16.mxu0 %v3725
    %4842 = vmatpush2.bf16.msra.mxu0 %v3724
    %4843 = vmatprep.subr.bf16.mxu0 %v3709
    %4844 = vmatpush2.bf16.msra.mxu0 %v3708
    %4845 = vmatprep.subr.bf16.mxu0 %v3693
    %4846 = vmatpush2.bf16.msra.mxu0 %v3692
    %4847 = vmatprep.subr.bf16.mxu0 %v3677
    %4848 = vmatpush2.bf16.msra.mxu0 %v3676
    %4849 = vmatprep.subr.bf16.mxu0 %v3661
    %4850 = vmatpush2.bf16.msra.mxu0 %v3660
    %4851 = vmatprep.subr.bf16.mxu0 %v3645
    %4852 = vmatpush2.bf16.msra.mxu0 %v3644
    %4853 = vmatprep.subr.bf16.mxu0 %v3629
    %4854 = vmatpush2.bf16.msra.mxu0 %v3628
    %4855 = vmatprep.mubr.bf16.mxu0 %v931
    %4856 = vmatmul.mubr.bf16.gmra.mxu0 %v930
    %v4857 = vpop.f32.mrf.mxu0
    %v4858 = vadd.f32 %v4815, %v4857
    %v4859 = vpop.f32.mrf.mxu0
    %v4860 = vadd.f32 %v4817, %v4859
    %v4861 = vpop.f32.mrf.mxu0
    %v4862 = vadd.f32 %v4819, %v4861
    %v4863 = vpop.f32.mrf.mxu0
    %v4864 = vadd.f32 %v4821, %v4863
    %4865 = vdwg.mxu0
    %4866 = vmatprep.subr.bf16.mxu0 %v3869
    %4867 = vmatpush1.bf16.msra.mxu0 %v3868
    %4868 = vmatprep.subr.bf16.mxu0 %v3853
    %4869 = vmatpush1.bf16.msra.mxu0 %v3852
    %4870 = vmatprep.subr.bf16.mxu0 %v3837
    %4871 = vmatpush1.bf16.msra.mxu0 %v3836
    %4872 = vmatprep.subr.bf16.mxu0 %v3821
    %4873 = vmatpush1.bf16.msra.mxu0 %v3820
    %4874 = vmatprep.subr.bf16.mxu0 %v3805
    %4875 = vmatpush1.bf16.msra.mxu0 %v3804
    %4876 = vmatprep.subr.bf16.mxu0 %v3789
    %4877 = vmatpush1.bf16.msra.mxu0 %v3788
    %4878 = vmatprep.subr.bf16.mxu0 %v3773
    %4879 = vmatpush1.bf16.msra.mxu0 %v3772
    %4880 = vmatprep.subr.bf16.mxu0 %v3757
    %4881 = vmatpush1.bf16.msra.mxu0 %v3756
    %4882 = vmatprep.subr.bf16.mxu0 %v3997
    %4883 = vmatpush2.bf16.msra.mxu0 %v3996
    %4884 = vmatprep.subr.bf16.mxu0 %v3981
    %4885 = vmatpush2.bf16.msra.mxu0 %v3980
    %4886 = vmatprep.subr.bf16.mxu0 %v3965
    %4887 = vmatpush2.bf16.msra.mxu0 %v3964
    %4888 = vmatprep.subr.bf16.mxu0 %v3949
    %4889 = vmatpush2.bf16.msra.mxu0 %v3948
    %4890 = vmatprep.subr.bf16.mxu0 %v3933
    %4891 = vmatpush2.bf16.msra.mxu0 %v3932
    %4892 = vmatprep.subr.bf16.mxu0 %v3917
    %4893 = vmatpush2.bf16.msra.mxu0 %v3916
    %4894 = vmatprep.subr.bf16.mxu0 %v3901
    %4895 = vmatpush2.bf16.msra.mxu0 %v3900
    %4896 = vmatprep.subr.bf16.mxu0 %v3885
    %4897 = vmatpush2.bf16.msra.mxu0 %v3884
    %4898 = vmatprep.mubr.bf16.mxu0 %v933
    %4899 = vmatmul.mubr.bf16.gmra.mxu0 %v932
    %v4900 = vpop.f32.mrf.mxu0
    %v4901 = vadd.f32 %v4858, %v4900
    %v4902 = vpop.f32.mrf.mxu0
    %v4903 = vadd.f32 %v4860, %v4902
    %v4904 = vpop.f32.mrf.mxu0
    %v4905 = vadd.f32 %v4862, %v4904
    %v4906 = vpop.f32.mrf.mxu0
    %v4907 = vadd.f32 %v4864, %v4906
    %4908 = vdwg.mxu0
    %4909 = vmatprep.subr.bf16.mxu0 %v3359
    %4910 = vmatpush1.bf16.msra.mxu0 %v3358
    %4911 = vmatprep.subr.bf16.mxu0 %v3343
    %4912 = vmatpush1.bf16.msra.mxu0 %v3342
    %4913 = vmatprep.subr.bf16.mxu0 %v3327
    %4914 = vmatpush1.bf16.msra.mxu0 %v3326
    %4915 = vmatprep.subr.bf16.mxu0 %v3311
    %4916 = vmatpush1.bf16.msra.mxu0 %v3310
    %4917 = vmatprep.subr.bf16.mxu0 %v3295
    %4918 = vmatpush1.bf16.msra.mxu0 %v3294
    %4919 = vmatprep.subr.bf16.mxu0 %v3279
    %4920 = vmatpush1.bf16.msra.mxu0 %v3278
    %4921 = vmatprep.subr.bf16.mxu0 %v3263
    %4922 = vmatpush1.bf16.msra.mxu0 %v3262
    %4923 = vmatprep.subr.bf16.mxu0 %v3247
    %4924 = vmatpush1.bf16.msra.mxu0 %v3246
    %4925 = vmatprep.subr.bf16.mxu0 %v3487
    %4926 = vmatpush2.bf16.msra.mxu0 %v3486
    %4927 = vmatprep.subr.bf16.mxu0 %v3471
    %4928 = vmatpush2.bf16.msra.mxu0 %v3470
    %4929 = vmatprep.subr.bf16.mxu0 %v3455
    %4930 = vmatpush2.bf16.msra.mxu0 %v3454
    %4931 = vmatprep.subr.bf16.mxu0 %v3439
    %4932 = vmatpush2.bf16.msra.mxu0 %v3438
    %4933 = vmatprep.subr.bf16.mxu0 %v3423
    %4934 = vmatpush2.bf16.msra.mxu0 %v3422
    %4935 = vmatprep.subr.bf16.mxu0 %v3407
    %4936 = vmatpush2.bf16.msra.mxu0 %v3406
    %4937 = vmatprep.subr.bf16.mxu0 %v3391
    %4938 = vmatpush2.bf16.msra.mxu0 %v3390
    %4939 = vmatprep.subr.bf16.mxu0 %v3375
    %4940 = vmatpush2.bf16.msra.mxu0 %v3374
    %4941 = vmatprep.mubr.bf16.mxu0 %v929
    %4942 = vmatmul.mubr.bf16.gmra.mxu0 %v928
    %v4943 = vpop.f32.mrf.mxu0
    %v4944 = vadd.f32 0.0, %v4943
    %v4945 = vpop.f32.mrf.mxu0
    %v4946 = vadd.f32 0.0, %v4945
    %v4947 = vpop.f32.mrf.mxu0
    %v4948 = vadd.f32 0.0, %v4947
    %v4949 = vpop.f32.mrf.mxu0
    %v4950 = vadd.f32 0.0, %v4949
    %4951 = vdwg.mxu0
    %4952 = vmatprep.subr.bf16.mxu0 %v3615
    %4953 = vmatpush1.bf16.msra.mxu0 %v3614
    %4954 = vmatprep.subr.bf16.mxu0 %v3599
    %4955 = vmatpush1.bf16.msra.mxu0 %v3598
    %4956 = vmatprep.subr.bf16.mxu0 %v3583
    %4957 = vmatpush1.bf16.msra.mxu0 %v3582
    %4958 = vmatprep.subr.bf16.mxu0 %v3567
    %4959 = vmatpush1.bf16.msra.mxu0 %v3566
    %4960 = vmatprep.subr.bf16.mxu0 %v3551
    %4961 = vmatpush1.bf16.msra.mxu0 %v3550
    %4962 = vmatprep.subr.bf16.mxu0 %v3535
    %4963 = vmatpush1.bf16.msra.mxu0 %v3534
    %4964 = vmatprep.subr.bf16.mxu0 %v3519
    %4965 = vmatpush1.bf16.msra.mxu0 %v3518
    %4966 = vmatprep.subr.bf16.mxu0 %v3503
    %4967 = vmatpush1.bf16.msra.mxu0 %v3502
    %4968 = vmatprep.subr.bf16.mxu0 %v3743
    %4969 = vmatpush2.bf16.msra.mxu0 %v3742
    %4970 = vmatprep.subr.bf16.mxu0 %v3727
    %4971 = vmatpush2.bf16.msra.mxu0 %v3726
    %4972 = vmatprep.subr.bf16.mxu0 %v3711
    %4973 = vmatpush2.bf16.msra.mxu0 %v3710
    %4974 = vmatprep.subr.bf16.mxu0 %v3695
    %4975 = vmatpush2.bf16.msra.mxu0 %v3694
    %4976 = vmatprep.subr.bf16.mxu0 %v3679
    %4977 = vmatpush2.bf16.msra.mxu0 %v3678
    %4978 = vmatprep.subr.bf16.mxu0 %v3663
    %4979 = vmatpush2.bf16.msra.mxu0 %v3662
    %4980 = vmatprep.subr.bf16.mxu0 %v3647
    %4981 = vmatpush2.bf16.msra.mxu0 %v3646
    %4982 = vmatprep.subr.bf16.mxu0 %v3631
    %4983 = vmatpush2.bf16.msra.mxu0 %v3630
    %4984 = vmatprep.mubr.bf16.mxu0 %v931
    %4985 = vmatmul.mubr.bf16.gmra.mxu0 %v930
    %v4986 = vpop.f32.mrf.mxu0
    %v4987 = vadd.f32 %v4944, %v4986
    %v4988 = vpop.f32.mrf.mxu0
    %v4989 = vadd.f32 %v4946, %v4988
    %v4990 = vpop.f32.mrf.mxu0
    %v4991 = vadd.f32 %v4948, %v4990
    %v4992 = vpop.f32.mrf.mxu0
    %v4993 = vadd.f32 %v4950, %v4992
    %4994 = vdwg.mxu0
    %4995 = vmatprep.subr.bf16.mxu0 %v3871
    %4996 = vmatpush1.bf16.msra.mxu0 %v3870
    %4997 = vmatprep.subr.bf16.mxu0 %v3855
    %4998 = vmatpush1.bf16.msra.mxu0 %v3854
    %4999 = vmatprep.subr.bf16.mxu0 %v3839
    %5000 = vmatpush1.bf16.msra.mxu0 %v3838
    %5001 = vmatprep.subr.bf16.mxu0 %v3823
    %5002 = vmatpush1.bf16.msra.mxu0 %v3822
    %5003 = vmatprep.subr.bf16.mxu0 %v3807
    %5004 = vmatpush1.bf16.msra.mxu0 %v3806
    %5005 = vmatprep.subr.bf16.mxu0 %v3791
    %5006 = vmatpush1.bf16.msra.mxu0 %v3790
    %5007 = vmatprep.subr.bf16.mxu0 %v3775
    %5008 = vmatpush1.bf16.msra.mxu0 %v3774
    %5009 = vmatprep.subr.bf16.mxu0 %v3759
    %5010 = vmatpush1.bf16.msra.mxu0 %v3758
    %5011 = vmatprep.subr.bf16.mxu0 %v3999
    %5012 = vmatpush2.bf16.msra.mxu0 %v3998
    %5013 = vmatprep.subr.bf16.mxu0 %v3983
    %5014 = vmatpush2.bf16.msra.mxu0 %v3982
    %5015 = vmatprep.subr.bf16.mxu0 %v3967
    %5016 = vmatpush2.bf16.msra.mxu0 %v3966
    %5017 = vmatprep.subr.bf16.mxu0 %v3951
    %5018 = vmatpush2.bf16.msra.mxu0 %v3950
    %5019 = vmatprep.subr.bf16.mxu0 %v3935
    %5020 = vmatpush2.bf16.msra.mxu0 %v3934
    %5021 = vmatprep.subr.bf16.mxu0 %v3919
    %5022 = vmatpush2.bf16.msra.mxu0 %v3918
    %5023 = vmatprep.subr.bf16.mxu0 %v3903
    %5024 = vmatpush2.bf16.msra.mxu0 %v3902
    %5025 = vmatprep.subr.bf16.mxu0 %v3887
    %5026 = vmatpush2.bf16.msra.mxu0 %v3886
    %5027 = vmatprep.mubr.bf16.mxu0 %v933
    %5028 = vmatmul.mubr.bf16.gmra.mxu0 %v932
    %v5029 = vpop.f32.mrf.mxu0
    %v5030 = vadd.f32 %v4987, %v5029
    %v5031 = vpop.f32.mrf.mxu0
    %v5032 = vadd.f32 %v4989, %v5031
    %v5033 = vpop.f32.mrf.mxu0
    %v5034 = vadd.f32 %v4991, %v5033
    %v5035 = vpop.f32.mrf.mxu0
    %v5036 = vadd.f32 %v4993, %v5035
    %5037 = vdwg.mxu0
    %5038 = vmatprep.subr.bf16.mxu0 %v3361
    %5039 = vmatpush1.bf16.msra.mxu0 %v3360
    %5040 = vmatprep.subr.bf16.mxu0 %v3345
    %5041 = vmatpush1.bf16.msra.mxu0 %v3344
    %5042 = vmatprep.subr.bf16.mxu0 %v3329
    %5043 = vmatpush1.bf16.msra.mxu0 %v3328
    %5044 = vmatprep.subr.bf16.mxu0 %v3313
    %5045 = vmatpush1.bf16.msra.mxu0 %v3312
    %5046 = vmatprep.subr.bf16.mxu0 %v3297
    %5047 = vmatpush1.bf16.msra.mxu0 %v3296
    %5048 = vmatprep.subr.bf16.mxu0 %v3281
    %5049 = vmatpush1.bf16.msra.mxu0 %v3280
    %5050 = vmatprep.subr.bf16.mxu0 %v3265
    %5051 = vmatpush1.bf16.msra.mxu0 %v3264
    %5052 = vmatprep.subr.bf16.mxu0 %v3249
    %5053 = vmatpush1.bf16.msra.mxu0 %v3248
    %5054 = vmatprep.subr.bf16.mxu0 %v3489
    %5055 = vmatpush2.bf16.msra.mxu0 %v3488
    %5056 = vmatprep.subr.bf16.mxu0 %v3473
    %5057 = vmatpush2.bf16.msra.mxu0 %v3472
    %5058 = vmatprep.subr.bf16.mxu0 %v3457
    %5059 = vmatpush2.bf16.msra.mxu0 %v3456
    %5060 = vmatprep.subr.bf16.mxu0 %v3441
    %5061 = vmatpush2.bf16.msra.mxu0 %v3440
    %5062 = vmatprep.subr.bf16.mxu0 %v3425
    %5063 = vmatpush2.bf16.msra.mxu0 %v3424
    %5064 = vmatprep.subr.bf16.mxu0 %v3409
    %5065 = vmatpush2.bf16.msra.mxu0 %v3408
    %5066 = vmatprep.subr.bf16.mxu0 %v3393
    %5067 = vmatpush2.bf16.msra.mxu0 %v3392
    %5068 = vmatprep.subr.bf16.mxu0 %v3377
    %5069 = vmatpush2.bf16.msra.mxu0 %v3376
    %5070 = vmatprep.mubr.bf16.mxu0 %v929
    %5071 = vmatmul.mubr.bf16.gmra.mxu0 %v928
    %v5072 = vpop.f32.mrf.mxu0
    %v5073 = vadd.f32 0.0, %v5072
    %v5074 = vpop.f32.mrf.mxu0
    %v5075 = vadd.f32 0.0, %v5074
    %v5076 = vpop.f32.mrf.mxu0
    %v5077 = vadd.f32 0.0, %v5076
    %v5078 = vpop.f32.mrf.mxu0
    %v5079 = vadd.f32 0.0, %v5078
    %5080 = vdwg.mxu0
    %5081 = vmatprep.subr.bf16.mxu0 %v3617
    %5082 = vmatpush1.bf16.msra.mxu0 %v3616
    %5083 = vmatprep.subr.bf16.mxu0 %v3601
    %5084 = vmatpush1.bf16.msra.mxu0 %v3600
    %5085 = vmatprep.subr.bf16.mxu0 %v3585
    %5086 = vmatpush1.bf16.msra.mxu0 %v3584
    %5087 = vmatprep.subr.bf16.mxu0 %v3569
    %5088 = vmatpush1.bf16.msra.mxu0 %v3568
    %5089 = vmatprep.subr.bf16.mxu0 %v3553
    %5090 = vmatpush1.bf16.msra.mxu0 %v3552
    %5091 = vmatprep.subr.bf16.mxu0 %v3537
    %5092 = vmatpush1.bf16.msra.mxu0 %v3536
    %5093 = vmatprep.subr.bf16.mxu0 %v3521
    %5094 = vmatpush1.bf16.msra.mxu0 %v3520
    %5095 = vmatprep.subr.bf16.mxu0 %v3505
    %5096 = vmatpush1.bf16.msra.mxu0 %v3504
    %5097 = vmatprep.subr.bf16.mxu0 %v3745
    %5098 = vmatpush2.bf16.msra.mxu0 %v3744
    %5099 = vmatprep.subr.bf16.mxu0 %v3729
    %5100 = vmatpush2.bf16.msra.mxu0 %v3728
    %5101 = vmatprep.subr.bf16.mxu0 %v3713
    %5102 = vmatpush2.bf16.msra.mxu0 %v3712
    %5103 = vmatprep.subr.bf16.mxu0 %v3697
    %5104 = vmatpush2.bf16.msra.mxu0 %v3696
    %5105 = vmatprep.subr.bf16.mxu0 %v3681
    %5106 = vmatpush2.bf16.msra.mxu0 %v3680
    %5107 = vmatprep.subr.bf16.mxu0 %v3665
    %5108 = vmatpush2.bf16.msra.mxu0 %v3664
    %5109 = vmatprep.subr.bf16.mxu0 %v3649
    %5110 = vmatpush2.bf16.msra.mxu0 %v3648
    %5111 = vmatprep.subr.bf16.mxu0 %v3633
    %5112 = vmatpush2.bf16.msra.mxu0 %v3632
    %5113 = vmatprep.mubr.bf16.mxu0 %v931
    %5114 = vmatmul.mubr.bf16.gmra.mxu0 %v930
    %v5115 = vpop.f32.mrf.mxu0
    %v5116 = vadd.f32 %v5073, %v5115
    %v5117 = vpop.f32.mrf.mxu0
    %v5118 = vadd.f32 %v5075, %v5117
    %v5119 = vpop.f32.mrf.mxu0
    %v5120 = vadd.f32 %v5077, %v5119
    %v5121 = vpop.f32.mrf.mxu0
    %v5122 = vadd.f32 %v5079, %v5121
    %5123 = vdwg.mxu0
    %5124 = vmatprep.subr.bf16.mxu0 %v3873
    %5125 = vmatpush1.bf16.msra.mxu0 %v3872
    %5126 = vmatprep.subr.bf16.mxu0 %v3857
    %5127 = vmatpush1.bf16.msra.mxu0 %v3856
    %5128 = vmatprep.subr.bf16.mxu0 %v3841
    %5129 = vmatpush1.bf16.msra.mxu0 %v3840
    %5130 = vmatprep.subr.bf16.mxu0 %v3825
    %5131 = vmatpush1.bf16.msra.mxu0 %v3824
    %5132 = vmatprep.subr.bf16.mxu0 %v3809
    %5133 = vmatpush1.bf16.msra.mxu0 %v3808
    %5134 = vmatprep.subr.bf16.mxu0 %v3793
    %5135 = vmatpush1.bf16.msra.mxu0 %v3792
    %5136 = vmatprep.subr.bf16.mxu0 %v3777
    %5137 = vmatpush1.bf16.msra.mxu0 %v3776
    %5138 = vmatprep.subr.bf16.mxu0 %v3761
    %5139 = vmatpush1.bf16.msra.mxu0 %v3760
    %5140 = vmatprep.subr.bf16.mxu0 %v4001
    %5141 = vmatpush2.bf16.msra.mxu0 %v4000
    %5142 = vmatprep.subr.bf16.mxu0 %v3985
    %5143 = vmatpush2.bf16.msra.mxu0 %v3984
    %5144 = vmatprep.subr.bf16.mxu0 %v3969
    %5145 = vmatpush2.bf16.msra.mxu0 %v3968
    %5146 = vmatprep.subr.bf16.mxu0 %v3953
    %5147 = vmatpush2.bf16.msra.mxu0 %v3952
    %5148 = vmatprep.subr.bf16.mxu0 %v3937
    %5149 = vmatpush2.bf16.msra.mxu0 %v3936
    %5150 = vmatprep.subr.bf16.mxu0 %v3921
    %5151 = vmatpush2.bf16.msra.mxu0 %v3920
    %5152 = vmatprep.subr.bf16.mxu0 %v3905
    %5153 = vmatpush2.bf16.msra.mxu0 %v3904
    %5154 = vmatprep.subr.bf16.mxu0 %v3889
    %5155 = vmatpush2.bf16.msra.mxu0 %v3888
    %5156 = vmatprep.mubr.bf16.mxu0 %v933
    %5157 = vmatmul.mubr.bf16.gmra.mxu0 %v932
    %v5158 = vpop.f32.mrf.mxu0
    %v5159 = vadd.f32 %v5116, %v5158
    %v5160 = vpop.f32.mrf.mxu0
    %v5161 = vadd.f32 %v5118, %v5160
    %v5162 = vpop.f32.mrf.mxu0
    %v5163 = vadd.f32 %v5120, %v5162
    %v5164 = vpop.f32.mrf.mxu0
    %v5165 = vadd.f32 %v5122, %v5164
    %5166 = vdwg.mxu0
    %5167 = vmatprep.subr.bf16.mxu0 %v3363
    %5168 = vmatpush1.bf16.msra.mxu0 %v3362
    %5169 = vmatprep.subr.bf16.mxu0 %v3347
    %5170 = vmatpush1.bf16.msra.mxu0 %v3346
    %5171 = vmatprep.subr.bf16.mxu0 %v3331
    %5172 = vmatpush1.bf16.msra.mxu0 %v3330
    %5173 = vmatprep.subr.bf16.mxu0 %v3315
    %5174 = vmatpush1.bf16.msra.mxu0 %v3314
    %5175 = vmatprep.subr.bf16.mxu0 %v3299
    %5176 = vmatpush1.bf16.msra.mxu0 %v3298
    %5177 = vmatprep.subr.bf16.mxu0 %v3283
    %5178 = vmatpush1.bf16.msra.mxu0 %v3282
    %5179 = vmatprep.subr.bf16.mxu0 %v3267
    %5180 = vmatpush1.bf16.msra.mxu0 %v3266
    %5181 = vmatprep.subr.bf16.mxu0 %v3251
    %5182 = vmatpush1.bf16.msra.mxu0 %v3250
    %5183 = vmatprep.subr.bf16.mxu0 %v3491
    %5184 = vmatpush2.bf16.msra.mxu0 %v3490
    %5185 = vmatprep.subr.bf16.mxu0 %v3475
    %5186 = vmatpush2.bf16.msra.mxu0 %v3474
    %5187 = vmatprep.subr.bf16.mxu0 %v3459
    %5188 = vmatpush2.bf16.msra.mxu0 %v3458
    %5189 = vmatprep.subr.bf16.mxu0 %v3443
    %5190 = vmatpush2.bf16.msra.mxu0 %v3442
    %5191 = vmatprep.subr.bf16.mxu0 %v3427
    %5192 = vmatpush2.bf16.msra.mxu0 %v3426
    %5193 = vmatprep.subr.bf16.mxu0 %v3411
    %5194 = vmatpush2.bf16.msra.mxu0 %v3410
    %5195 = vmatprep.subr.bf16.mxu0 %v3395
    %5196 = vmatpush2.bf16.msra.mxu0 %v3394
    %5197 = vmatprep.subr.bf16.mxu0 %v3379
    %5198 = vmatpush2.bf16.msra.mxu0 %v3378
    %5199 = vmatprep.mubr.bf16.mxu0 %v929
    %5200 = vmatmul.mubr.bf16.gmra.mxu0 %v928
    %v5201 = vpop.f32.mrf.mxu0
    %v5202 = vadd.f32 0.0, %v5201
    %v5203 = vpop.f32.mrf.mxu0
    %v5204 = vadd.f32 0.0, %v5203
    %v5205 = vpop.f32.mrf.mxu0
    %v5206 = vadd.f32 0.0, %v5205
    %v5207 = vpop.f32.mrf.mxu0
    %v5208 = vadd.f32 0.0, %v5207
    %5209 = vdwg.mxu0
    %5210 = vmatprep.subr.bf16.mxu0 %v3619
    %5211 = vmatpush1.bf16.msra.mxu0 %v3618
    %5212 = vmatprep.subr.bf16.mxu0 %v3603
    %5213 = vmatpush1.bf16.msra.mxu0 %v3602
    %5214 = vmatprep.subr.bf16.mxu0 %v3587
    %5215 = vmatpush1.bf16.msra.mxu0 %v3586
    %5216 = vmatprep.subr.bf16.mxu0 %v3571
    %5217 = vmatpush1.bf16.msra.mxu0 %v3570
    %5218 = vmatprep.subr.bf16.mxu0 %v3555
    %5219 = vmatpush1.bf16.msra.mxu0 %v3554
    %5220 = vmatprep.subr.bf16.mxu0 %v3539
    %5221 = vmatpush1.bf16.msra.mxu0 %v3538
    %5222 = vmatprep.subr.bf16.mxu0 %v3523
    %5223 = vmatpush1.bf16.msra.mxu0 %v3522
    %5224 = vmatprep.subr.bf16.mxu0 %v3507
    %5225 = vmatpush1.bf16.msra.mxu0 %v3506
    %5226 = vmatprep.subr.bf16.mxu0 %v3747
    %5227 = vmatpush2.bf16.msra.mxu0 %v3746
    %5228 = vmatprep.subr.bf16.mxu0 %v3731
    %5229 = vmatpush2.bf16.msra.mxu0 %v3730
    %5230 = vmatprep.subr.bf16.mxu0 %v3715
    %5231 = vmatpush2.bf16.msra.mxu0 %v3714
    %5232 = vmatprep.subr.bf16.mxu0 %v3699
    %5233 = vmatpush2.bf16.msra.mxu0 %v3698
    %5234 = vmatprep.subr.bf16.mxu0 %v3683
    %5235 = vmatpush2.bf16.msra.mxu0 %v3682
    %5236 = vmatprep.subr.bf16.mxu0 %v3667
    %5237 = vmatpush2.bf16.msra.mxu0 %v3666
    %5238 = vmatprep.subr.bf16.mxu0 %v3651
    %5239 = vmatpush2.bf16.msra.mxu0 %v3650
    %5240 = vmatprep.subr.bf16.mxu0 %v3635
    %5241 = vmatpush2.bf16.msra.mxu0 %v3634
    %5242 = vmatprep.mubr.bf16.mxu0 %v931
    %5243 = vmatmul.mubr.bf16.gmra.mxu0 %v930
    %v5244 = vpop.f32.mrf.mxu0
    %v5245 = vadd.f32 %v5202, %v5244
    %v5246 = vpop.f32.mrf.mxu0
    %v5247 = vadd.f32 %v5204, %v5246
    %v5248 = vpop.f32.mrf.mxu0
    %v5249 = vadd.f32 %v5206, %v5248
    %v5250 = vpop.f32.mrf.mxu0
    %v5251 = vadd.f32 %v5208, %v5250
    %5252 = vdwg.mxu0
    %5253 = vmatprep.subr.bf16.mxu0 %v3875
    %5254 = vmatpush1.bf16.msra.mxu0 %v3874
    %5255 = vmatprep.subr.bf16.mxu0 %v3859
    %5256 = vmatpush1.bf16.msra.mxu0 %v3858
    %5257 = vmatprep.subr.bf16.mxu0 %v3843
    %5258 = vmatpush1.bf16.msra.mxu0 %v3842
    %5259 = vmatprep.subr.bf16.mxu0 %v3827
    %5260 = vmatpush1.bf16.msra.mxu0 %v3826
    %5261 = vmatprep.subr.bf16.mxu0 %v3811
    %5262 = vmatpush1.bf16.msra.mxu0 %v3810
    %5263 = vmatprep.subr.bf16.mxu0 %v3795
    %5264 = vmatpush1.bf16.msra.mxu0 %v3794
    %5265 = vmatprep.subr.bf16.mxu0 %v3779
    %5266 = vmatpush1.bf16.msra.mxu0 %v3778
    %5267 = vmatprep.subr.bf16.mxu0 %v3763
    %5268 = vmatpush1.bf16.msra.mxu0 %v3762
    %5269 = vmatprep.subr.bf16.mxu0 %v4003
    %5270 = vmatpush2.bf16.msra.mxu0 %v4002
    %5271 = vmatprep.subr.bf16.mxu0 %v3987
    %5272 = vmatpush2.bf16.msra.mxu0 %v3986
    %5273 = vmatprep.subr.bf16.mxu0 %v3971
    %5274 = vmatpush2.bf16.msra.mxu0 %v3970
    %5275 = vmatprep.subr.bf16.mxu0 %v3955
    %5276 = vmatpush2.bf16.msra.mxu0 %v3954
    %5277 = vmatprep.subr.bf16.mxu0 %v3939
    %5278 = vmatpush2.bf16.msra.mxu0 %v3938
    %5279 = vmatprep.subr.bf16.mxu0 %v3923
    %5280 = vmatpush2.bf16.msra.mxu0 %v3922
    %5281 = vmatprep.subr.bf16.mxu0 %v3907
    %5282 = vmatpush2.bf16.msra.mxu0 %v3906
    %5283 = vmatprep.subr.bf16.mxu0 %v3891
    %5284 = vmatpush2.bf16.msra.mxu0 %v3890
    %5285 = vmatprep.mubr.bf16.mxu0 %v933
    %5286 = vmatmul.mubr.bf16.gmra.mxu0 %v932
    %v5287 = vpop.f32.mrf.mxu0
    %v5288 = vadd.f32 %v5245, %v5287
    %v5289 = vpop.f32.mrf.mxu0
    %v5290 = vadd.f32 %v5247, %v5289
    %v5291 = vpop.f32.mrf.mxu0
    %v5292 = vadd.f32 %v5249, %v5291
    %v5293 = vpop.f32.mrf.mxu0
    %v5294 = vadd.f32 %v5251, %v5293
    %5295 = vdwg.mxu0
    %5296 = vmatprep.subr.bf16.mxu0 %v3365
    %5297 = vmatpush1.bf16.msra.mxu0 %v3364
    %5298 = vmatprep.subr.bf16.mxu0 %v3349
    %5299 = vmatpush1.bf16.msra.mxu0 %v3348
    %5300 = vmatprep.subr.bf16.mxu0 %v3333
    %5301 = vmatpush1.bf16.msra.mxu0 %v3332
    %5302 = vmatprep.subr.bf16.mxu0 %v3317
    %5303 = vmatpush1.bf16.msra.mxu0 %v3316
    %5304 = vmatprep.subr.bf16.mxu0 %v3301
    %5305 = vmatpush1.bf16.msra.mxu0 %v3300
    %5306 = vmatprep.subr.bf16.mxu0 %v3285
    %5307 = vmatpush1.bf16.msra.mxu0 %v3284
    %5308 = vmatprep.subr.bf16.mxu0 %v3269
    %5309 = vmatpush1.bf16.msra.mxu0 %v3268
    %5310 = vmatprep.subr.bf16.mxu0 %v3253
    %5311 = vmatpush1.bf16.msra.mxu0 %v3252
    %5312 = vmatprep.subr.bf16.mxu0 %v3493
    %5313 = vmatpush2.bf16.msra.mxu0 %v3492
    %5314 = vmatprep.subr.bf16.mxu0 %v3477
    %5315 = vmatpush2.bf16.msra.mxu0 %v3476
    %5316 = vmatprep.subr.bf16.mxu0 %v3461
    %5317 = vmatpush2.bf16.msra.mxu0 %v3460
    %5318 = vmatprep.subr.bf16.mxu0 %v3445
    %5319 = vmatpush2.bf16.msra.mxu0 %v3444
    %5320 = vmatprep.subr.bf16.mxu0 %v3429
    %5321 = vmatpush2.bf16.msra.mxu0 %v3428
    %5322 = vmatprep.subr.bf16.mxu0 %v3413
    %5323 = vmatpush2.bf16.msra.mxu0 %v3412
    %5324 = vmatprep.subr.bf16.mxu0 %v3397
    %5325 = vmatpush2.bf16.msra.mxu0 %v3396
    %5326 = vmatprep.subr.bf16.mxu0 %v3381
    %5327 = vmatpush2.bf16.msra.mxu0 %v3380
    %5328 = vmatprep.mubr.bf16.mxu0 %v929
    %5329 = vmatmul.mubr.bf16.gmra.mxu0 %v928
    %v5330 = vpop.f32.mrf.mxu0
    %v5331 = vadd.f32 0.0, %v5330
    %v5332 = vpop.f32.mrf.mxu0
    %v5333 = vadd.f32 0.0, %v5332
    %v5334 = vpop.f32.mrf.mxu0
    %v5335 = vadd.f32 0.0, %v5334
    %v5336 = vpop.f32.mrf.mxu0
    %v5337 = vadd.f32 0.0, %v5336
    %5338 = vdwg.mxu0
    %5339 = vmatprep.subr.bf16.mxu0 %v3621
    %5340 = vmatpush1.bf16.msra.mxu0 %v3620
    %5341 = vmatprep.subr.bf16.mxu0 %v3605
    %5342 = vmatpush1.bf16.msra.mxu0 %v3604
    %5343 = vmatprep.subr.bf16.mxu0 %v3589
    %5344 = vmatpush1.bf16.msra.mxu0 %v3588
    %5345 = vmatprep.subr.bf16.mxu0 %v3573
    %5346 = vmatpush1.bf16.msra.mxu0 %v3572
    %5347 = vmatprep.subr.bf16.mxu0 %v3557
    %5348 = vmatpush1.bf16.msra.mxu0 %v3556
    %5349 = vmatprep.subr.bf16.mxu0 %v3541
    %5350 = vmatpush1.bf16.msra.mxu0 %v3540
    %5351 = vmatprep.subr.bf16.mxu0 %v3525
    %5352 = vmatpush1.bf16.msra.mxu0 %v3524
    %5353 = vmatprep.subr.bf16.mxu0 %v3509
    %5354 = vmatpush1.bf16.msra.mxu0 %v3508
    %5355 = vmatprep.subr.bf16.mxu0 %v3749
    %5356 = vmatpush2.bf16.msra.mxu0 %v3748
    %5357 = vmatprep.subr.bf16.mxu0 %v3733
    %5358 = vmatpush2.bf16.msra.mxu0 %v3732
    %5359 = vmatprep.subr.bf16.mxu0 %v3717
    %5360 = vmatpush2.bf16.msra.mxu0 %v3716
    %5361 = vmatprep.subr.bf16.mxu0 %v3701
    %5362 = vmatpush2.bf16.msra.mxu0 %v3700
    %5363 = vmatprep.subr.bf16.mxu0 %v3685
    %5364 = vmatpush2.bf16.msra.mxu0 %v3684
    %5365 = vmatprep.subr.bf16.mxu0 %v3669
    %5366 = vmatpush2.bf16.msra.mxu0 %v3668
    %5367 = vmatprep.subr.bf16.mxu0 %v3653
    %5368 = vmatpush2.bf16.msra.mxu0 %v3652
    %5369 = vmatprep.subr.bf16.mxu0 %v3637
    %5370 = vmatpush2.bf16.msra.mxu0 %v3636
    %5371 = vmatprep.mubr.bf16.mxu0 %v931
    %5372 = vmatmul.mubr.bf16.gmra.mxu0 %v930
    %v5373 = vpop.f32.mrf.mxu0
    %v5374 = vadd.f32 %v5331, %v5373
    %v5375 = vpop.f32.mrf.mxu0
    %v5376 = vadd.f32 %v5333, %v5375
    %v5377 = vpop.f32.mrf.mxu0
    %v5378 = vadd.f32 %v5335, %v5377
    %v5379 = vpop.f32.mrf.mxu0
    %v5380 = vadd.f32 %v5337, %v5379
    %5381 = vdwg.mxu0
    %5382 = vmatprep.subr.bf16.mxu0 %v3877
    %5383 = vmatpush1.bf16.msra.mxu0 %v3876
    %5384 = vmatprep.subr.bf16.mxu0 %v3861
    %5385 = vmatpush1.bf16.msra.mxu0 %v3860
    %5386 = vmatprep.subr.bf16.mxu0 %v3845
    %5387 = vmatpush1.bf16.msra.mxu0 %v3844
    %5388 = vmatprep.subr.bf16.mxu0 %v3829
    %5389 = vmatpush1.bf16.msra.mxu0 %v3828
    %5390 = vmatprep.subr.bf16.mxu0 %v3813
    %5391 = vmatpush1.bf16.msra.mxu0 %v3812
    %5392 = vmatprep.subr.bf16.mxu0 %v3797
    %5393 = vmatpush1.bf16.msra.mxu0 %v3796
    %5394 = vmatprep.subr.bf16.mxu0 %v3781
    %5395 = vmatpush1.bf16.msra.mxu0 %v3780
    %5396 = vmatprep.subr.bf16.mxu0 %v3765
    %5397 = vmatpush1.bf16.msra.mxu0 %v3764
    %5398 = vmatprep.subr.bf16.mxu0 %v4005
    %5399 = vmatpush2.bf16.msra.mxu0 %v4004
    %5400 = vmatprep.subr.bf16.mxu0 %v3989
    %5401 = vmatpush2.bf16.msra.mxu0 %v3988
    %5402 = vmatprep.subr.bf16.mxu0 %v3973
    %5403 = vmatpush2.bf16.msra.mxu0 %v3972
    %5404 = vmatprep.subr.bf16.mxu0 %v3957
    %5405 = vmatpush2.bf16.msra.mxu0 %v3956
    %5406 = vmatprep.subr.bf16.mxu0 %v3941
    %5407 = vmatpush2.bf16.msra.mxu0 %v3940
    %5408 = vmatprep.subr.bf16.mxu0 %v3925
    %5409 = vmatpush2.bf16.msra.mxu0 %v3924
    %5410 = vmatprep.subr.bf16.mxu0 %v3909
    %5411 = vmatpush2.bf16.msra.mxu0 %v3908
    %5412 = vmatprep.subr.bf16.mxu0 %v3893
    %5413 = vmatpush2.bf16.msra.mxu0 %v3892
    %5414 = vmatprep.mubr.bf16.mxu0 %v933
    %5415 = vmatmul.mubr.bf16.gmra.mxu0 %v932
    %v5416 = vpop.f32.mrf.mxu0
    %v5417 = vadd.f32 %v5374, %v5416
    %v5418 = vpop.f32.mrf.mxu0
    %v5419 = vadd.f32 %v5376, %v5418
    %v5420 = vpop.f32.mrf.mxu0
    %v5421 = vadd.f32 %v5378, %v5420
    %v5422 = vpop.f32.mrf.mxu0
    %v5423 = vadd.f32 %v5380, %v5422
    %5424 = vdwg.mxu0
    %5425 = vmatprep.subr.bf16.mxu0 %v3367
    %5426 = vmatpush1.bf16.msra.mxu0 %v3366
    %5427 = vmatprep.subr.bf16.mxu0 %v3351
    %5428 = vmatpush1.bf16.msra.mxu0 %v3350
    %5429 = vmatprep.subr.bf16.mxu0 %v3335
    %5430 = vmatpush1.bf16.msra.mxu0 %v3334
    %5431 = vmatprep.subr.bf16.mxu0 %v3319
    %5432 = vmatpush1.bf16.msra.mxu0 %v3318
    %5433 = vmatprep.subr.bf16.mxu0 %v3303
    %5434 = vmatpush1.bf16.msra.mxu0 %v3302
    %5435 = vmatprep.subr.bf16.mxu0 %v3287
    %5436 = vmatpush1.bf16.msra.mxu0 %v3286
    %5437 = vmatprep.subr.bf16.mxu0 %v3271
    %5438 = vmatpush1.bf16.msra.mxu0 %v3270
    %5439 = vmatprep.subr.bf16.mxu0 %v3255
    %5440 = vmatpush1.bf16.msra.mxu0 %v3254
    %5441 = vmatprep.subr.bf16.mxu0 %v3495
    %5442 = vmatpush2.bf16.msra.mxu0 %v3494
    %5443 = vmatprep.subr.bf16.mxu0 %v3479
    %5444 = vmatpush2.bf16.msra.mxu0 %v3478
    %5445 = vmatprep.subr.bf16.mxu0 %v3463
    %5446 = vmatpush2.bf16.msra.mxu0 %v3462
    %5447 = vmatprep.subr.bf16.mxu0 %v3447
    %5448 = vmatpush2.bf16.msra.mxu0 %v3446
    %5449 = vmatprep.subr.bf16.mxu0 %v3431
    %5450 = vmatpush2.bf16.msra.mxu0 %v3430
    %5451 = vmatprep.subr.bf16.mxu0 %v3415
    %5452 = vmatpush2.bf16.msra.mxu0 %v3414
    %5453 = vmatprep.subr.bf16.mxu0 %v3399
    %5454 = vmatpush2.bf16.msra.mxu0 %v3398
    %5455 = vmatprep.subr.bf16.mxu0 %v3383
    %5456 = vmatpush2.bf16.msra.mxu0 %v3382
    %5457 = vmatprep.mubr.bf16.mxu0 %v929
    %5458 = vmatmul.mubr.bf16.gmra.mxu0 %v928
    %v5459 = vpop.f32.mrf.mxu0
    %v5460 = vadd.f32 0.0, %v5459
    %v5461 = vpop.f32.mrf.mxu0
    %v5462 = vadd.f32 0.0, %v5461
    %v5463 = vpop.f32.mrf.mxu0
    %v5464 = vadd.f32 0.0, %v5463
    %v5465 = vpop.f32.mrf.mxu0
    %v5466 = vadd.f32 0.0, %v5465
    %5467 = vdwg.mxu0
    %5468 = vmatprep.subr.bf16.mxu0 %v3623
    %5469 = vmatpush1.bf16.msra.mxu0 %v3622
    %5470 = vmatprep.subr.bf16.mxu0 %v3607
    %5471 = vmatpush1.bf16.msra.mxu0 %v3606
    %5472 = vmatprep.subr.bf16.mxu0 %v3591
    %5473 = vmatpush1.bf16.msra.mxu0 %v3590
    %5474 = vmatprep.subr.bf16.mxu0 %v3575
    %5475 = vmatpush1.bf16.msra.mxu0 %v3574
    %5476 = vmatprep.subr.bf16.mxu0 %v3559
    %5477 = vmatpush1.bf16.msra.mxu0 %v3558
    %5478 = vmatprep.subr.bf16.mxu0 %v3543
    %5479 = vmatpush1.bf16.msra.mxu0 %v3542
    %5480 = vmatprep.subr.bf16.mxu0 %v3527
    %5481 = vmatpush1.bf16.msra.mxu0 %v3526
    %5482 = vmatprep.subr.bf16.mxu0 %v3511
    %5483 = vmatpush1.bf16.msra.mxu0 %v3510
    %5484 = vmatprep.subr.bf16.mxu0 %v3751
    %5485 = vmatpush2.bf16.msra.mxu0 %v3750
    %5486 = vmatprep.subr.bf16.mxu0 %v3735
    %5487 = vmatpush2.bf16.msra.mxu0 %v3734
    %5488 = vmatprep.subr.bf16.mxu0 %v3719
    %5489 = vmatpush2.bf16.msra.mxu0 %v3718
    %5490 = vmatprep.subr.bf16.mxu0 %v3703
    %5491 = vmatpush2.bf16.msra.mxu0 %v3702
    %5492 = vmatprep.subr.bf16.mxu0 %v3687
    %5493 = vmatpush2.bf16.msra.mxu0 %v3686
    %5494 = vmatprep.subr.bf16.mxu0 %v3671
    %5495 = vmatpush2.bf16.msra.mxu0 %v3670
    %5496 = vmatprep.subr.bf16.mxu0 %v3655
    %5497 = vmatpush2.bf16.msra.mxu0 %v3654
    %5498 = vmatprep.subr.bf16.mxu0 %v3639
    %5499 = vmatpush2.bf16.msra.mxu0 %v3638
    %5500 = vmatprep.mubr.bf16.mxu0 %v931
    %5501 = vmatmul.mubr.bf16.gmra.mxu0 %v930
    %v5502 = vpop.f32.mrf.mxu0
    %v5503 = vadd.f32 %v5460, %v5502
    %v5504 = vpop.f32.mrf.mxu0
    %v5505 = vadd.f32 %v5462, %v5504
    %v5506 = vpop.f32.mrf.mxu0
    %v5507 = vadd.f32 %v5464, %v5506
    %v5508 = vpop.f32.mrf.mxu0
    %v5509 = vadd.f32 %v5466, %v5508
    %5510 = vdwg.mxu0
    %5511 = vmatprep.subr.bf16.mxu0 %v3879
    %5512 = vmatpush1.bf16.msra.mxu0 %v3878
    %5513 = vmatprep.subr.bf16.mxu0 %v3863
    %5514 = vmatpush1.bf16.msra.mxu0 %v3862
    %5515 = vmatprep.subr.bf16.mxu0 %v3847
    %5516 = vmatpush1.bf16.msra.mxu0 %v3846
    %5517 = vmatprep.subr.bf16.mxu0 %v3831
    %5518 = vmatpush1.bf16.msra.mxu0 %v3830
    %5519 = vmatprep.subr.bf16.mxu0 %v3815
    %5520 = vmatpush1.bf16.msra.mxu0 %v3814
    %5521 = vmatprep.subr.bf16.mxu0 %v3799
    %5522 = vmatpush1.bf16.msra.mxu0 %v3798
    %5523 = vmatprep.subr.bf16.mxu0 %v3783
    %5524 = vmatpush1.bf16.msra.mxu0 %v3782
    %5525 = vmatprep.subr.bf16.mxu0 %v3767
    %5526 = vmatpush1.bf16.msra.mxu0 %v3766
    %5527 = vmatprep.subr.bf16.mxu0 %v4007
    %5528 = vmatpush2.bf16.msra.mxu0 %v4006
    %5529 = vmatprep.subr.bf16.mxu0 %v3991
    %5530 = vmatpush2.bf16.msra.mxu0 %v3990
    %5531 = vmatprep.subr.bf16.mxu0 %v3975
    %5532 = vmatpush2.bf16.msra.mxu0 %v3974
    %5533 = vmatprep.subr.bf16.mxu0 %v3959
    %5534 = vmatpush2.bf16.msra.mxu0 %v3958
    %5535 = vmatprep.subr.bf16.mxu0 %v3943
    %5536 = vmatpush2.bf16.msra.mxu0 %v3942
    %5537 = vmatprep.subr.bf16.mxu0 %v3927
    %5538 = vmatpush2.bf16.msra.mxu0 %v3926
    %5539 = vmatprep.subr.bf16.mxu0 %v3911
    %5540 = vmatpush2.bf16.msra.mxu0 %v3910
    %5541 = vmatprep.subr.bf16.mxu0 %v3895
    %5542 = vmatpush2.bf16.msra.mxu0 %v3894
    %5543 = vmatprep.mubr.bf16.mxu0 %v933
    %5544 = vmatmul.mubr.bf16.gmra.mxu0 %v932
    %v5545 = vpop.f32.mrf.mxu0
    %v5546 = vadd.f32 %v5503, %v5545
    %v5547 = vpop.f32.mrf.mxu0
    %v5548 = vadd.f32 %v5505, %v5547
    %v5549 = vpop.f32.mrf.mxu0
    %v5550 = vadd.f32 %v5507, %v5549
    %v5551 = vpop.f32.mrf.mxu0
    %v5552 = vadd.f32 %v5509, %v5551
    %5553 = vdwg.mxu0
    %5554 = vmatprep.subr.bf16.mxu0 %v3369
    %5555 = vmatpush1.bf16.msra.mxu0 %v3368
    %5556 = vmatprep.subr.bf16.mxu0 %v3353
    %5557 = vmatpush1.bf16.msra.mxu0 %v3352
    %5558 = vmatprep.subr.bf16.mxu0 %v3337
    %5559 = vmatpush1.bf16.msra.mxu0 %v3336
    %5560 = vmatprep.subr.bf16.mxu0 %v3321
    %5561 = vmatpush1.bf16.msra.mxu0 %v3320
    %5562 = vmatprep.subr.bf16.mxu0 %v3305
    %5563 = vmatpush1.bf16.msra.mxu0 %v3304
    %5564 = vmatprep.subr.bf16.mxu0 %v3289
    %5565 = vmatpush1.bf16.msra.mxu0 %v3288
    %5566 = vmatprep.subr.bf16.mxu0 %v3273
    %5567 = vmatpush1.bf16.msra.mxu0 %v3272
    %5568 = vmatprep.subr.bf16.mxu0 %v3257
    %5569 = vmatpush1.bf16.msra.mxu0 %v3256
    %5570 = vmatprep.subr.bf16.mxu0 %v3497
    %5571 = vmatpush2.bf16.msra.mxu0 %v3496
    %5572 = vmatprep.subr.bf16.mxu0 %v3481
    %5573 = vmatpush2.bf16.msra.mxu0 %v3480
    %5574 = vmatprep.subr.bf16.mxu0 %v3465
    %5575 = vmatpush2.bf16.msra.mxu0 %v3464
    %5576 = vmatprep.subr.bf16.mxu0 %v3449
    %5577 = vmatpush2.bf16.msra.mxu0 %v3448
    %5578 = vmatprep.subr.bf16.mxu0 %v3433
    %5579 = vmatpush2.bf16.msra.mxu0 %v3432
    %5580 = vmatprep.subr.bf16.mxu0 %v3417
    %5581 = vmatpush2.bf16.msra.mxu0 %v3416
    %5582 = vmatprep.subr.bf16.mxu0 %v3401
    %5583 = vmatpush2.bf16.msra.mxu0 %v3400
    %5584 = vmatprep.subr.bf16.mxu0 %v3385
    %5585 = vmatpush2.bf16.msra.mxu0 %v3384
    %5586 = vmatprep.mubr.bf16.mxu0 %v929
    %5587 = vmatmul.mubr.bf16.gmra.mxu0 %v928
    %v5588 = vpop.f32.mrf.mxu0
    %v5589 = vadd.f32 0.0, %v5588
    %v5590 = vpop.f32.mrf.mxu0
    %v5591 = vadd.f32 0.0, %v5590
    %v5592 = vpop.f32.mrf.mxu0
    %v5593 = vadd.f32 0.0, %v5592
    %v5594 = vpop.f32.mrf.mxu0
    %v5595 = vadd.f32 0.0, %v5594
    %5596 = vdwg.mxu0
    %5597 = vmatprep.subr.bf16.mxu0 %v3625
    %5598 = vmatpush1.bf16.msra.mxu0 %v3624
    %5599 = vmatprep.subr.bf16.mxu0 %v3609
    %5600 = vmatpush1.bf16.msra.mxu0 %v3608
    %5601 = vmatprep.subr.bf16.mxu0 %v3593
    %5602 = vmatpush1.bf16.msra.mxu0 %v3592
    %5603 = vmatprep.subr.bf16.mxu0 %v3577
    %5604 = vmatpush1.bf16.msra.mxu0 %v3576
    %5605 = vmatprep.subr.bf16.mxu0 %v3561
    %5606 = vmatpush1.bf16.msra.mxu0 %v3560
    %5607 = vmatprep.subr.bf16.mxu0 %v3545
    %5608 = vmatpush1.bf16.msra.mxu0 %v3544
    %5609 = vmatprep.subr.bf16.mxu0 %v3529
    %5610 = vmatpush1.bf16.msra.mxu0 %v3528
    %5611 = vmatprep.subr.bf16.mxu0 %v3513
    %5612 = vmatpush1.bf16.msra.mxu0 %v3512
    %5613 = vmatprep.subr.bf16.mxu0 %v3753
    %5614 = vmatpush2.bf16.msra.mxu0 %v3752
    %5615 = vmatprep.subr.bf16.mxu0 %v3737
    %5616 = vmatpush2.bf16.msra.mxu0 %v3736
    %5617 = vmatprep.subr.bf16.mxu0 %v3721
    %5618 = vmatpush2.bf16.msra.mxu0 %v3720
    %5619 = vmatprep.subr.bf16.mxu0 %v3705
    %5620 = vmatpush2.bf16.msra.mxu0 %v3704
    %5621 = vmatprep.subr.bf16.mxu0 %v3689
    %5622 = vmatpush2.bf16.msra.mxu0 %v3688
    %5623 = vmatprep.subr.bf16.mxu0 %v3673
    %5624 = vmatpush2.bf16.msra.mxu0 %v3672
    %5625 = vmatprep.subr.bf16.mxu0 %v3657
    %5626 = vmatpush2.bf16.msra.mxu0 %v3656
    %5627 = vmatprep.subr.bf16.mxu0 %v3641
    %5628 = vmatpush2.bf16.msra.mxu0 %v3640
    %5629 = vmatprep.mubr.bf16.mxu0 %v931
    %5630 = vmatmul.mubr.bf16.gmra.mxu0 %v930
    %v5631 = vpop.f32.mrf.mxu0
    %v5632 = vadd.f32 %v5589, %v5631
    %v5633 = vpop.f32.mrf.mxu0
    %v5634 = vadd.f32 %v5591, %v5633
    %v5635 = vpop.f32.mrf.mxu0
    %v5636 = vadd.f32 %v5593, %v5635
    %v5637 = vpop.f32.mrf.mxu0
    %v5638 = vadd.f32 %v5595, %v5637
    %5639 = vdwg.mxu0
    %5640 = vmatprep.subr.bf16.mxu0 %v3881
    %5641 = vmatpush1.bf16.msra.mxu0 %v3880
    %5642 = vmatprep.subr.bf16.mxu0 %v3865
    %5643 = vmatpush1.bf16.msra.mxu0 %v3864
    %5644 = vmatprep.subr.bf16.mxu0 %v3849
    %5645 = vmatpush1.bf16.msra.mxu0 %v3848
    %5646 = vmatprep.subr.bf16.mxu0 %v3833
    %5647 = vmatpush1.bf16.msra.mxu0 %v3832
    %5648 = vmatprep.subr.bf16.mxu0 %v3817
    %5649 = vmatpush1.bf16.msra.mxu0 %v3816
    %5650 = vmatprep.subr.bf16.mxu0 %v3801
    %5651 = vmatpush1.bf16.msra.mxu0 %v3800
    %5652 = vmatprep.subr.bf16.mxu0 %v3785
    %5653 = vmatpush1.bf16.msra.mxu0 %v3784
    %5654 = vmatprep.subr.bf16.mxu0 %v3769
    %5655 = vmatpush1.bf16.msra.mxu0 %v3768
    %5656 = vmatprep.subr.bf16.mxu0 %v4009
    %5657 = vmatpush2.bf16.msra.mxu0 %v4008
    %5658 = vmatprep.subr.bf16.mxu0 %v3993
    %5659 = vmatpush2.bf16.msra.mxu0 %v3992
    %5660 = vmatprep.subr.bf16.mxu0 %v3977
    %5661 = vmatpush2.bf16.msra.mxu0 %v3976
    %5662 = vmatprep.subr.bf16.mxu0 %v3961
    %5663 = vmatpush2.bf16.msra.mxu0 %v3960
    %5664 = vmatprep.subr.bf16.mxu0 %v3945
    %5665 = vmatpush2.bf16.msra.mxu0 %v3944
    %5666 = vmatprep.subr.bf16.mxu0 %v3929
    %5667 = vmatpush2.bf16.msra.mxu0 %v3928
    %5668 = vmatprep.subr.bf16.mxu0 %v3913
    %5669 = vmatpush2.bf16.msra.mxu0 %v3912
    %5670 = vmatprep.subr.bf16.mxu0 %v3897
    %5671 = vmatpush2.bf16.msra.mxu0 %v3896
    %5672 = vmatprep.mubr.bf16.mxu0 %v933
    %5673 = vmatmul.mubr.bf16.gmra.mxu0 %v932
    %v5674 = vpop.f32.mrf.mxu0
    %v5675 = vadd.f32 %v5632, %v5674
    %v5676 = vpop.f32.mrf.mxu0
    %v5677 = vadd.f32 %v5634, %v5676
    %v5678 = vpop.f32.mrf.mxu0
    %v5679 = vadd.f32 %v5636, %v5678
    %v5680 = vpop.f32.mrf.mxu0
    %v5681 = vadd.f32 %v5638, %v5680
    %5682 = vdwg.mxu0
    %5683 = vmatprep.subr.bf16.mxu0 %v3371
    %5684 = vmatpush1.bf16.msra.mxu0 %v3370
    %5685 = vmatprep.subr.bf16.mxu0 %v3355
    %5686 = vmatpush1.bf16.msra.mxu0 %v3354
    %5687 = vmatprep.subr.bf16.mxu0 %v3339
    %5688 = vmatpush1.bf16.msra.mxu0 %v3338
    %5689 = vmatprep.subr.bf16.mxu0 %v3323
    %5690 = vmatpush1.bf16.msra.mxu0 %v3322
    %5691 = vmatprep.subr.bf16.mxu0 %v3307
    %5692 = vmatpush1.bf16.msra.mxu0 %v3306
    %5693 = vmatprep.subr.bf16.mxu0 %v3291
    %5694 = vmatpush1.bf16.msra.mxu0 %v3290
    %5695 = vmatprep.subr.bf16.mxu0 %v3275
    %5696 = vmatpush1.bf16.msra.mxu0 %v3274
    %5697 = vmatprep.subr.bf16.mxu0 %v3259
    %5698 = vmatpush1.bf16.msra.mxu0 %v3258
    %5699 = vmatprep.subr.bf16.mxu0 %v3499
    %5700 = vmatpush2.bf16.msra.mxu0 %v3498
    %5701 = vmatprep.subr.bf16.mxu0 %v3483
    %5702 = vmatpush2.bf16.msra.mxu0 %v3482
    %5703 = vmatprep.subr.bf16.mxu0 %v3467
    %5704 = vmatpush2.bf16.msra.mxu0 %v3466
    %5705 = vmatprep.subr.bf16.mxu0 %v3451
    %5706 = vmatpush2.bf16.msra.mxu0 %v3450
    %5707 = vmatprep.subr.bf16.mxu0 %v3435
    %5708 = vmatpush2.bf16.msra.mxu0 %v3434
    %5709 = vmatprep.subr.bf16.mxu0 %v3419
    %5710 = vmatpush2.bf16.msra.mxu0 %v3418
    %5711 = vmatprep.subr.bf16.mxu0 %v3403
    %5712 = vmatpush2.bf16.msra.mxu0 %v3402
    %5713 = vmatprep.subr.bf16.mxu0 %v3387
    %5714 = vmatpush2.bf16.msra.mxu0 %v3386
    %5715 = vmatprep.mubr.bf16.mxu0 %v929
    %5716 = vmatmul.mubr.bf16.gmra.mxu0 %v928
    %v5717 = vpop.f32.mrf.mxu0
    %v5718 = vadd.f32 0.0, %v5717
    %v5719 = vpop.f32.mrf.mxu0
    %v5720 = vadd.f32 0.0, %v5719
    %v5721 = vpop.f32.mrf.mxu0
    %v5722 = vadd.f32 0.0, %v5721
    %v5723 = vpop.f32.mrf.mxu0
    %v5724 = vadd.f32 0.0, %v5723
    %5725 = vdwg.mxu0
    %5726 = vmatprep.subr.bf16.mxu0 %v3627
    %5727 = vmatpush1.bf16.msra.mxu0 %v3626
    %5728 = vmatprep.subr.bf16.mxu0 %v3611
    %5729 = vmatpush1.bf16.msra.mxu0 %v3610
    %5730 = vmatprep.subr.bf16.mxu0 %v3595
    %5731 = vmatpush1.bf16.msra.mxu0 %v3594
    %5732 = vmatprep.subr.bf16.mxu0 %v3579
    %5733 = vmatpush1.bf16.msra.mxu0 %v3578
    %5734 = vmatprep.subr.bf16.mxu0 %v3563
    %5735 = vmatpush1.bf16.msra.mxu0 %v3562
    %5736 = vmatprep.subr.bf16.mxu0 %v3547
    %5737 = vmatpush1.bf16.msra.mxu0 %v3546
    %5738 = vmatprep.subr.bf16.mxu0 %v3531
    %5739 = vmatpush1.bf16.msra.mxu0 %v3530
    %5740 = vmatprep.subr.bf16.mxu0 %v3515
    %5741 = vmatpush1.bf16.msra.mxu0 %v3514
    %5742 = vmatprep.subr.bf16.mxu0 %v3755
    %5743 = vmatpush2.bf16.msra.mxu0 %v3754
    %5744 = vmatprep.subr.bf16.mxu0 %v3739
    %5745 = vmatpush2.bf16.msra.mxu0 %v3738
    %5746 = vmatprep.subr.bf16.mxu0 %v3723
    %5747 = vmatpush2.bf16.msra.mxu0 %v3722
    %5748 = vmatprep.subr.bf16.mxu0 %v3707
    %5749 = vmatpush2.bf16.msra.mxu0 %v3706
    %5750 = vmatprep.subr.bf16.mxu0 %v3691
    %5751 = vmatpush2.bf16.msra.mxu0 %v3690
    %5752 = vmatprep.subr.bf16.mxu0 %v3675
    %5753 = vmatpush2.bf16.msra.mxu0 %v3674
    %5754 = vmatprep.subr.bf16.mxu0 %v3659
    %5755 = vmatpush2.bf16.msra.mxu0 %v3658
    %5756 = vmatprep.subr.bf16.mxu0 %v3643
    %5757 = vmatpush2.bf16.msra.mxu0 %v3642
    %5758 = vmatprep.mubr.bf16.mxu0 %v931
    %5759 = vmatmul.mubr.bf16.gmra.mxu0 %v930
    %v5760 = vpop.f32.mrf.mxu0
    %v5761 = vadd.f32 %v5718, %v5760
    %v5762 = vpop.f32.mrf.mxu0
    %v5763 = vadd.f32 %v5720, %v5762
    %v5764 = vpop.f32.mrf.mxu0
    %v5765 = vadd.f32 %v5722, %v5764
    %v5766 = vpop.f32.mrf.mxu0
    %v5767 = vadd.f32 %v5724, %v5766
    %5768 = vdwg.mxu0
    %5769 = vmatprep.subr.bf16.mxu0 %v3883
    %5770 = vmatpush1.bf16.msra.mxu0 %v3882
    %5771 = vmatprep.subr.bf16.mxu0 %v3867
    %5772 = vmatpush1.bf16.msra.mxu0 %v3866
    %5773 = vmatprep.subr.bf16.mxu0 %v3851
    %5774 = vmatpush1.bf16.msra.mxu0 %v3850
    %5775 = vmatprep.subr.bf16.mxu0 %v3835
    %5776 = vmatpush1.bf16.msra.mxu0 %v3834
    %5777 = vmatprep.subr.bf16.mxu0 %v3819
    %5778 = vmatpush1.bf16.msra.mxu0 %v3818
    %5779 = vmatprep.subr.bf16.mxu0 %v3803
    %5780 = vmatpush1.bf16.msra.mxu0 %v3802
    %5781 = vmatprep.subr.bf16.mxu0 %v3787
    %5782 = vmatpush1.bf16.msra.mxu0 %v3786
    %5783 = vmatprep.subr.bf16.mxu0 %v3771
    %5784 = vmatpush1.bf16.msra.mxu0 %v3770
    %5785 = vmatprep.subr.bf16.mxu0 %v4011
    %5786 = vmatpush2.bf16.msra.mxu0 %v4010
    %5787 = vmatprep.subr.bf16.mxu0 %v3995
    %5788 = vmatpush2.bf16.msra.mxu0 %v3994
    %5789 = vmatprep.subr.bf16.mxu0 %v3979
    %5790 = vmatpush2.bf16.msra.mxu0 %v3978
    %5791 = vmatprep.subr.bf16.mxu0 %v3963
    %5792 = vmatpush2.bf16.msra.mxu0 %v3962
    %5793 = vmatprep.subr.bf16.mxu0 %v3947
    %5794 = vmatpush2.bf16.msra.mxu0 %v3946
    %5795 = vmatprep.subr.bf16.mxu0 %v3931
    %5796 = vmatpush2.bf16.msra.mxu0 %v3930
    %5797 = vmatprep.subr.bf16.mxu0 %v3915
    %5798 = vmatpush2.bf16.msra.mxu0 %v3914
    %5799 = vmatprep.subr.bf16.mxu0 %v3899
    %5800 = vmatpush2.bf16.msra.mxu0 %v3898
    %5801 = vmatprep.mubr.bf16.mxu0 %v933
    %5802 = vmatmul.mubr.bf16.gmra.mxu0 %v932
    %v5803 = vpop.f32.mrf.mxu0
    %v5804 = vadd.f32 %v5761, %v5803
    %v5805 = vpop.f32.mrf.mxu0
    %v5806 = vadd.f32 %v5763, %v5805
    %v5807 = vpop.f32.mrf.mxu0
    %v5808 = vadd.f32 %v5765, %v5807
    %v5809 = vpop.f32.mrf.mxu0
    %v5810 = vadd.f32 %v5767, %v5809
    %5811 = vdwg.mxu0
    %v5812 = vadd.f32 %v104, %v4901
    %v5813 = vadd.f32 %v105, %v4903
    %v5814 = vadd.f32 %v106, %v5030
    %v5815 = vadd.f32 %v107, %v5032
    %v5816 = vadd.f32 %v108, %v5159
    %v5817 = vadd.f32 %v109, %v5161
    %v5818 = vadd.f32 %v110, %v5288
    %v5819 = vadd.f32 %v111, %v5290
    %v5820 = vadd.f32 %v112, %v5417
    %v5821 = vadd.f32 %v113, %v5419
    %v5822 = vadd.f32 %v114, %v5546
    %v5823 = vadd.f32 %v115, %v5548
    %v5824 = vadd.f32 %v116, %v5675
    %v5825 = vadd.f32 %v117, %v5677
    %v5826 = vadd.f32 %v118, %v5804
    %v5827 = vadd.f32 %v119, %v5806
    %v5828 = vadd.f32 %v120, %v4905
    %v5829 = vadd.f32 %v121, %v4907
    %v5830 = vadd.f32 %v122, %v5034
    %v5831 = vadd.f32 %v123, %v5036
    %v5832 = vadd.f32 %v124, %v5163
    %v5833 = vadd.f32 %v125, %v5165
    %v5834 = vadd.f32 %v126, %v5292
    %v5835 = vadd.f32 %v127, %v5294
    %v5836 = vadd.f32 %v128, %v5421
    %v5837 = vadd.f32 %v129, %v5423
    %v5838 = vadd.f32 %v130, %v5550
    %v5839 = vadd.f32 %v131, %v5552
    %v5840 = vadd.f32 %v132, %v5679
    %v5841 = vadd.f32 %v133, %v5681
    %v5842 = vadd.f32 %v134, %v5808
    %v5843 = vadd.f32 %v135, %v5810
    %5844 = vst [vmem:[#allocation2] sm:$0xff] %v5812
    %5845 = vst [vmem:[#allocation2 + $0x8] sm:$0xff] %v5813
    %5846 = vst [vmem:[#allocation2 + $0x10] sm:$0xff] %v5814
    %5847 = vst [vmem:[#allocation2 + $0x18] sm:$0xff] %v5815
    %5848 = vst [vmem:[#allocation2 + $0x20] sm:$0xff] %v5816
    %5849 = vst [vmem:[#allocation2 + $0x28] sm:$0xff] %v5817
    %5850 = vst [vmem:[#allocation2 + $0x30] sm:$0xff] %v5818
    %5851 = vst [vmem:[#allocation2 + $0x38] sm:$0xff] %v5819
    %5852 = vst [vmem:[#allocation2 + $0x40] sm:$0xff] %v5820
    %5853 = vst [vmem:[#allocation2 + $0x48] sm:$0xff] %v5821
    %5854 = vst [vmem:[#allocation2 + $0x50] sm:$0xff] %v5822
    %5855 = vst [vmem:[#allocation2 + $0x58] sm:$0xff] %v5823
    %5856 = vst [vmem:[#allocation2 + $0x60] sm:$0xff] %v5824
    %5857 = vst [vmem:[#allocation2 + $0x68] sm:$0xff] %v5825
    %5858 = vst [vmem:[#allocation2 + $0x70] sm:$0xff] %v5826
    %5859 = vst [vmem:[#allocation2 + $0x78] sm:$0xff] %v5827
    %5860 = vst [vmem:[#allocation2 + $0x80] sm:$0xff] %v5828
    %5861 = vst [vmem:[#allocation2 + $0x88] sm:$0xff] %v5829
    %5862 = vst [vmem:[#allocation2 + $0x90] sm:$0xff] %v5830
    %5863 = vst [vmem:[#allocation2 + $0x98] sm:$0xff] %v5831
    %5864 = vst [vmem:[#allocation2 + $0xa0] sm:$0xff] %v5832
    %5865 = vst [vmem:[#allocation2 + $0xa8] sm:$0xff] %v5833
    %5866 = vst [vmem:[#allocation2 + $0xb0] sm:$0xff] %v5834
    %5867 = vst [vmem:[#allocation2 + $0xb8] sm:$0xff] %v5835
    %5868 = vst [vmem:[#allocation2 + $0xc0] sm:$0xff] %v5836
    %5869 = vst [vmem:[#allocation2 + $0xc8] sm:$0xff] %v5837
    %5870 = vst [vmem:[#allocation2 + $0xd0] sm:$0xff] %v5838
    %5871 = vst [vmem:[#allocation2 + $0xd8] sm:$0xff] %v5839
    %5872 = vst [vmem:[#allocation2 + $0xe0] sm:$0xff] %v5840
    %5873 = vst [vmem:[#allocation2 + $0xe8] sm:$0xff] %v5841
    %5874 = vst [vmem:[#allocation2 + $0xf0] sm:$0xff] %v5842
    %5875 = vst [vmem:[#allocation2 + $0xf8] sm:$0xff] %v5843
    // Predicated region
    $region38: #{tpu_custom_call.1} parent=1 // pred_check
      %p5876 = pneg %p68
    $region39: #{tpu_custom_call.1} parent=1 // pred_check_branch
      %5878 = sbr.rel (%p5876) target = $region41
    $region40: #{tpu_custom_call.1} parent=1 // pred_region
      %v5879 = vld [vmem:[#allocation2] sm:$0xff]
      %v5880 = vld [vmem:[#allocation2 + $0x8] sm:$0xff]
      %v5881 = vld [vmem:[#allocation2 + $0x10] sm:$0xff]
      %v5882 = vld [vmem:[#allocation2 + $0x18] sm:$0xff]
      %v5883 = vld [vmem:[#allocation2 + $0x20] sm:$0xff]
      %v5884 = vld [vmem:[#allocation2 + $0x28] sm:$0xff]
      %v5885 = vld [vmem:[#allocation2 + $0x30] sm:$0xff]
      %v5886 = vld [vmem:[#allocation2 + $0x38] sm:$0xff]
      %v5887 = vld [vmem:[#allocation2 + $0x40] sm:$0xff]
      %v5888 = vld [vmem:[#allocation2 + $0x48] sm:$0xff]
      %v5889 = vld [vmem:[#allocation2 + $0x50] sm:$0xff]
      %v5890 = vld [vmem:[#allocation2 + $0x58] sm:$0xff]
      %v5891 = vld [vmem:[#allocation2 + $0x60] sm:$0xff]
      %v5892 = vld [vmem:[#allocation2 + $0x68] sm:$0xff]
      %v5893 = vld [vmem:[#allocation2 + $0x70] sm:$0xff]
      %v5894 = vld [vmem:[#allocation2 + $0x78] sm:$0xff]
      %v5895 = vld [vmem:[#allocation2 + $0x80] sm:$0xff]
      %v5896 = vld [vmem:[#allocation2 + $0x88] sm:$0xff]
      %v5897 = vld [vmem:[#allocation2 + $0x90] sm:$0xff]
      %v5898 = vld [vmem:[#allocation2 + $0x98] sm:$0xff]
      %v5899 = vld [vmem:[#allocation2 + $0xa0] sm:$0xff]
      %v5900 = vld [vmem:[#allocation2 + $0xa8] sm:$0xff]
      %v5901 = vld [vmem:[#allocation2 + $0xb0] sm:$0xff]
      %v5902 = vld [vmem:[#allocation2 + $0xb8] sm:$0xff]
      %v5903 = vld [vmem:[#allocation2 + $0xc0] sm:$0xff]
      %v5904 = vld [vmem:[#allocation2 + $0xc8] sm:$0xff]
      %v5905 = vld [vmem:[#allocation2 + $0xd0] sm:$0xff]
      %v5906 = vld [vmem:[#allocation2 + $0xd8] sm:$0xff]
      %v5907 = vld [vmem:[#allocation2 + $0xe0] sm:$0xff]
      %v5908 = vld [vmem:[#allocation2 + $0xe8] sm:$0xff]
      %v5909 = vld [vmem:[#allocation2 + $0xf0] sm:$0xff]
      %v5910 = vld [vmem:[#allocation2 + $0xf8] sm:$0xff]
      %v5911 = vld [vmem:[#allocation8] sm:$0xff]
      %v5912 = vld [vmem:[#allocation8 + $0x8] sm:$0xff]
      %v5915 = vlaneseq
      %v5916 = vshrl.u32 %v5915, 7
      %v5917 = vsub.s32 0, %v5916
      %v5918 = vrot.slane %v5911, %v5917
      %v5919 = vlaneseq
      %v5920 = vshrl.u32 %v5919, 7
      %v5921 = vsub.s32 1, %v5920
      %v5922 = vrot.slane %v5911, %v5921
      %v5923 = vlaneseq
      %v5924 = vshrl.u32 %v5923, 7
      %v5925 = vsub.s32 2, %v5924
      %v5926 = vrot.slane %v5911, %v5925
      %v5927 = vlaneseq
      %v5928 = vshrl.u32 %v5927, 7
      %v5929 = vsub.s32 3, %v5928
      %v5930 = vrot.slane %v5911, %v5929
      %v5931 = vlaneseq
      %v5932 = vshrl.u32 %v5931, 7
      %v5933 = vsub.s32 4, %v5932
      %v5934 = vrot.slane %v5911, %v5933
      %v5935 = vlaneseq
      %v5936 = vshrl.u32 %v5935, 7
      %v5937 = vsub.s32 5, %v5936
      %v5938 = vrot.slane %v5911, %v5937
      %v5939 = vlaneseq
      %v5940 = vshrl.u32 %v5939, 7
      %v5941 = vsub.s32 6, %v5940
      %v5942 = vrot.slane %v5911, %v5941
      %v5943 = vlaneseq
      %v5944 = vshrl.u32 %v5943, 7
      %v5945 = vsub.s32 7, %v5944
      %v5946 = vrot.slane %v5911, %v5945
      %v5947 = vlaneseq
      %v5948 = vshrl.u32 %v5947, 7
      %v5949 = vsub.s32 0, %v5948
      %v5950 = vrot.slane %v5912, %v5949
      %v5951 = vlaneseq
      %v5952 = vshrl.u32 %v5951, 7
      %v5953 = vsub.s32 1, %v5952
      %v5954 = vrot.slane %v5912, %v5953
      %v5955 = vlaneseq
      %v5956 = vshrl.u32 %v5955, 7
      %v5957 = vsub.s32 2, %v5956
      %v5958 = vrot.slane %v5912, %v5957
      %v5959 = vlaneseq
      %v5960 = vshrl.u32 %v5959, 7
      %v5961 = vsub.s32 3, %v5960
      %v5962 = vrot.slane %v5912, %v5961
      %v5963 = vlaneseq
      %v5964 = vshrl.u32 %v5963, 7
      %v5965 = vsub.s32 4, %v5964
      %v5966 = vrot.slane %v5912, %v5965
      %v5967 = vlaneseq
      %v5968 = vshrl.u32 %v5967, 7
      %v5969 = vsub.s32 5, %v5968
      %v5970 = vrot.slane %v5912, %v5969
      %v5971 = vlaneseq
      %v5972 = vshrl.u32 %v5971, 7
      %v5973 = vsub.s32 6, %v5972
      %v5974 = vrot.slane %v5912, %v5973
      %v5975 = vlaneseq
      %v5976 = vshrl.u32 %v5975, 7
      %v5977 = vsub.s32 7, %v5976
      %v5978 = vrot.slane %v5912, %v5977
      %v5995 = vadd.f32 %v5879, %v5918
      %v5996 = vadd.f32 %v5880, %v5922
      %v5997 = vadd.f32 %v5881, %v5926
      %v5998 = vadd.f32 %v5882, %v5930
      %v5999 = vadd.f32 %v5883, %v5934
      %v6000 = vadd.f32 %v5884, %v5938
      %v6001 = vadd.f32 %v5885, %v5942
      %v6002 = vadd.f32 %v5886, %v5946
      %v6003 = vadd.f32 %v5887, %v5950
      %v6004 = vadd.f32 %v5888, %v5954
      %v6005 = vadd.f32 %v5889, %v5958
      %v6006 = vadd.f32 %v5890, %v5962
      %v6007 = vadd.f32 %v5891, %v5966
      %v6008 = vadd.f32 %v5892, %v5970
      %v6009 = vadd.f32 %v5893, %v5974
      %v6010 = vadd.f32 %v5894, %v5978
      %v6011 = vadd.f32 %v5895, %v5918
      %v6012 = vadd.f32 %v5896, %v5922
      %v6013 = vadd.f32 %v5897, %v5926
      %v6014 = vadd.f32 %v5898, %v5930
      %v6015 = vadd.f32 %v5899, %v5934
      %v6016 = vadd.f32 %v5900, %v5938
      %v6017 = vadd.f32 %v5901, %v5942
      %v6018 = vadd.f32 %v5902, %v5946
      %v6019 = vadd.f32 %v5903, %v5950
      %v6020 = vadd.f32 %v5904, %v5954
      %v6021 = vadd.f32 %v5905, %v5958
      %v6022 = vadd.f32 %v5906, %v5962
      %v6023 = vadd.f32 %v5907, %v5966
      %v6024 = vadd.f32 %v5908, %v5970
      %v6025 = vadd.f32 %v5909, %v5974
      %v6026 = vadd.f32 %v5910, %v5978
      %v6027 = vld [vmem:[#allocation3] sm:$0xf]
      %vm6028 = vcmask 64512
      %v6030 = vsel %vm6028, %v6027, 0
      %6032 = vmatprep.subr.mxu0 0.0
      %6033 = vmatpush1.msra.mxu0 0.0
      %6034 = vmatprep.subr.mxu0 0.0
      %6035 = vmatpush1.msra.mxu0 0.0
      %6036 = vmatprep.subr.mxu0 0.0
      %6037 = vmatpush1.msra.mxu0 0.0
      %6038 = vmatprep.subr.mxu0 0.0
      %6039 = vmatpush1.msra.mxu0 0.0
      %6040 = vmatprep.subr.mxu0 0.0
      %6041 = vmatpush1.msra.mxu0 0.0
      %6042 = vmatprep.subr.mxu0 0.0
      %6043 = vmatpush1.msra.mxu0 0.0
      %6044 = vmatprep.subr.mxu0 0.0
      %6045 = vmatpush1.msra.mxu0 0.0
      %6046 = vmatprep.subr.mxu0 0.0
      %6047 = vmatpush1.msra.mxu0 0.0
      %6048 = vmatprep.subr.mxu0 0.0
      %6049 = vmatpush1.msra.mxu0 0.0
      %6050 = vmatprep.subr.mxu0 0.0
      %6051 = vmatpush1.msra.mxu0 0.0
      %6052 = vmatprep.subr.mxu0 0.0
      %6053 = vmatpush1.msra.mxu0 0.0
      %6054 = vmatprep.subr.mxu0 0.0
      %6055 = vmatpush1.msra.mxu0 0.0
      %6056 = vmatprep.subr.mxu0 0.0
      %6057 = vmatpush1.msra.mxu0 0.0
      %6058 = vmatprep.subr.mxu0 0.0
      %6059 = vmatpush1.msra.mxu0 0.0
      %6060 = vmatprep.subr.mxu0 0.0
      %6061 = vmatpush1.msra.mxu0 0.0
      %6062 = vmatprep.subr.mxu0 %v5996
      %6063 = vmatpush1.msra.mxu0 %v5995
      %6064 = vmatprep.subr.mxu0 0.0
      %6065 = vmatpush2.msra.mxu0 0.0
      %6066 = vmatprep.subr.mxu0 0.0
      %6067 = vmatpush2.msra.mxu0 0.0
      %6068 = vmatprep.subr.mxu0 0.0
      %6069 = vmatpush2.msra.mxu0 0.0
      %6070 = vmatprep.subr.mxu0 0.0
      %6071 = vmatpush2.msra.mxu0 0.0
      %6072 = vmatprep.subr.mxu0 0.0
      %6073 = vmatpush2.msra.mxu0 0.0
      %6074 = vmatprep.subr.mxu0 0.0
      %6075 = vmatpush2.msra.mxu0 0.0
      %6076 = vmatprep.subr.mxu0 0.0
      %6077 = vmatpush2.msra.mxu0 0.0
      %6078 = vmatprep.subr.mxu0 0.0
      %6079 = vmatpush2.msra.mxu0 0.0
      %6080 = vmatprep.subr.mxu0 0.0
      %6081 = vmatpush2.msra.mxu0 0.0
      %6082 = vmatprep.subr.mxu0 0.0
      %6083 = vmatpush2.msra.mxu0 0.0
      %6084 = vmatprep.subr.mxu0 0.0
      %6085 = vmatpush2.msra.mxu0 0.0
      %6086 = vmatprep.subr.mxu0 0.0
      %6087 = vmatpush2.msra.mxu0 0.0
      %6088 = vmatprep.subr.mxu0 0.0
      %6089 = vmatpush2.msra.mxu0 0.0
      %6090 = vmatprep.subr.mxu0 0.0
      %6091 = vmatpush2.msra.mxu0 0.0
      %6092 = vmatprep.subr.mxu0 0.0
      %6093 = vmatpush2.msra.mxu0 0.0
      %6094 = vmatprep.subr.mxu0 0.0
      %6095 = vmatpush2.msra.mxu0 0.0
      %6096 = vmatprep.mubr.f32.mxu0 0.0
      %6097 = vmatmul.mubr.f32.gmra.mxu0 %v6030
      %v6098 = vpop.f32.mrf.mxu0
      %v6099 = vadd.f32 0.0, %v6098
      %v6100 = vpop.f32.mrf.mxu0
      %v6101 = vadd.f32 0.0, %v6100
      %6102 = vdwg.mxu0
      %6103 = vmatprep.subr.mxu0 0.0
      %6104 = vmatpush1.msra.mxu0 0.0
      %6105 = vmatprep.subr.mxu0 0.0
      %6106 = vmatpush1.msra.mxu0 0.0
      %6107 = vmatprep.subr.mxu0 0.0
      %6108 = vmatpush1.msra.mxu0 0.0
      %6109 = vmatprep.subr.mxu0 0.0
      %6110 = vmatpush1.msra.mxu0 0.0
      %6111 = vmatprep.subr.mxu0 0.0
      %6112 = vmatpush1.msra.mxu0 0.0
      %6113 = vmatprep.subr.mxu0 0.0
      %6114 = vmatpush1.msra.mxu0 0.0
      %6115 = vmatprep.subr.mxu0 0.0
      %6116 = vmatpush1.msra.mxu0 0.0
      %6117 = vmatprep.subr.mxu0 0.0
      %6118 = vmatpush1.msra.mxu0 0.0
      %6119 = vmatprep.subr.mxu0 0.0
      %6120 = vmatpush1.msra.mxu0 0.0
      %6121 = vmatprep.subr.mxu0 0.0
      %6122 = vmatpush1.msra.mxu0 0.0
      %6123 = vmatprep.subr.mxu0 0.0
      %6124 = vmatpush1.msra.mxu0 0.0
      %6125 = vmatprep.subr.mxu0 0.0
      %6126 = vmatpush1.msra.mxu0 0.0
      %6127 = vmatprep.subr.mxu0 0.0
      %6128 = vmatpush1.msra.mxu0 0.0
      %6129 = vmatprep.subr.mxu0 0.0
      %6130 = vmatpush1.msra.mxu0 0.0
      %6131 = vmatprep.subr.mxu0 0.0
      %6132 = vmatpush1.msra.mxu0 0.0
      %6133 = vmatprep.subr.mxu0 %v5998
      %6134 = vmatpush1.msra.mxu0 %v5997
      %6135 = vmatprep.subr.mxu0 0.0
      %6136 = vmatpush2.msra.mxu0 0.0
      %6137 = vmatprep.subr.mxu0 0.0
      %6138 = vmatpush2.msra.mxu0 0.0
      %6139 = vmatprep.subr.mxu0 0.0
      %6140 = vmatpush2.msra.mxu0 0.0
      %6141 = vmatprep.subr.mxu0 0.0
      %6142 = vmatpush2.msra.mxu0 0.0
      %6143 = vmatprep.subr.mxu0 0.0
      %6144 = vmatpush2.msra.mxu0 0.0
      %6145 = vmatprep.subr.mxu0 0.0
      %6146 = vmatpush2.msra.mxu0 0.0
      %6147 = vmatprep.subr.mxu0 0.0
      %6148 = vmatpush2.msra.mxu0 0.0
      %6149 = vmatprep.subr.mxu0 0.0
      %6150 = vmatpush2.msra.mxu0 0.0
      %6151 = vmatprep.subr.mxu0 0.0
      %6152 = vmatpush2.msra.mxu0 0.0
      %6153 = vmatprep.subr.mxu0 0.0
      %6154 = vmatpush2.msra.mxu0 0.0
      %6155 = vmatprep.subr.mxu0 0.0
      %6156 = vmatpush2.msra.mxu0 0.0
      %6157 = vmatprep.subr.mxu0 0.0
      %6158 = vmatpush2.msra.mxu0 0.0
      %6159 = vmatprep.subr.mxu0 0.0
      %6160 = vmatpush2.msra.mxu0 0.0
      %6161 = vmatprep.subr.mxu0 0.0
      %6162 = vmatpush2.msra.mxu0 0.0
      %6163 = vmatprep.subr.mxu0 0.0
      %6164 = vmatpush2.msra.mxu0 0.0
      %6165 = vmatprep.subr.mxu0 0.0
      %6166 = vmatpush2.msra.mxu0 0.0
      %6167 = vmatprep.mubr.f32.mxu0 0.0
      %6168 = vmatmul.mubr.f32.gmra.mxu0 %v6030
      %v6169 = vpop.f32.mrf.mxu0
      %v6170 = vadd.f32 0.0, %v6169
      %v6171 = vpop.f32.mrf.mxu0
      %v6172 = vadd.f32 0.0, %v6171
      %6173 = vdwg.mxu0
      %6174 = vmatprep.subr.mxu0 0.0
      %6175 = vmatpush1.msra.mxu0 0.0
      %6176 = vmatprep.subr.mxu0 0.0
      %6177 = vmatpush1.msra.mxu0 0.0
      %6178 = vmatprep.subr.mxu0 0.0
      %6179 = vmatpush1.msra.mxu0 0.0
      %6180 = vmatprep.subr.mxu0 0.0
      %6181 = vmatpush1.msra.mxu0 0.0
      %6182 = vmatprep.subr.mxu0 0.0
      %6183 = vmatpush1.msra.mxu0 0.0
      %6184 = vmatprep.subr.mxu0 0.0
      %6185 = vmatpush1.msra.mxu0 0.0
      %6186 = vmatprep.subr.mxu0 0.0
      %6187 = vmatpush1.msra.mxu0 0.0
      %6188 = vmatprep.subr.mxu0 0.0
      %6189 = vmatpush1.msra.mxu0 0.0
      %6190 = vmatprep.subr.mxu0 0.0
      %6191 = vmatpush1.msra.mxu0 0.0
      %6192 = vmatprep.subr.mxu0 0.0
      %6193 = vmatpush1.msra.mxu0 0.0
      %6194 = vmatprep.subr.mxu0 0.0
      %6195 = vmatpush1.msra.mxu0 0.0
      %6196 = vmatprep.subr.mxu0 0.0
      %6197 = vmatpush1.msra.mxu0 0.0
      %6198 = vmatprep.subr.mxu0 0.0
      %6199 = vmatpush1.msra.mxu0 0.0
      %6200 = vmatprep.subr.mxu0 0.0
      %6201 = vmatpush1.msra.mxu0 0.0
      %6202 = vmatprep.subr.mxu0 0.0
      %6203 = vmatpush1.msra.mxu0 0.0
      %6204 = vmatprep.subr.mxu0 %v6000
      %6205 = vmatpush1.msra.mxu0 %v5999
      %6206 = vmatprep.subr.mxu0 0.0
      %6207 = vmatpush2.msra.mxu0 0.0
      %6208 = vmatprep.subr.mxu0 0.0
      %6209 = vmatpush2.msra.mxu0 0.0
      %6210 = vmatprep.subr.mxu0 0.0
      %6211 = vmatpush2.msra.mxu0 0.0
      %6212 = vmatprep.subr.mxu0 0.0
      %6213 = vmatpush2.msra.mxu0 0.0
      %6214 = vmatprep.subr.mxu0 0.0
      %6215 = vmatpush2.msra.mxu0 0.0
      %6216 = vmatprep.subr.mxu0 0.0
      %6217 = vmatpush2.msra.mxu0 0.0
      %6218 = vmatprep.subr.mxu0 0.0
      %6219 = vmatpush2.msra.mxu0 0.0
      %6220 = vmatprep.subr.mxu0 0.0
      %6221 = vmatpush2.msra.mxu0 0.0
      %6222 = vmatprep.subr.mxu0 0.0
      %6223 = vmatpush2.msra.mxu0 0.0
      %6224 = vmatprep.subr.mxu0 0.0
      %6225 = vmatpush2.msra.mxu0 0.0
      %6226 = vmatprep.subr.mxu0 0.0
      %6227 = vmatpush2.msra.mxu0 0.0
      %6228 = vmatprep.subr.mxu0 0.0
      %6229 = vmatpush2.msra.mxu0 0.0
      %6230 = vmatprep.subr.mxu0 0.0
      %6231 = vmatpush2.msra.mxu0 0.0
      %6232 = vmatprep.subr.mxu0 0.0
      %6233 = vmatpush2.msra.mxu0 0.0
      %6234 = vmatprep.subr.mxu0 0.0
      %6235 = vmatpush2.msra.mxu0 0.0
      %6236 = vmatprep.subr.mxu0 0.0
      %6237 = vmatpush2.msra.mxu0 0.0
      %6238 = vmatprep.mubr.f32.mxu0 0.0
      %6239 = vmatmul.mubr.f32.gmra.mxu0 %v6030
      %v6240 = vpop.f32.mrf.mxu0
      %v6241 = vadd.f32 0.0, %v6240
      %v6242 = vpop.f32.mrf.mxu0
      %v6243 = vadd.f32 0.0, %v6242
      %6244 = vdwg.mxu0
      %6245 = vmatprep.subr.mxu0 0.0
      %6246 = vmatpush1.msra.mxu0 0.0
      %6247 = vmatprep.subr.mxu0 0.0
      %6248 = vmatpush1.msra.mxu0 0.0
      %6249 = vmatprep.subr.mxu0 0.0
      %6250 = vmatpush1.msra.mxu0 0.0
      %6251 = vmatprep.subr.mxu0 0.0
      %6252 = vmatpush1.msra.mxu0 0.0
      %6253 = vmatprep.subr.mxu0 0.0
      %6254 = vmatpush1.msra.mxu0 0.0
      %6255 = vmatprep.subr.mxu0 0.0
      %6256 = vmatpush1.msra.mxu0 0.0
      %6257 = vmatprep.subr.mxu0 0.0
      %6258 = vmatpush1.msra.mxu0 0.0
      %6259 = vmatprep.subr.mxu0 0.0
      %6260 = vmatpush1.msra.mxu0 0.0
      %6261 = vmatprep.subr.mxu0 0.0
      %6262 = vmatpush1.msra.mxu0 0.0
      %6263 = vmatprep.subr.mxu0 0.0
      %6264 = vmatpush1.msra.mxu0 0.0
      %6265 = vmatprep.subr.mxu0 0.0
      %6266 = vmatpush1.msra.mxu0 0.0
      %6267 = vmatprep.subr.mxu0 0.0
      %6268 = vmatpush1.msra.mxu0 0.0
      %6269 = vmatprep.subr.mxu0 0.0
      %6270 = vmatpush1.msra.mxu0 0.0
      %6271 = vmatprep.subr.mxu0 0.0
      %6272 = vmatpush1.msra.mxu0 0.0
      %6273 = vmatprep.subr.mxu0 0.0
      %6274 = vmatpush1.msra.mxu0 0.0
      %6275 = vmatprep.subr.mxu0 %v6002
      %6276 = vmatpush1.msra.mxu0 %v6001
      %6277 = vmatprep.subr.mxu0 0.0
      %6278 = vmatpush2.msra.mxu0 0.0
      %6279 = vmatprep.subr.mxu0 0.0
      %6280 = vmatpush2.msra.mxu0 0.0
      %6281 = vmatprep.subr.mxu0 0.0
      %6282 = vmatpush2.msra.mxu0 0.0
      %6283 = vmatprep.subr.mxu0 0.0
      %6284 = vmatpush2.msra.mxu0 0.0
      %6285 = vmatprep.subr.mxu0 0.0
      %6286 = vmatpush2.msra.mxu0 0.0
      %6287 = vmatprep.subr.mxu0 0.0
      %6288 = vmatpush2.msra.mxu0 0.0
      %6289 = vmatprep.subr.mxu0 0.0
      %6290 = vmatpush2.msra.mxu0 0.0
      %6291 = vmatprep.subr.mxu0 0.0
      %6292 = vmatpush2.msra.mxu0 0.0
      %6293 = vmatprep.subr.mxu0 0.0
      %6294 = vmatpush2.msra.mxu0 0.0
      %6295 = vmatprep.subr.mxu0 0.0
      %6296 = vmatpush2.msra.mxu0 0.0
      %6297 = vmatprep.subr.mxu0 0.0
      %6298 = vmatpush2.msra.mxu0 0.0
      %6299 = vmatprep.subr.mxu0 0.0
      %6300 = vmatpush2.msra.mxu0 0.0
      %6301 = vmatprep.subr.mxu0 0.0
      %6302 = vmatpush2.msra.mxu0 0.0
      %6303 = vmatprep.subr.mxu0 0.0
      %6304 = vmatpush2.msra.mxu0 0.0
      %6305 = vmatprep.subr.mxu0 0.0
      %6306 = vmatpush2.msra.mxu0 0.0
      %6307 = vmatprep.subr.mxu0 0.0
      %6308 = vmatpush2.msra.mxu0 0.0
      %6309 = vmatprep.mubr.f32.mxu0 0.0
      %6310 = vmatmul.mubr.f32.gmra.mxu0 %v6030
      %v6311 = vpop.f32.mrf.mxu0
      %v6312 = vadd.f32 0.0, %v6311
      %v6313 = vpop.f32.mrf.mxu0
      %v6314 = vadd.f32 0.0, %v6313
      %6315 = vdwg.mxu0
      %6316 = vmatprep.subr.mxu0 0.0
      %6317 = vmatpush1.msra.mxu0 0.0
      %6318 = vmatprep.subr.mxu0 0.0
      %6319 = vmatpush1.msra.mxu0 0.0
      %6320 = vmatprep.subr.mxu0 0.0
      %6321 = vmatpush1.msra.mxu0 0.0
      %6322 = vmatprep.subr.mxu0 0.0
      %6323 = vmatpush1.msra.mxu0 0.0
      %6324 = vmatprep.subr.mxu0 0.0
      %6325 = vmatpush1.msra.mxu0 0.0
      %6326 = vmatprep.subr.mxu0 0.0
      %6327 = vmatpush1.msra.mxu0 0.0
      %6328 = vmatprep.subr.mxu0 0.0
      %6329 = vmatpush1.msra.mxu0 0.0
      %6330 = vmatprep.subr.mxu0 0.0
      %6331 = vmatpush1.msra.mxu0 0.0
      %6332 = vmatprep.subr.mxu0 0.0
      %6333 = vmatpush1.msra.mxu0 0.0
      %6334 = vmatprep.subr.mxu0 0.0
      %6335 = vmatpush1.msra.mxu0 0.0
      %6336 = vmatprep.subr.mxu0 0.0
      %6337 = vmatpush1.msra.mxu0 0.0
      %6338 = vmatprep.subr.mxu0 0.0
      %6339 = vmatpush1.msra.mxu0 0.0
      %6340 = vmatprep.subr.mxu0 0.0
      %6341 = vmatpush1.msra.mxu0 0.0
      %6342 = vmatprep.subr.mxu0 0.0
      %6343 = vmatpush1.msra.mxu0 0.0
      %6344 = vmatprep.subr.mxu0 0.0
      %6345 = vmatpush1.msra.mxu0 0.0
      %6346 = vmatprep.subr.mxu0 %v6004
      %6347 = vmatpush1.msra.mxu0 %v6003
      %6348 = vmatprep.subr.mxu0 0.0
      %6349 = vmatpush2.msra.mxu0 0.0
      %6350 = vmatprep.subr.mxu0 0.0
      %6351 = vmatpush2.msra.mxu0 0.0
      %6352 = vmatprep.subr.mxu0 0.0
      %6353 = vmatpush2.msra.mxu0 0.0
      %6354 = vmatprep.subr.mxu0 0.0
      %6355 = vmatpush2.msra.mxu0 0.0
      %6356 = vmatprep.subr.mxu0 0.0
      %6357 = vmatpush2.msra.mxu0 0.0
      %6358 = vmatprep.subr.mxu0 0.0
      %6359 = vmatpush2.msra.mxu0 0.0
      %6360 = vmatprep.subr.mxu0 0.0
      %6361 = vmatpush2.msra.mxu0 0.0
      %6362 = vmatprep.subr.mxu0 0.0
      %6363 = vmatpush2.msra.mxu0 0.0
      %6364 = vmatprep.subr.mxu0 0.0
      %6365 = vmatpush2.msra.mxu0 0.0
      %6366 = vmatprep.subr.mxu0 0.0
      %6367 = vmatpush2.msra.mxu0 0.0
      %6368 = vmatprep.subr.mxu0 0.0
      %6369 = vmatpush2.msra.mxu0 0.0
      %6370 = vmatprep.subr.mxu0 0.0
      %6371 = vmatpush2.msra.mxu0 0.0
      %6372 = vmatprep.subr.mxu0 0.0
      %6373 = vmatpush2.msra.mxu0 0.0
      %6374 = vmatprep.subr.mxu0 0.0
      %6375 = vmatpush2.msra.mxu0 0.0
      %6376 = vmatprep.subr.mxu0 0.0
      %6377 = vmatpush2.msra.mxu0 0.0
      %6378 = vmatprep.subr.mxu0 0.0
      %6379 = vmatpush2.msra.mxu0 0.0
      %6380 = vmatprep.mubr.f32.mxu0 0.0
      %6381 = vmatmul.mubr.f32.gmra.mxu0 %v6030
      %v6382 = vpop.f32.mrf.mxu0
      %v6383 = vadd.f32 0.0, %v6382
      %v6384 = vpop.f32.mrf.mxu0
      %v6385 = vadd.f32 0.0, %v6384
      %6386 = vdwg.mxu0
      %6387 = vmatprep.subr.mxu0 0.0
      %6388 = vmatpush1.msra.mxu0 0.0
      %6389 = vmatprep.subr.mxu0 0.0
      %6390 = vmatpush1.msra.mxu0 0.0
      %6391 = vmatprep.subr.mxu0 0.0
      %6392 = vmatpush1.msra.mxu0 0.0
      %6393 = vmatprep.subr.mxu0 0.0
      %6394 = vmatpush1.msra.mxu0 0.0
      %6395 = vmatprep.subr.mxu0 0.0
      %6396 = vmatpush1.msra.mxu0 0.0
      %6397 = vmatprep.subr.mxu0 0.0
      %6398 = vmatpush1.msra.mxu0 0.0
      %6399 = vmatprep.subr.mxu0 0.0
      %6400 = vmatpush1.msra.mxu0 0.0
      %6401 = vmatprep.subr.mxu0 0.0
      %6402 = vmatpush1.msra.mxu0 0.0
      %6403 = vmatprep.subr.mxu0 0.0
      %6404 = vmatpush1.msra.mxu0 0.0
      %6405 = vmatprep.subr.mxu0 0.0
      %6406 = vmatpush1.msra.mxu0 0.0
      %6407 = vmatprep.subr.mxu0 0.0
      %6408 = vmatpush1.msra.mxu0 0.0
      %6409 = vmatprep.subr.mxu0 0.0
      %6410 = vmatpush1.msra.mxu0 0.0
      %6411 = vmatprep.subr.mxu0 0.0
      %6412 = vmatpush1.msra.mxu0 0.0
      %6413 = vmatprep.subr.mxu0 0.0
      %6414 = vmatpush1.msra.mxu0 0.0
      %6415 = vmatprep.subr.mxu0 0.0
      %6416 = vmatpush1.msra.mxu0 0.0
      %6417 = vmatprep.subr.mxu0 %v6006
      %6418 = vmatpush1.msra.mxu0 %v6005
      %6419 = vmatprep.subr.mxu0 0.0
      %6420 = vmatpush2.msra.mxu0 0.0
      %6421 = vmatprep.subr.mxu0 0.0
      %6422 = vmatpush2.msra.mxu0 0.0
      %6423 = vmatprep.subr.mxu0 0.0
      %6424 = vmatpush2.msra.mxu0 0.0
      %6425 = vmatprep.subr.mxu0 0.0
      %6426 = vmatpush2.msra.mxu0 0.0
      %6427 = vmatprep.subr.mxu0 0.0
      %6428 = vmatpush2.msra.mxu0 0.0
      %6429 = vmatprep.subr.mxu0 0.0
      %6430 = vmatpush2.msra.mxu0 0.0
      %6431 = vmatprep.subr.mxu0 0.0
      %6432 = vmatpush2.msra.mxu0 0.0
      %6433 = vmatprep.subr.mxu0 0.0
      %6434 = vmatpush2.msra.mxu0 0.0
      %6435 = vmatprep.subr.mxu0 0.0
      %6436 = vmatpush2.msra.mxu0 0.0
      %6437 = vmatprep.subr.mxu0 0.0
      %6438 = vmatpush2.msra.mxu0 0.0
      %6439 = vmatprep.subr.mxu0 0.0
      %6440 = vmatpush2.msra.mxu0 0.0
      %6441 = vmatprep.subr.mxu0 0.0
      %6442 = vmatpush2.msra.mxu0 0.0
      %6443 = vmatprep.subr.mxu0 0.0
      %6444 = vmatpush2.msra.mxu0 0.0
      %6445 = vmatprep.subr.mxu0 0.0
      %6446 = vmatpush2.msra.mxu0 0.0
      %6447 = vmatprep.subr.mxu0 0.0
      %6448 = vmatpush2.msra.mxu0 0.0
      %6449 = vmatprep.subr.mxu0 0.0
      %6450 = vmatpush2.msra.mxu0 0.0
      %6451 = vmatprep.mubr.f32.mxu0 0.0
      %6452 = vmatmul.mubr.f32.gmra.mxu0 %v6030
      %v6453 = vpop.f32.mrf.mxu0
      %v6454 = vadd.f32 0.0, %v6453
      %v6455 = vpop.f32.mrf.mxu0
      %v6456 = vadd.f32 0.0, %v6455
      %6457 = vdwg.mxu0
      %6458 = vmatprep.subr.mxu0 0.0
      %6459 = vmatpush1.msra.mxu0 0.0
      %6460 = vmatprep.subr.mxu0 0.0
      %6461 = vmatpush1.msra.mxu0 0.0
      %6462 = vmatprep.subr.mxu0 0.0
      %6463 = vmatpush1.msra.mxu0 0.0
      %6464 = vmatprep.subr.mxu0 0.0
      %6465 = vmatpush1.msra.mxu0 0.0
      %6466 = vmatprep.subr.mxu0 0.0
      %6467 = vmatpush1.msra.mxu0 0.0
      %6468 = vmatprep.subr.mxu0 0.0
      %6469 = vmatpush1.msra.mxu0 0.0
      %6470 = vmatprep.subr.mxu0 0.0
      %6471 = vmatpush1.msra.mxu0 0.0
      %6472 = vmatprep.subr.mxu0 0.0
      %6473 = vmatpush1.msra.mxu0 0.0
      %6474 = vmatprep.subr.mxu0 0.0
      %6475 = vmatpush1.msra.mxu0 0.0
      %6476 = vmatprep.subr.mxu0 0.0
      %6477 = vmatpush1.msra.mxu0 0.0
      %6478 = vmatprep.subr.mxu0 0.0
      %6479 = vmatpush1.msra.mxu0 0.0
      %6480 = vmatprep.subr.mxu0 0.0
      %6481 = vmatpush1.msra.mxu0 0.0
      %6482 = vmatprep.subr.mxu0 0.0
      %6483 = vmatpush1.msra.mxu0 0.0
      %6484 = vmatprep.subr.mxu0 0.0
      %6485 = vmatpush1.msra.mxu0 0.0
      %6486 = vmatprep.subr.mxu0 0.0
      %6487 = vmatpush1.msra.mxu0 0.0
      %6488 = vmatprep.subr.mxu0 %v6008
      %6489 = vmatpush1.msra.mxu0 %v6007
      %6490 = vmatprep.subr.mxu0 0.0
      %6491 = vmatpush2.msra.mxu0 0.0
      %6492 = vmatprep.subr.mxu0 0.0
      %6493 = vmatpush2.msra.mxu0 0.0
      %6494 = vmatprep.subr.mxu0 0.0
      %6495 = vmatpush2.msra.mxu0 0.0
      %6496 = vmatprep.subr.mxu0 0.0
      %6497 = vmatpush2.msra.mxu0 0.0
      %6498 = vmatprep.subr.mxu0 0.0
      %6499 = vmatpush2.msra.mxu0 0.0
      %6500 = vmatprep.subr.mxu0 0.0
      %6501 = vmatpush2.msra.mxu0 0.0
      %6502 = vmatprep.subr.mxu0 0.0
      %6503 = vmatpush2.msra.mxu0 0.0
      %6504 = vmatprep.subr.mxu0 0.0
      %6505 = vmatpush2.msra.mxu0 0.0
      %6506 = vmatprep.subr.mxu0 0.0
      %6507 = vmatpush2.msra.mxu0 0.0
      %6508 = vmatprep.subr.mxu0 0.0
      %6509 = vmatpush2.msra.mxu0 0.0
      %6510 = vmatprep.subr.mxu0 0.0
      %6511 = vmatpush2.msra.mxu0 0.0
      %6512 = vmatprep.subr.mxu0 0.0
      %6513 = vmatpush2.msra.mxu0 0.0
      %6514 = vmatprep.subr.mxu0 0.0
      %6515 = vmatpush2.msra.mxu0 0.0
      %6516 = vmatprep.subr.mxu0 0.0
      %6517 = vmatpush2.msra.mxu0 0.0
      %6518 = vmatprep.subr.mxu0 0.0
      %6519 = vmatpush2.msra.mxu0 0.0
      %6520 = vmatprep.subr.mxu0 0.0
      %6521 = vmatpush2.msra.mxu0 0.0
      %6522 = vmatprep.mubr.f32.mxu0 0.0
      %6523 = vmatmul.mubr.f32.gmra.mxu0 %v6030
      %v6524 = vpop.f32.mrf.mxu0
      %v6525 = vadd.f32 0.0, %v6524
      %v6526 = vpop.f32.mrf.mxu0
      %v6527 = vadd.f32 0.0, %v6526
      %6528 = vdwg.mxu0
      %6529 = vmatprep.subr.mxu0 0.0
      %6530 = vmatpush1.msra.mxu0 0.0
      %6531 = vmatprep.subr.mxu0 0.0
      %6532 = vmatpush1.msra.mxu0 0.0
      %6533 = vmatprep.subr.mxu0 0.0
      %6534 = vmatpush1.msra.mxu0 0.0
      %6535 = vmatprep.subr.mxu0 0.0
      %6536 = vmatpush1.msra.mxu0 0.0
      %6537 = vmatprep.subr.mxu0 0.0
      %6538 = vmatpush1.msra.mxu0 0.0
      %6539 = vmatprep.subr.mxu0 0.0
      %6540 = vmatpush1.msra.mxu0 0.0
      %6541 = vmatprep.subr.mxu0 0.0
      %6542 = vmatpush1.msra.mxu0 0.0
      %6543 = vmatprep.subr.mxu0 0.0
      %6544 = vmatpush1.msra.mxu0 0.0
      %6545 = vmatprep.subr.mxu0 0.0
      %6546 = vmatpush1.msra.mxu0 0.0
      %6547 = vmatprep.subr.mxu0 0.0
      %6548 = vmatpush1.msra.mxu0 0.0
      %6549 = vmatprep.subr.mxu0 0.0
      %6550 = vmatpush1.msra.mxu0 0.0
      %6551 = vmatprep.subr.mxu0 0.0
      %6552 = vmatpush1.msra.mxu0 0.0
      %6553 = vmatprep.subr.mxu0 0.0
      %6554 = vmatpush1.msra.mxu0 0.0
      %6555 = vmatprep.subr.mxu0 0.0
      %6556 = vmatpush1.msra.mxu0 0.0
      %6557 = vmatprep.subr.mxu0 0.0
      %6558 = vmatpush1.msra.mxu0 0.0
      %6559 = vmatprep.subr.mxu0 %v6010
      %6560 = vmatpush1.msra.mxu0 %v6009
      %6561 = vmatprep.subr.mxu0 0.0
      %6562 = vmatpush2.msra.mxu0 0.0
      %6563 = vmatprep.subr.mxu0 0.0
      %6564 = vmatpush2.msra.mxu0 0.0
      %6565 = vmatprep.subr.mxu0 0.0
      %6566 = vmatpush2.msra.mxu0 0.0
      %6567 = vmatprep.subr.mxu0 0.0
      %6568 = vmatpush2.msra.mxu0 0.0
      %6569 = vmatprep.subr.mxu0 0.0
      %6570 = vmatpush2.msra.mxu0 0.0
      %6571 = vmatprep.subr.mxu0 0.0
      %6572 = vmatpush2.msra.mxu0 0.0
      %6573 = vmatprep.subr.mxu0 0.0
      %6574 = vmatpush2.msra.mxu0 0.0
      %6575 = vmatprep.subr.mxu0 0.0
      %6576 = vmatpush2.msra.mxu0 0.0
      %6577 = vmatprep.subr.mxu0 0.0
      %6578 = vmatpush2.msra.mxu0 0.0
      %6579 = vmatprep.subr.mxu0 0.0
      %6580 = vmatpush2.msra.mxu0 0.0
      %6581 = vmatprep.subr.mxu0 0.0
      %6582 = vmatpush2.msra.mxu0 0.0
      %6583 = vmatprep.subr.mxu0 0.0
      %6584 = vmatpush2.msra.mxu0 0.0
      %6585 = vmatprep.subr.mxu0 0.0
      %6586 = vmatpush2.msra.mxu0 0.0
      %6587 = vmatprep.subr.mxu0 0.0
      %6588 = vmatpush2.msra.mxu0 0.0
      %6589 = vmatprep.subr.mxu0 0.0
      %6590 = vmatpush2.msra.mxu0 0.0
      %6591 = vmatprep.subr.mxu0 0.0
      %6592 = vmatpush2.msra.mxu0 0.0
      %6593 = vmatprep.mubr.f32.mxu0 0.0
      %6594 = vmatmul.mubr.f32.gmra.mxu0 %v6030
      %v6595 = vpop.f32.mrf.mxu0
      %v6596 = vadd.f32 0.0, %v6595
      %v6597 = vpop.f32.mrf.mxu0
      %v6598 = vadd.f32 0.0, %v6597
      %6599 = vdwg.mxu0
      %6600 = vmatprep.subr.mxu0 0.0
      %6601 = vmatpush1.xpose.msra.mxu0 0.0
      %6602 = vmatprep.subr.mxu0 0.0
      %6603 = vmatpush1.xpose.msra.mxu0 0.0
      %6604 = vmatprep.subr.mxu0 0.0
      %6605 = vmatpush1.xpose.msra.mxu0 0.0
      %6606 = vmatprep.subr.mxu0 0.0
      %6607 = vmatpush1.xpose.msra.mxu0 0.0
      %6608 = vmatprep.subr.mxu0 0.0
      %6609 = vmatpush1.xpose.msra.mxu0 0.0
      %6610 = vmatprep.subr.mxu0 0.0
      %6611 = vmatpush1.xpose.msra.mxu0 0.0
      %6612 = vmatprep.subr.mxu0 0.0
      %6613 = vmatpush1.xpose.msra.mxu0 0.0
      %6614 = vmatprep.subr.mxu0 0.0
      %6615 = vmatpush1.xpose.msra.mxu0 0.0
      %6616 = vmatprep.subr.mxu0 0.0
      %6617 = vmatpush1.xpose.msra.mxu0 0.0
      %6618 = vmatprep.subr.mxu0 0.0
      %6619 = vmatpush1.xpose.msra.mxu0 0.0
      %6620 = vmatprep.subr.mxu0 0.0
      %6621 = vmatpush1.xpose.msra.mxu0 0.0
      %6622 = vmatprep.subr.mxu0 0.0
      %6623 = vmatpush1.xpose.msra.mxu0 0.0
      %6624 = vmatprep.subr.mxu0 0.0
      %6625 = vmatpush1.xpose.msra.mxu0 0.0
      %6626 = vmatprep.subr.mxu0 0.0
      %6627 = vmatpush1.xpose.msra.mxu0 0.0
      %6628 = vmatprep.subr.mxu0 0.0
      %6629 = vmatpush1.xpose.msra.mxu0 0.0
      %6630 = vmatprep.subr.mxu0 %v6101
      %6631 = vmatpush1.xpose.msra.mxu0 %v6099
      %6632 = vmatprep.subr.mxu0 0.0
      %6633 = vmatpush2.xpose.msra.mxu0 0.0
      %6634 = vmatprep.subr.mxu0 0.0
      %6635 = vmatpush2.xpose.msra.mxu0 0.0
      %6636 = vmatprep.subr.mxu0 0.0
      %6637 = vmatpush2.xpose.msra.mxu0 0.0
      %6638 = vmatprep.subr.mxu0 0.0
      %6639 = vmatpush2.xpose.msra.mxu0 0.0
      %6640 = vmatprep.subr.mxu0 0.0
      %6641 = vmatpush2.xpose.msra.mxu0 0.0
      %6642 = vmatprep.subr.mxu0 0.0
      %6643 = vmatpush2.xpose.msra.mxu0 0.0
      %6644 = vmatprep.subr.mxu0 0.0
      %6645 = vmatpush2.xpose.msra.mxu0 0.0
      %6646 = vmatprep.subr.mxu0 0.0
      %6647 = vmatpush2.xpose.msra.mxu0 0.0
      %6648 = vmatprep.subr.mxu0 0.0
      %6649 = vmatpush2.xpose.msra.mxu0 0.0
      %6650 = vmatprep.subr.mxu0 0.0
      %6651 = vmatpush2.xpose.msra.mxu0 0.0
      %6652 = vmatprep.subr.mxu0 0.0
      %6653 = vmatpush2.xpose.msra.mxu0 0.0
      %6654 = vmatprep.subr.mxu0 0.0
      %6655 = vmatpush2.xpose.msra.mxu0 0.0
      %6656 = vmatprep.subr.mxu0 0.0
      %6657 = vmatpush2.xpose.msra.mxu0 0.0
      %6658 = vmatprep.subr.mxu0 0.0
      %6659 = vmatpush2.xpose.msra.mxu0 0.0
      %6660 = vmatprep.subr.mxu0 0.0
      %6661 = vmatpush2.xpose.msra.mxu0 0.0
      %6662 = vmatprep.subr.mxu0 0.0
      %6663 = vmatpush2.xpose.msra.mxu0 0.0
      %6664 = vmatprep.mubr.f32.mxu0 %v6012
      %6665 = vmatmul.mubr.f32.gmra.mxu0 %v6011
      %v6666 = vpop.f32.mrf.mxu0
      %v6667 = vadd.f32 0.0, %v6666
      %v6668 = vpop.f32.mrf.mxu0
      %6669 = vdwg.mxu0
      %6670 = vmatprep.subr.mxu0 0.0
      %6671 = vmatpush1.xpose.msra.mxu0 0.0
      %6672 = vmatprep.subr.mxu0 0.0
      %6673 = vmatpush1.xpose.msra.mxu0 0.0
      %6674 = vmatprep.subr.mxu0 0.0
      %6675 = vmatpush1.xpose.msra.mxu0 0.0
      %6676 = vmatprep.subr.mxu0 0.0
      %6677 = vmatpush1.xpose.msra.mxu0 0.0
      %6678 = vmatprep.subr.mxu0 0.0
      %6679 = vmatpush1.xpose.msra.mxu0 0.0
      %6680 = vmatprep.subr.mxu0 0.0
      %6681 = vmatpush1.xpose.msra.mxu0 0.0
      %6682 = vmatprep.subr.mxu0 0.0
      %6683 = vmatpush1.xpose.msra.mxu0 0.0
      %6684 = vmatprep.subr.mxu0 0.0
      %6685 = vmatpush1.xpose.msra.mxu0 0.0
      %6686 = vmatprep.subr.mxu0 0.0
      %6687 = vmatpush1.xpose.msra.mxu0 0.0
      %6688 = vmatprep.subr.mxu0 0.0
      %6689 = vmatpush1.xpose.msra.mxu0 0.0
      %6690 = vmatprep.subr.mxu0 0.0
      %6691 = vmatpush1.xpose.msra.mxu0 0.0
      %6692 = vmatprep.subr.mxu0 0.0
      %6693 = vmatpush1.xpose.msra.mxu0 0.0
      %6694 = vmatprep.subr.mxu0 0.0
      %6695 = vmatpush1.xpose.msra.mxu0 0.0
      %6696 = vmatprep.subr.mxu0 0.0
      %6697 = vmatpush1.xpose.msra.mxu0 0.0
      %6698 = vmatprep.subr.mxu0 0.0
      %6699 = vmatpush1.xpose.msra.mxu0 0.0
      %6700 = vmatprep.subr.mxu0 %v6172
      %6701 = vmatpush1.xpose.msra.mxu0 %v6170
      %6702 = vmatprep.subr.mxu0 0.0
      %6703 = vmatpush2.xpose.msra.mxu0 0.0
      %6704 = vmatprep.subr.mxu0 0.0
      %6705 = vmatpush2.xpose.msra.mxu0 0.0
      %6706 = vmatprep.subr.mxu0 0.0
      %6707 = vmatpush2.xpose.msra.mxu0 0.0
      %6708 = vmatprep.subr.mxu0 0.0
      %6709 = vmatpush2.xpose.msra.mxu0 0.0
      %6710 = vmatprep.subr.mxu0 0.0
      %6711 = vmatpush2.xpose.msra.mxu0 0.0
      %6712 = vmatprep.subr.mxu0 0.0
      %6713 = vmatpush2.xpose.msra.mxu0 0.0
      %6714 = vmatprep.subr.mxu0 0.0
      %6715 = vmatpush2.xpose.msra.mxu0 0.0
      %6716 = vmatprep.subr.mxu0 0.0
      %6717 = vmatpush2.xpose.msra.mxu0 0.0
      %6718 = vmatprep.subr.mxu0 0.0
      %6719 = vmatpush2.xpose.msra.mxu0 0.0
      %6720 = vmatprep.subr.mxu0 0.0
      %6721 = vmatpush2.xpose.msra.mxu0 0.0
      %6722 = vmatprep.subr.mxu0 0.0
      %6723 = vmatpush2.xpose.msra.mxu0 0.0
      %6724 = vmatprep.subr.mxu0 0.0
      %6725 = vmatpush2.xpose.msra.mxu0 0.0
      %6726 = vmatprep.subr.mxu0 0.0
      %6727 = vmatpush2.xpose.msra.mxu0 0.0
      %6728 = vmatprep.subr.mxu0 0.0
      %6729 = vmatpush2.xpose.msra.mxu0 0.0
      %6730 = vmatprep.subr.mxu0 0.0
      %6731 = vmatpush2.xpose.msra.mxu0 0.0
      %6732 = vmatprep.subr.mxu0 0.0
      %6733 = vmatpush2.xpose.msra.mxu0 0.0
      %6734 = vmatprep.mubr.f32.mxu0 %v6014
      %6735 = vmatmul.mubr.f32.gmra.mxu0 %v6013
      %v6736 = vpop.f32.mrf.mxu0
      %v6737 = vadd.f32 %v6667, %v6736
      %v6738 = vpop.f32.mrf.mxu0
      %6739 = vdwg.mxu0
      %6740 = vmatprep.subr.mxu0 0.0
      %6741 = vmatpush1.xpose.msra.mxu0 0.0
      %6742 = vmatprep.subr.mxu0 0.0
      %6743 = vmatpush1.xpose.msra.mxu0 0.0
      %6744 = vmatprep.subr.mxu0 0.0
      %6745 = vmatpush1.xpose.msra.mxu0 0.0
      %6746 = vmatprep.subr.mxu0 0.0
      %6747 = vmatpush1.xpose.msra.mxu0 0.0
      %6748 = vmatprep.subr.mxu0 0.0
      %6749 = vmatpush1.xpose.msra.mxu0 0.0
      %6750 = vmatprep.subr.mxu0 0.0
      %6751 = vmatpush1.xpose.msra.mxu0 0.0
      %6752 = vmatprep.subr.mxu0 0.0
      %6753 = vmatpush1.xpose.msra.mxu0 0.0
      %6754 = vmatprep.subr.mxu0 0.0
      %6755 = vmatpush1.xpose.msra.mxu0 0.0
      %6756 = vmatprep.subr.mxu0 0.0
      %6757 = vmatpush1.xpose.msra.mxu0 0.0
      %6758 = vmatprep.subr.mxu0 0.0
      %6759 = vmatpush1.xpose.msra.mxu0 0.0
      %6760 = vmatprep.subr.mxu0 0.0
      %6761 = vmatpush1.xpose.msra.mxu0 0.0
      %6762 = vmatprep.subr.mxu0 0.0
      %6763 = vmatpush1.xpose.msra.mxu0 0.0
      %6764 = vmatprep.subr.mxu0 0.0
      %6765 = vmatpush1.xpose.msra.mxu0 0.0
      %6766 = vmatprep.subr.mxu0 0.0
      %6767 = vmatpush1.xpose.msra.mxu0 0.0
      %6768 = vmatprep.subr.mxu0 0.0
      %6769 = vmatpush1.xpose.msra.mxu0 0.0
      %6770 = vmatprep.subr.mxu0 %v6243
      %6771 = vmatpush1.xpose.msra.mxu0 %v6241
      %6772 = vmatprep.subr.mxu0 0.0
      %6773 = vmatpush2.xpose.msra.mxu0 0.0
      %6774 = vmatprep.subr.mxu0 0.0
      %6775 = vmatpush2.xpose.msra.mxu0 0.0
      %6776 = vmatprep.subr.mxu0 0.0
      %6777 = vmatpush2.xpose.msra.mxu0 0.0
      %6778 = vmatprep.subr.mxu0 0.0
      %6779 = vmatpush2.xpose.msra.mxu0 0.0
      %6780 = vmatprep.subr.mxu0 0.0
      %6781 = vmatpush2.xpose.msra.mxu0 0.0
      %6782 = vmatprep.subr.mxu0 0.0
      %6783 = vmatpush2.xpose.msra.mxu0 0.0
      %6784 = vmatprep.subr.mxu0 0.0
      %6785 = vmatpush2.xpose.msra.mxu0 0.0
      %6786 = vmatprep.subr.mxu0 0.0
      %6787 = vmatpush2.xpose.msra.mxu0 0.0
      %6788 = vmatprep.subr.mxu0 0.0
      %6789 = vmatpush2.xpose.msra.mxu0 0.0
      %6790 = vmatprep.subr.mxu0 0.0
      %6791 = vmatpush2.xpose.msra.mxu0 0.0
      %6792 = vmatprep.subr.mxu0 0.0
      %6793 = vmatpush2.xpose.msra.mxu0 0.0
      %6794 = vmatprep.subr.mxu0 0.0
      %6795 = vmatpush2.xpose.msra.mxu0 0.0
      %6796 = vmatprep.subr.mxu0 0.0
      %6797 = vmatpush2.xpose.msra.mxu0 0.0
      %6798 = vmatprep.subr.mxu0 0.0
      %6799 = vmatpush2.xpose.msra.mxu0 0.0
      %6800 = vmatprep.subr.mxu0 0.0
      %6801 = vmatpush2.xpose.msra.mxu0 0.0
      %6802 = vmatprep.subr.mxu0 0.0
      %6803 = vmatpush2.xpose.msra.mxu0 0.0
      %6804 = vmatprep.mubr.f32.mxu0 %v6016
      %6805 = vmatmul.mubr.f32.gmra.mxu0 %v6015
      %v6806 = vpop.f32.mrf.mxu0
      %v6807 = vadd.f32 %v6737, %v6806
      %v6808 = vpop.f32.mrf.mxu0
      %6809 = vdwg.mxu0
      %6810 = vmatprep.subr.mxu0 0.0
      %6811 = vmatpush1.xpose.msra.mxu0 0.0
      %6812 = vmatprep.subr.mxu0 0.0
      %6813 = vmatpush1.xpose.msra.mxu0 0.0
      %6814 = vmatprep.subr.mxu0 0.0
      %6815 = vmatpush1.xpose.msra.mxu0 0.0
      %6816 = vmatprep.subr.mxu0 0.0
      %6817 = vmatpush1.xpose.msra.mxu0 0.0
      %6818 = vmatprep.subr.mxu0 0.0
      %6819 = vmatpush1.xpose.msra.mxu0 0.0
      %6820 = vmatprep.subr.mxu0 0.0
      %6821 = vmatpush1.xpose.msra.mxu0 0.0
      %6822 = vmatprep.subr.mxu0 0.0
      %6823 = vmatpush1.xpose.msra.mxu0 0.0
      %6824 = vmatprep.subr.mxu0 0.0
      %6825 = vmatpush1.xpose.msra.mxu0 0.0
      %6826 = vmatprep.subr.mxu0 0.0
      %6827 = vmatpush1.xpose.msra.mxu0 0.0
      %6828 = vmatprep.subr.mxu0 0.0
      %6829 = vmatpush1.xpose.msra.mxu0 0.0
      %6830 = vmatprep.subr.mxu0 0.0
      %6831 = vmatpush1.xpose.msra.mxu0 0.0
      %6832 = vmatprep.subr.mxu0 0.0
      %6833 = vmatpush1.xpose.msra.mxu0 0.0
      %6834 = vmatprep.subr.mxu0 0.0
      %6835 = vmatpush1.xpose.msra.mxu0 0.0
      %6836 = vmatprep.subr.mxu0 0.0
      %6837 = vmatpush1.xpose.msra.mxu0 0.0
      %6838 = vmatprep.subr.mxu0 0.0
      %6839 = vmatpush1.xpose.msra.mxu0 0.0
      %6840 = vmatprep.subr.mxu0 %v6314
      %6841 = vmatpush1.xpose.msra.mxu0 %v6312
      %6842 = vmatprep.subr.mxu0 0.0
      %6843 = vmatpush2.xpose.msra.mxu0 0.0
      %6844 = vmatprep.subr.mxu0 0.0
      %6845 = vmatpush2.xpose.msra.mxu0 0.0
      %6846 = vmatprep.subr.mxu0 0.0
      %6847 = vmatpush2.xpose.msra.mxu0 0.0
      %6848 = vmatprep.subr.mxu0 0.0
      %6849 = vmatpush2.xpose.msra.mxu0 0.0
      %6850 = vmatprep.subr.mxu0 0.0
      %6851 = vmatpush2.xpose.msra.mxu0 0.0
      %6852 = vmatprep.subr.mxu0 0.0
      %6853 = vmatpush2.xpose.msra.mxu0 0.0
      %6854 = vmatprep.subr.mxu0 0.0
      %6855 = vmatpush2.xpose.msra.mxu0 0.0
      %6856 = vmatprep.subr.mxu0 0.0
      %6857 = vmatpush2.xpose.msra.mxu0 0.0
      %6858 = vmatprep.subr.mxu0 0.0
      %6859 = vmatpush2.xpose.msra.mxu0 0.0
      %6860 = vmatprep.subr.mxu0 0.0
      %6861 = vmatpush2.xpose.msra.mxu0 0.0
      %6862 = vmatprep.subr.mxu0 0.0
      %6863 = vmatpush2.xpose.msra.mxu0 0.0
      %6864 = vmatprep.subr.mxu0 0.0
      %6865 = vmatpush2.xpose.msra.mxu0 0.0
      %6866 = vmatprep.subr.mxu0 0.0
      %6867 = vmatpush2.xpose.msra.mxu0 0.0
      %6868 = vmatprep.subr.mxu0 0.0
      %6869 = vmatpush2.xpose.msra.mxu0 0.0
      %6870 = vmatprep.subr.mxu0 0.0
      %6871 = vmatpush2.xpose.msra.mxu0 0.0
      %6872 = vmatprep.subr.mxu0 0.0
      %6873 = vmatpush2.xpose.msra.mxu0 0.0
      %6874 = vmatprep.mubr.f32.mxu0 %v6018
      %6875 = vmatmul.mubr.f32.gmra.mxu0 %v6017
      %v6876 = vpop.f32.mrf.mxu0
      %v6877 = vadd.f32 %v6807, %v6876
      %v6878 = vpop.f32.mrf.mxu0
      %6879 = vdwg.mxu0
      %6880 = vmatprep.subr.mxu0 0.0
      %6881 = vmatpush1.xpose.msra.mxu0 0.0
      %6882 = vmatprep.subr.mxu0 0.0
      %6883 = vmatpush1.xpose.msra.mxu0 0.0
      %6884 = vmatprep.subr.mxu0 0.0
      %6885 = vmatpush1.xpose.msra.mxu0 0.0
      %6886 = vmatprep.subr.mxu0 0.0
      %6887 = vmatpush1.xpose.msra.mxu0 0.0
      %6888 = vmatprep.subr.mxu0 0.0
      %6889 = vmatpush1.xpose.msra.mxu0 0.0
      %6890 = vmatprep.subr.mxu0 0.0
      %6891 = vmatpush1.xpose.msra.mxu0 0.0
      %6892 = vmatprep.subr.mxu0 0.0
      %6893 = vmatpush1.xpose.msra.mxu0 0.0
      %6894 = vmatprep.subr.mxu0 0.0
      %6895 = vmatpush1.xpose.msra.mxu0 0.0
      %6896 = vmatprep.subr.mxu0 0.0
      %6897 = vmatpush1.xpose.msra.mxu0 0.0
      %6898 = vmatprep.subr.mxu0 0.0
      %6899 = vmatpush1.xpose.msra.mxu0 0.0
      %6900 = vmatprep.subr.mxu0 0.0
      %6901 = vmatpush1.xpose.msra.mxu0 0.0
      %6902 = vmatprep.subr.mxu0 0.0
      %6903 = vmatpush1.xpose.msra.mxu0 0.0
      %6904 = vmatprep.subr.mxu0 0.0
      %6905 = vmatpush1.xpose.msra.mxu0 0.0
      %6906 = vmatprep.subr.mxu0 0.0
      %6907 = vmatpush1.xpose.msra.mxu0 0.0
      %6908 = vmatprep.subr.mxu0 0.0
      %6909 = vmatpush1.xpose.msra.mxu0 0.0
      %6910 = vmatprep.subr.mxu0 %v6385
      %6911 = vmatpush1.xpose.msra.mxu0 %v6383
      %6912 = vmatprep.subr.mxu0 0.0
      %6913 = vmatpush2.xpose.msra.mxu0 0.0
      %6914 = vmatprep.subr.mxu0 0.0
      %6915 = vmatpush2.xpose.msra.mxu0 0.0
      %6916 = vmatprep.subr.mxu0 0.0
      %6917 = vmatpush2.xpose.msra.mxu0 0.0
      %6918 = vmatprep.subr.mxu0 0.0
      %6919 = vmatpush2.xpose.msra.mxu0 0.0
      %6920 = vmatprep.subr.mxu0 0.0
      %6921 = vmatpush2.xpose.msra.mxu0 0.0
      %6922 = vmatprep.subr.mxu0 0.0
      %6923 = vmatpush2.xpose.msra.mxu0 0.0
      %6924 = vmatprep.subr.mxu0 0.0
      %6925 = vmatpush2.xpose.msra.mxu0 0.0
      %6926 = vmatprep.subr.mxu0 0.0
      %6927 = vmatpush2.xpose.msra.mxu0 0.0
      %6928 = vmatprep.subr.mxu0 0.0
      %6929 = vmatpush2.xpose.msra.mxu0 0.0
      %6930 = vmatprep.subr.mxu0 0.0
      %6931 = vmatpush2.xpose.msra.mxu0 0.0
      %6932 = vmatprep.subr.mxu0 0.0
      %6933 = vmatpush2.xpose.msra.mxu0 0.0
      %6934 = vmatprep.subr.mxu0 0.0
      %6935 = vmatpush2.xpose.msra.mxu0 0.0
      %6936 = vmatprep.subr.mxu0 0.0
      %6937 = vmatpush2.xpose.msra.mxu0 0.0
      %6938 = vmatprep.subr.mxu0 0.0
      %6939 = vmatpush2.xpose.msra.mxu0 0.0
      %6940 = vmatprep.subr.mxu0 0.0
      %6941 = vmatpush2.xpose.msra.mxu0 0.0
      %6942 = vmatprep.subr.mxu0 0.0
      %6943 = vmatpush2.xpose.msra.mxu0 0.0
      %6944 = vmatprep.mubr.f32.mxu0 %v6020
      %6945 = vmatmul.mubr.f32.gmra.mxu0 %v6019
      %v6946 = vpop.f32.mrf.mxu0
      %v6947 = vadd.f32 %v6877, %v6946
      %v6948 = vpop.f32.mrf.mxu0
      %6949 = vdwg.mxu0
      %6950 = vmatprep.subr.mxu0 0.0
      %6951 = vmatpush1.xpose.msra.mxu0 0.0
      %6952 = vmatprep.subr.mxu0 0.0
      %6953 = vmatpush1.xpose.msra.mxu0 0.0
      %6954 = vmatprep.subr.mxu0 0.0
      %6955 = vmatpush1.xpose.msra.mxu0 0.0
      %6956 = vmatprep.subr.mxu0 0.0
      %6957 = vmatpush1.xpose.msra.mxu0 0.0
      %6958 = vmatprep.subr.mxu0 0.0
      %6959 = vmatpush1.xpose.msra.mxu0 0.0
      %6960 = vmatprep.subr.mxu0 0.0
      %6961 = vmatpush1.xpose.msra.mxu0 0.0
      %6962 = vmatprep.subr.mxu0 0.0
      %6963 = vmatpush1.xpose.msra.mxu0 0.0
      %6964 = vmatprep.subr.mxu0 0.0
      %6965 = vmatpush1.xpose.msra.mxu0 0.0
      %6966 = vmatprep.subr.mxu0 0.0
      %6967 = vmatpush1.xpose.msra.mxu0 0.0
      %6968 = vmatprep.subr.mxu0 0.0
      %6969 = vmatpush1.xpose.msra.mxu0 0.0
      %6970 = vmatprep.subr.mxu0 0.0
      %6971 = vmatpush1.xpose.msra.mxu0 0.0
      %6972 = vmatprep.subr.mxu0 0.0
      %6973 = vmatpush1.xpose.msra.mxu0 0.0
      %6974 = vmatprep.subr.mxu0 0.0
      %6975 = vmatpush1.xpose.msra.mxu0 0.0
      %6976 = vmatprep.subr.mxu0 0.0
      %6977 = vmatpush1.xpose.msra.mxu0 0.0
      %6978 = vmatprep.subr.mxu0 0.0
      %6979 = vmatpush1.xpose.msra.mxu0 0.0
      %6980 = vmatprep.subr.mxu0 %v6456
      %6981 = vmatpush1.xpose.msra.mxu0 %v6454
      %6982 = vmatprep.subr.mxu0 0.0
      %6983 = vmatpush2.xpose.msra.mxu0 0.0
      %6984 = vmatprep.subr.mxu0 0.0
      %6985 = vmatpush2.xpose.msra.mxu0 0.0
      %6986 = vmatprep.subr.mxu0 0.0
      %6987 = vmatpush2.xpose.msra.mxu0 0.0
      %6988 = vmatprep.subr.mxu0 0.0
      %6989 = vmatpush2.xpose.msra.mxu0 0.0
      %6990 = vmatprep.subr.mxu0 0.0
      %6991 = vmatpush2.xpose.msra.mxu0 0.0
      %6992 = vmatprep.subr.mxu0 0.0
      %6993 = vmatpush2.xpose.msra.mxu0 0.0
      %6994 = vmatprep.subr.mxu0 0.0
      %6995 = vmatpush2.xpose.msra.mxu0 0.0
      %6996 = vmatprep.subr.mxu0 0.0
      %6997 = vmatpush2.xpose.msra.mxu0 0.0
      %6998 = vmatprep.subr.mxu0 0.0
      %6999 = vmatpush2.xpose.msra.mxu0 0.0
      %7000 = vmatprep.subr.mxu0 0.0
      %7001 = vmatpush2.xpose.msra.mxu0 0.0
      %7002 = vmatprep.subr.mxu0 0.0
      %7003 = vmatpush2.xpose.msra.mxu0 0.0
      %7004 = vmatprep.subr.mxu0 0.0
      %7005 = vmatpush2.xpose.msra.mxu0 0.0
      %7006 = vmatprep.subr.mxu0 0.0
      %7007 = vmatpush2.xpose.msra.mxu0 0.0
      %7008 = vmatprep.subr.mxu0 0.0
      %7009 = vmatpush2.xpose.msra.mxu0 0.0
      %7010 = vmatprep.subr.mxu0 0.0
      %7011 = vmatpush2.xpose.msra.mxu0 0.0
      %7012 = vmatprep.subr.mxu0 0.0
      %7013 = vmatpush2.xpose.msra.mxu0 0.0
      %7014 = vmatprep.mubr.f32.mxu0 %v6022
      %7015 = vmatmul.mubr.f32.gmra.mxu0 %v6021
      %v7016 = vpop.f32.mrf.mxu0
      %v7017 = vadd.f32 %v6947, %v7016
      %v7018 = vpop.f32.mrf.mxu0
      %7019 = vdwg.mxu0
      %7020 = vmatprep.subr.mxu0 0.0
      %7021 = vmatpush1.xpose.msra.mxu0 0.0
      %7022 = vmatprep.subr.mxu0 0.0
      %7023 = vmatpush1.xpose.msra.mxu0 0.0
      %7024 = vmatprep.subr.mxu0 0.0
      %7025 = vmatpush1.xpose.msra.mxu0 0.0
      %7026 = vmatprep.subr.mxu0 0.0
      %7027 = vmatpush1.xpose.msra.mxu0 0.0
      %7028 = vmatprep.subr.mxu0 0.0
      %7029 = vmatpush1.xpose.msra.mxu0 0.0
      %7030 = vmatprep.subr.mxu0 0.0
      %7031 = vmatpush1.xpose.msra.mxu0 0.0
      %7032 = vmatprep.subr.mxu0 0.0
      %7033 = vmatpush1.xpose.msra.mxu0 0.0
      %7034 = vmatprep.subr.mxu0 0.0
      %7035 = vmatpush1.xpose.msra.mxu0 0.0
      %7036 = vmatprep.subr.mxu0 0.0
      %7037 = vmatpush1.xpose.msra.mxu0 0.0
      %7038 = vmatprep.subr.mxu0 0.0
      %7039 = vmatpush1.xpose.msra.mxu0 0.0
      %7040 = vmatprep.subr.mxu0 0.0
      %7041 = vmatpush1.xpose.msra.mxu0 0.0
      %7042 = vmatprep.subr.mxu0 0.0
      %7043 = vmatpush1.xpose.msra.mxu0 0.0
      %7044 = vmatprep.subr.mxu0 0.0
      %7045 = vmatpush1.xpose.msra.mxu0 0.0
      %7046 = vmatprep.subr.mxu0 0.0
      %7047 = vmatpush1.xpose.msra.mxu0 0.0
      %7048 = vmatprep.subr.mxu0 0.0
      %7049 = vmatpush1.xpose.msra.mxu0 0.0
      %7050 = vmatprep.subr.mxu0 %v6527
      %7051 = vmatpush1.xpose.msra.mxu0 %v6525
      %7052 = vmatprep.subr.mxu0 0.0
      %7053 = vmatpush2.xpose.msra.mxu0 0.0
      %7054 = vmatprep.subr.mxu0 0.0
      %7055 = vmatpush2.xpose.msra.mxu0 0.0
      %7056 = vmatprep.subr.mxu0 0.0
      %7057 = vmatpush2.xpose.msra.mxu0 0.0
      %7058 = vmatprep.subr.mxu0 0.0
      %7059 = vmatpush2.xpose.msra.mxu0 0.0
      %7060 = vmatprep.subr.mxu0 0.0
      %7061 = vmatpush2.xpose.msra.mxu0 0.0
      %7062 = vmatprep.subr.mxu0 0.0
      %7063 = vmatpush2.xpose.msra.mxu0 0.0
      %7064 = vmatprep.subr.mxu0 0.0
      %7065 = vmatpush2.xpose.msra.mxu0 0.0
      %7066 = vmatprep.subr.mxu0 0.0
      %7067 = vmatpush2.xpose.msra.mxu0 0.0
      %7068 = vmatprep.subr.mxu0 0.0
      %7069 = vmatpush2.xpose.msra.mxu0 0.0
      %7070 = vmatprep.subr.mxu0 0.0
      %7071 = vmatpush2.xpose.msra.mxu0 0.0
      %7072 = vmatprep.subr.mxu0 0.0
      %7073 = vmatpush2.xpose.msra.mxu0 0.0
      %7074 = vmatprep.subr.mxu0 0.0
      %7075 = vmatpush2.xpose.msra.mxu0 0.0
      %7076 = vmatprep.subr.mxu0 0.0
      %7077 = vmatpush2.xpose.msra.mxu0 0.0
      %7078 = vmatprep.subr.mxu0 0.0
      %7079 = vmatpush2.xpose.msra.mxu0 0.0
      %7080 = vmatprep.subr.mxu0 0.0
      %7081 = vmatpush2.xpose.msra.mxu0 0.0
      %7082 = vmatprep.subr.mxu0 0.0
      %7083 = vmatpush2.xpose.msra.mxu0 0.0
      %7084 = vmatprep.mubr.f32.mxu0 %v6024
      %7085 = vmatmul.mubr.f32.gmra.mxu0 %v6023
      %v7086 = vpop.f32.mrf.mxu0
      %v7087 = vadd.f32 %v7017, %v7086
      %v7088 = vpop.f32.mrf.mxu0
      %7089 = vdwg.mxu0
      %7090 = vmatprep.subr.mxu0 0.0
      %7091 = vmatpush1.xpose.msra.mxu0 0.0
      %7092 = vmatprep.subr.mxu0 0.0
      %7093 = vmatpush1.xpose.msra.mxu0 0.0
      %7094 = vmatprep.subr.mxu0 0.0
      %7095 = vmatpush1.xpose.msra.mxu0 0.0
      %7096 = vmatprep.subr.mxu0 0.0
      %7097 = vmatpush1.xpose.msra.mxu0 0.0
      %7098 = vmatprep.subr.mxu0 0.0
      %7099 = vmatpush1.xpose.msra.mxu0 0.0
      %7100 = vmatprep.subr.mxu0 0.0
      %7101 = vmatpush1.xpose.msra.mxu0 0.0
      %7102 = vmatprep.subr.mxu0 0.0
      %7103 = vmatpush1.xpose.msra.mxu0 0.0
      %7104 = vmatprep.subr.mxu0 0.0
      %7105 = vmatpush1.xpose.msra.mxu0 0.0
      %7106 = vmatprep.subr.mxu0 0.0
      %7107 = vmatpush1.xpose.msra.mxu0 0.0
      %7108 = vmatprep.subr.mxu0 0.0
      %7109 = vmatpush1.xpose.msra.mxu0 0.0
      %7110 = vmatprep.subr.mxu0 0.0
      %7111 = vmatpush1.xpose.msra.mxu0 0.0
      %7112 = vmatprep.subr.mxu0 0.0
      %7113 = vmatpush1.xpose.msra.mxu0 0.0
      %7114 = vmatprep.subr.mxu0 0.0
      %7115 = vmatpush1.xpose.msra.mxu0 0.0
      %7116 = vmatprep.subr.mxu0 0.0
      %7117 = vmatpush1.xpose.msra.mxu0 0.0
      %7118 = vmatprep.subr.mxu0 0.0
      %7119 = vmatpush1.xpose.msra.mxu0 0.0
      %7120 = vmatprep.subr.mxu0 %v6598
      %7121 = vmatpush1.xpose.msra.mxu0 %v6596
      %7122 = vmatprep.subr.mxu0 0.0
      %7123 = vmatpush2.xpose.msra.mxu0 0.0
      %7124 = vmatprep.subr.mxu0 0.0
      %7125 = vmatpush2.xpose.msra.mxu0 0.0
      %7126 = vmatprep.subr.mxu0 0.0
      %7127 = vmatpush2.xpose.msra.mxu0 0.0
      %7128 = vmatprep.subr.mxu0 0.0
      %7129 = vmatpush2.xpose.msra.mxu0 0.0
      %7130 = vmatprep.subr.mxu0 0.0
      %7131 = vmatpush2.xpose.msra.mxu0 0.0
      %7132 = vmatprep.subr.mxu0 0.0
      %7133 = vmatpush2.xpose.msra.mxu0 0.0
      %7134 = vmatprep.subr.mxu0 0.0
      %7135 = vmatpush2.xpose.msra.mxu0 0.0
      %7136 = vmatprep.subr.mxu0 0.0
      %7137 = vmatpush2.xpose.msra.mxu0 0.0
      %7138 = vmatprep.subr.mxu0 0.0
      %7139 = vmatpush2.xpose.msra.mxu0 0.0
      %7140 = vmatprep.subr.mxu0 0.0
      %7141 = vmatpush2.xpose.msra.mxu0 0.0
      %7142 = vmatprep.subr.mxu0 0.0
      %7143 = vmatpush2.xpose.msra.mxu0 0.0
      %7144 = vmatprep.subr.mxu0 0.0
      %7145 = vmatpush2.xpose.msra.mxu0 0.0
      %7146 = vmatprep.subr.mxu0 0.0
      %7147 = vmatpush2.xpose.msra.mxu0 0.0
      %7148 = vmatprep.subr.mxu0 0.0
      %7149 = vmatpush2.xpose.msra.mxu0 0.0
      %7150 = vmatprep.subr.mxu0 0.0
      %7151 = vmatpush2.xpose.msra.mxu0 0.0
      %7152 = vmatprep.subr.mxu0 0.0
      %7153 = vmatpush2.xpose.msra.mxu0 0.0
      %7154 = vmatprep.mubr.f32.mxu0 %v6026
      %7155 = vmatmul.mubr.f32.gmra.mxu0 %v6025
      %v7156 = vpop.f32.mrf.mxu0
      %v7157 = vadd.f32 %v7087, %v7156
      %v7158 = vpop.f32.mrf.mxu0
      %7159 = vdwg.mxu0
      %v7160 = vmul.f32 %v6011, %v6011
      %v7161 = vmul.f32 %v6012, %v6012
      %v7162 = vmul.f32 %v6013, %v6013
      %v7163 = vmul.f32 %v6014, %v6014
      %v7164 = vmul.f32 %v6015, %v6015
      %v7165 = vmul.f32 %v6016, %v6016
      %v7166 = vmul.f32 %v6017, %v6017
      %v7167 = vmul.f32 %v6018, %v6018
      %v7168 = vmul.f32 %v6019, %v6019
      %v7169 = vmul.f32 %v6020, %v6020
      %v7170 = vmul.f32 %v6021, %v6021
      %v7171 = vmul.f32 %v6022, %v6022
      %v7172 = vmul.f32 %v6023, %v6023
      %v7173 = vmul.f32 %v6024, %v6024
      %v7174 = vmul.f32 %v6025, %v6025
      %v7175 = vmul.f32 %v6026, %v6026
      %v7176 = vadd.f32 %v7160, %v7161
      %v7177 = vadd.f32 %v7176, %v7162
      %v7178 = vadd.f32 %v7177, %v7163
      %v7179 = vadd.f32 %v7178, %v7164
      %v7180 = vadd.f32 %v7179, %v7165
      %v7181 = vadd.f32 %v7180, %v7166
      %v7182 = vadd.f32 %v7181, %v7167
      %v7183 = vadd.f32 %v7182, %v7168
      %v7184 = vadd.f32 %v7183, %v7169
      %v7185 = vadd.f32 %v7184, %v7170
      %v7186 = vadd.f32 %v7185, %v7171
      %v7187 = vadd.f32 %v7186, %v7172
      %v7188 = vadd.f32 %v7187, %v7173
      %v7189 = vadd.f32 %v7188, %v7174
      %v7190 = vadd.f32 %v7189, %v7175
      %7191 = vadd.xlane.f32.xlu0 %v7190
      %v7192 = vpop.xlane.xlu0 %7191
      %v7193 = vmul.f32 %v6099, %v6099
      %v7194 = vmul.f32 %v6101, %v6101
      %v7195 = vmul.f32 %v6170, %v6170
      %v7196 = vmul.f32 %v6172, %v6172
      %v7197 = vmul.f32 %v6241, %v6241
      %v7198 = vmul.f32 %v6243, %v6243
      %v7199 = vmul.f32 %v6312, %v6312
      %v7200 = vmul.f32 %v6314, %v6314
      %v7201 = vmul.f32 %v6383, %v6383
      %v7202 = vmul.f32 %v6385, %v6385
      %v7203 = vmul.f32 %v6454, %v6454
      %v7204 = vmul.f32 %v6456, %v6456
      %v7205 = vmul.f32 %v6525, %v6525
      %v7206 = vmul.f32 %v6527, %v6527
      %v7207 = vmul.f32 %v6596, %v6596
      %v7208 = vmul.f32 %v6598, %v6598
      %vm7209 = vcmask 1043456
      %v7210 = vsel %vm7209, %v7193, 0.0
      %v7211 = vsel %vm7209, %v7194, 0.0
      %v7212 = vadd.f32 %v7210, %v7211
      %v7213 = vsel %vm7209, %v7195, 0.0
      %v7214 = vadd.f32 %v7212, %v7213
      %v7215 = vsel %vm7209, %v7196, 0.0
      %v7216 = vadd.f32 %v7214, %v7215
      %v7217 = vsel %vm7209, %v7197, 0.0
      %v7218 = vadd.f32 %v7216, %v7217
      %v7219 = vsel %vm7209, %v7198, 0.0
      %v7220 = vadd.f32 %v7218, %v7219
      %v7221 = vsel %vm7209, %v7199, 0.0
      %v7222 = vadd.f32 %v7220, %v7221
      %v7223 = vsel %vm7209, %v7200, 0.0
      %v7224 = vadd.f32 %v7222, %v7223
      %v7225 = vsel %vm7209, %v7201, 0.0
      %v7226 = vadd.f32 %v7224, %v7225
      %v7227 = vsel %vm7209, %v7202, 0.0
      %v7228 = vadd.f32 %v7226, %v7227
      %v7229 = vsel %vm7209, %v7203, 0.0
      %v7230 = vadd.f32 %v7228, %v7229
      %v7231 = vsel %vm7209, %v7204, 0.0
      %v7232 = vadd.f32 %v7230, %v7231
      %v7233 = vsel %vm7209, %v7205, 0.0
      %v7234 = vadd.f32 %v7232, %v7233
      %v7235 = vsel %vm7209, %v7206, 0.0
      %v7236 = vadd.f32 %v7234, %v7235
      %v7237 = vsel %vm7209, %v7207, 0.0
      %v7238 = vadd.f32 %v7236, %v7237
      %v7239 = vsel %vm7209, %v7208, 0.0
      %v7240 = vadd.f32 %v7238, %v7239
      %7241 = vadd.xlane.f32.xlu0 %v7240
      %v7242 = vpop.xlane.xlu0 %7241
      %v7243 = vmul.f32 %v7157, 2.0
      %v7244 = vsub.f32 %v7243, %v7192
      %v7246 = vlaneseq
      %v7247 = vand.u32 %v7246, 127
      %v7248 = vlaneseq
      %v7249 = vshrl.u32 %v7248, 7
      %v7250 = vsub.s32 %v7247, %v7249
      %v7251 = vrot.slane %v7242, %v7250
      %vm7252 = vcmask 1042434
      %v7253 = vsel %vm7252, %v7251, %v7251
      %vm7254 = vcmask 1043459
      %v7255 = vsel %vm7254, %v7251, %v7253
      %vm7256 = vcmask 1044484
      %v7257 = vsel %vm7256, %v7251, %v7255
      %vm7258 = vcmask 1045509
      %v7259 = vsel %vm7258, %v7251, %v7257
      %vm7260 = vcmask 1046534
      %v7261 = vsel %vm7260, %v7251, %v7259
      %vm7262 = vcmask 1047559
      %v7263 = vsel %vm7262, %v7251, %v7261
      %v7265 = vsub.f32 %v7244, %v7263
      %vm7266 = vcmask 31744
      %7267 = vst.msk [vmem:[%s4] sm:$0xff] %vm7266, %v7265
    $region41: #{tpu_custom_call.1} parent=1 // pred_fallthru
      _
    // Predicated region
    $region42: #{tpu_custom_call.1} parent=1 // pred_check
      _
    $region43: #{tpu_custom_call.1} parent=1 // pred_check_branch
      %7269 = sbr.rel (0) target = $region45
    $region44: #{tpu_custom_call.1} parent=1 // pred_region
      _
    $region45: #{tpu_custom_call.1} parent=1 // pred_fallthru
      _
    // Predicated region
    $region46: #{tpu_custom_call.1} parent=1 // pred_check
      _
    $region47: #{tpu_custom_call.1} parent=1 // pred_check_branch
      %7271 = sbr.rel (0) target = $region49
    $region48: #{tpu_custom_call.1} parent=1 // pred_region
      _
    $region49: #{tpu_custom_call.1} parent=1 // pred_fallthru
      _
    %7272 = vsyncpa [#allocation4], 1
    %7273 = vsyncpa [#allocation6], 1
    %7274 = vsyncpa [#allocation9], 1

</llo_original>
